<compile_context>
chip_gen: v7x
topology: tpu7x:2x2x1
jax: 0.10.0
libtpu: 0.0.40
codegen_flags: <defaults>
</compile_context>

<pallas_src>
import numpy as np

import jax
import jax.numpy as jnp
from jax.experimental import pallas as pl
from jax.experimental.pallas import tpu as pltpu


# ----------------------------------------------------------------------------
# In-kernel helpers
# ----------------------------------------------------------------------------
def _elu(x):
    # ELU(alpha=1); exp(min(x,0)) avoids overflow in the unselected branch.
    return jnp.where(x > 0.0, x, jnp.exp(jnp.minimum(x, 0.0)) - 1.0)


def _dual_act(y, n_learned):
    """Columns [:n_learned] (learned branch) -> ReLU, rest (target) -> ELU."""
    relu = jnp.maximum(y, 0.0)
    elu = jnp.where(y > 0.0, y, jnp.exp(jnp.minimum(y, 0.0)) - 1.0)
    col = jax.lax.broadcasted_iota(jnp.int32, y.shape, 1)
    return jnp.where(col < n_learned, relu, elu)


def _conv_taps(patches, w_ref, b_ref):
    """patches: (9*M, Cin_tot) tap-major rows; w_ref: (9*Cin_tot, Cout_tot)."""
    m = patches.shape[0] // 9
    cin = w_ref.shape[0] // 9
    cout = w_ref.shape[1]
    acc = jnp.zeros((m, cout), jnp.float32)
    for t in range(9):
        acc = acc + jnp.dot(
            patches[t * m:(t + 1) * m, :],
            w_ref[t * cin:(t + 1) * cin, :],
            preferred_element_type=jnp.float32)
    return acc + b_ref[...]


# ----------------------------------------------------------------------------
# The fused forward kernel (single invocation; everything lives in VMEM)
# ----------------------------------------------------------------------------
def _fused_forward_kernel(
    cols1_ref, s2_ref, s3_ref, s4_ref,
    w1_ref, b1_ref, w2_ref, b2_ref, w3_ref, b3_ref, w4_ref, b4_ref,
    wfc1_ref, bfc1_ref, wfct_ref, bfct_ref,
    wfc2_ref, bfc2_ref, wfc3_ref, bfc3_ref,
    pred_ref, targ_ref,
    y4_scratch,
):
    f32 = jnp.float32

    # conv1: shared preprocessed input, learned || target concatenated on Cout.
    y1 = jnp.dot(cols1_ref[...], w1_ref[...], preferred_element_type=f32)
    y1 = _dual_act(y1 + b1_ref[...], w1_ref.shape[1] // 2)            # (M1, 64)

    # conv2/conv3 (stride 2), conv4 (stride 1): in-kernel im2col via a constant
    # selection matmul, then 9 block-diagonal tap matmuls + bias + ReLU/ELU.
    p2 = jnp.dot(s2_ref[...], y1, preferred_element_type=f32)          # (9*M2, 64)
    y2 = _dual_act(_conv_taps(p2, w2_ref, b2_ref), w2_ref.shape[1] // 2)

    p3 = jnp.dot(s3_ref[...], y2, preferred_element_type=f32)          # (9*M3, 128)
    y3 = _dual_act(_conv_taps(p3, w3_ref, b3_ref), w3_ref.shape[1] // 2)

    p4 = jnp.dot(s4_ref[...], y3, preferred_element_type=f32)          # (9*M4, 128)
    y4 = _dual_act(_conv_taps(p4, w4_ref, b4_ref), w4_ref.shape[1] // 2)  # (M4, 256)
    y4_scratch[...] = y4

    # Flatten + fc heads.  y4 rows are (spatial-position-major, batch-minor),
    # channels-last; the NCHW flatten order is folded into wfc1/wfct weights,
    # so the flatten becomes a sum of per-position matmuls (no reshapes).
    n = pred_ref.shape[0]
    feat = pred_ref.shape[1]
    c_half = w4_ref.shape[1] // 2                 # learned conv4 channels (=128)
    n_pos = wfc1_ref.shape[0] // c_half           # (H//8)*(W//8) spatial positions

    h_l = jnp.zeros((n, feat), f32)
    h_t = jnp.zeros((n, feat), f32)
    for p in range(n_pos):
        r0 = p * n
        h_l = h_l + jnp.dot(y4_scratch[r0:r0 + n, 0:c_half],
                            wfc1_ref[p * c_half:(p + 1) * c_half, :],
                            preferred_element_type=f32)
        h_t = h_t + jnp.dot(y4_scratch[r0:r0 + n, c_half:2 * c_half],
                            wfct_ref[p * c_half:(p + 1) * c_half, :],
                            preferred_element_type=f32)

    # learned head: Linear -> ELU -> Linear -> ELU -> Linear
    h_l = _elu(h_l + bfc1_ref[...])
    h2 = _elu(jnp.dot(h_l, wfc2_ref[...], preferred_element_type=f32) + bfc2_ref[...])
    pred_ref[...] = (jnp.dot(h2, wfc3_ref[...], preferred_element_type=f32)
                     + bfc3_ref[...])
    # target head: single Linear (no activation)
    targ_ref[...] = h_t + bfct_ref[...]


# ----------------------------------------------------------------------------
# Host-side parameter preparation (done once, outside the hot path)
# ----------------------------------------------------------------------------
def _selection_matrix(n, h, w, stride):
    """0/1 matrix turning a channels-last feature map (rows (pos, n)) into
    tap-major im2col rows (tap, pos_out, n) for a k=3, pad=1 conv."""
    oh = (h + 2 - 3) // stride + 1
    ow = (w + 2 - 3) // stride + 1
    m_in, m_out = h * w * n, oh * ow * n
    s = np.zeros((9 * m_out, m_in), np.float32)
    for di in range(3):
        for dj in range(3):
            t = di * 3 + dj
            for a in range(oh):
                ih = stride * a - 1 + di
                if ih < 0 or ih >= h:
                    continue
                for c in range(ow):
                    iw = stride * c - 1 + dj
                    if iw < 0 or iw >= w:
                        continue
                    for b in range(n):
                        s[t * m_out + (a * ow + c) * n + b,
                          (ih * w + iw) * n + b] = 1.0
    return jnp.asarray(s)


def _conv1_weights(wl, wt, bl, bt):
    rows = []
    for di in range(3):
        for dj in range(3):
            rows.append(jnp.concatenate([wl[:, 0, di, dj], wt[:, 0, di, dj]])[None, :])
    return jnp.concatenate(rows, axis=0), jnp.concatenate([bl, bt])[None, :]


def _conv_blockdiag_weights(wl, wt, bl, bt):
    cl_out, cl_in = wl.shape[0], wl.shape[1]
    ct_out, ct_in = wt.shape[0], wt.shape[1]
    blocks = []
    for di in range(3):
        for dj in range(3):
            a = jnp.transpose(wl[:, :, di, dj])          # (cl_in, cl_out)
            b = jnp.transpose(wt[:, :, di, dj])          # (ct_in, ct_out)
            top = jnp.concatenate([a, jnp.zeros((cl_in, ct_out), jnp.float32)], axis=1)
            bot = jnp.concatenate([jnp.zeros((ct_in, cl_out), jnp.float32), b], axis=1)
            blocks.append(jnp.concatenate([top, bot], axis=0))
    return jnp.concatenate(blocks, axis=0), jnp.concatenate([bl, bt])[None, :]


def _fc_head_weight(w, channels, n_pos):
    # w: (F, channels*n_pos) PyTorch Linear over an NCHW flatten (c-major).
    # Re-order rows to (spatial-position-major, channel-minor) for the
    # channels-last layout used inside the kernel.
    feat = w.shape[0]
    wt = jnp.transpose(w)                       # rows: c*n_pos + p
    wt = wt.reshape(channels, n_pos, feat)
    wt = jnp.transpose(wt, (1, 0, 2))           # (n_pos, channels, F)
    return wt.reshape(n_pos * channels, feat)   # rows: p*channels + c


def make_params(key, input_hw, feature_dim):
    h, w = input_hw
    fc_in = 128 * (w // 8) * (h // 8)
    ks = jax.random.split(key, 14)

    def init(k, shape, scale=0.1):
        # TODO(synk): PyTorch uses init_orthogonal(gain=sqrt(2)); synthetic normal here.
        return scale * jax.random.normal(k, shape, dtype=jnp.float32)

    zeros = lambda m: jnp.zeros((m,), jnp.float32)
    return {
        # learned_model
        "l_c1_w": init(ks[0], (32, 1, 3, 3)),    "l_c1_b": zeros(32),
        "l_c2_w": init(ks[1], (64, 32, 3, 3)),   "l_c2_b": zeros(64),
        "l_c3_w": init(ks[2], (64, 64, 3, 3)),   "l_c3_b": zeros(64),
        "l_c4_w": init(ks[3], (128, 64, 3, 3)),  "l_c4_b": zeros(128),
        "l_fc1_w": init(ks[4], (feature_dim, fc_in)),       "l_fc1_b": zeros(feature_dim),
        "l_fc2_w": init(ks[5], (feature_dim, feature_dim)), "l_fc2_b": zeros(feature_dim),
        "l_fc3_w": init(ks[6], (feature_dim, feature_dim)), "l_fc3_b": zeros(feature_dim),
        # target_model
        # TODO(synk): BarlowTwinsEncoderAtari source not provided; reconstructed as
        # the matching 4-conv (1->32->64->64->128, strides 2/2/2/1) ELU encoder
        # followed by Linear(fc_in, feature_dim).
        "t_c1_w": init(ks[7], (32, 1, 3, 3)),    "t_c1_b": zeros(32),
        "t_c2_w": init(ks[8], (64, 32, 3, 3)),   "t_c2_b": zeros(64),
        "t_c3_w": init(ks[9], (64, 64, 3, 3)),   "t_c3_b": zeros(64),
        "t_c4_w": init(ks[10], (128, 64, 3, 3)), "t_c4_b": zeros(128),
        "t_fc_w": init(ks[11], (feature_dim, fc_in)),       "t_fc_b": zeros(feature_dim),
    }


def prepare_params(params, batch, input_hw):
    h, w = input_hw
    n_pos = (h // 8) * (w // 8)
    prepped = {
        "s2": _selection_matrix(batch, h // 2, w // 2, 2),
        "s3": _selection_matrix(batch, h // 4, w // 4, 2),
        "s4": _selection_matrix(batch, h // 8, w // 8, 1),
    }
    prepped["w1"], prepped["b1"] = _conv1_weights(
        params["l_c1_w"], params["t_c1_w"], params["l_c1_b"], params["t_c1_b"])
    prepped["w2"], prepped["b2"] = _conv_blockdiag_weights(
        params["l_c2_w"], params["t_c2_w"], params["l_c2_b"], params["t_c2_b"])
    prepped["w3"], prepped["b3"] = _conv_blockdiag_weights(
        params["l_c3_w"], params["t_c3_w"], params["l_c3_b"], params["t_c3_b"])
    prepped["w4"], prepped["b4"] = _conv_blockdiag_weights(
        params["l_c4_w"], params["t_c4_w"], params["l_c4_b"], params["t_c4_b"])
    prepped["wfc1"] = _fc_head_weight(params["l_fc1_w"], 128, n_pos)
    prepped["bfc1"] = params["l_fc1_b"][None, :]
    prepped["wfct"] = _fc_head_weight(params["t_fc_w"], 128, n_pos)
    prepped["bfct"] = params["t_fc_b"][None, :]
    prepped["wfc2"] = jnp.transpose(params["l_fc2_w"])
    prepped["bfc2"] = params["l_fc2_b"][None, :]
    prepped["wfc3"] = jnp.transpose(params["l_fc3_w"])
    prepped["bfc3"] = params["l_fc3_b"][None, :]
    return prepped


# ----------------------------------------------------------------------------
# Forward wrapper
# ----------------------------------------------------------------------------
def _im2col_conv1(x, stride=2):
    # x: (N, H, W) channel-0 plane.  Tiny XLA glue on the raw input only (the
    # result is ~N*(H/2)*(W/2)*9 floats); all intermediate activations stay in
    # VMEM inside the fused kernel.  Rows ordered (spatial-major, batch-minor).
    n, h, w = x.shape
    oh = (h + 2 - 3) // stride + 1
    ow = (w + 2 - 3) // stride + 1
    xp = jnp.pad(x, ((0, 0), (1, 1), (1, 1)))
    taps = []
    for di in range(3):
        for dj in range(3):
            taps.append(xp[:, di:di + stride * (oh - 1) + 1:stride,
                           dj:dj + stride * (ow - 1) + 1:stride])
    cols = jnp.stack(taps, axis=-1)                 # (N, OH, OW, 9)
    cols = jnp.transpose(cols, (1, 2, 0, 3))        # (OH, OW, N, 9)
    return cols.reshape(oh * ow * n, 9).astype(jnp.float32)


_PREP_KEYS = ("s2", "s3", "s4", "w1", "b1", "w2", "b2", "w3", "b3", "w4", "b4",
              "wfc1", "bfc1", "wfct", "bfct", "wfc2", "bfc2", "wfc3", "bfc3")


def barlow_twins_forward(prepped, state):
    """state: (N, 4, H, W) f32 -> (predicted_code, target_code), each (N, F)."""
    n = state.shape[0]
    feat = prepped["wfc3"].shape[1]
    c4_tot = prepped["w4"].shape[1]
    n_pos = prepped["wfc1"].shape[0] // (c4_tot // 2)

    # preprocess(): channel 0 only; then im2col for the first conv.
    cols1 = _im2col_conv1(state[:, 0, :, :].astype(jnp.float32))

    operands = [cols1] + [prepped[k] for k in _PREP_KEYS]
    out_shape = (jax.ShapeDtypeStruct((n, feat), jnp.float32),
                 jax.ShapeDtypeStruct((n, feat), jnp.float32))

    # Grid-less call: every operand is a full-array VMEM block (no double
    # buffering, one invocation).  Total VMEM footprint here is < 2 MB.
    # TODO(synk): at production Atari sizes (96x96, batch>=256) grid over the
    # row dim with dimension_semantics=("parallel",) so both v7x TensorCores
    # split the work, tile conv1/conv2 rows (~512-row blocks), raise
    # vmem_limit_bytes, and feed bf16 MXU inputs on v6e/v7x.  At this toy size
    # one invocation is latency-optimal.
    return pl.pallas_call(
        _fused_forward_kernel,
        out_shape=out_shape,
        scratch_shapes=[pltpu.VMEM((n_pos * n, c4_tot), jnp.float32)],
    )(*operands)


# ----------------------------------------------------------------------------
# Pure-JAX reference (mirrors the PyTorch module) for a correctness cross-check
# ----------------------------------------------------------------------------
_HI = jax.lax.Precision.HIGHEST


def reference_forward(params, state):
    x = state[:, 0:1, :, :].astype(jnp.float32)

    def conv(v, w, b, stride):
        y = jax.lax.conv_general_dilated(
            v, w, window_strides=(stride, stride), padding=((1, 1), (1, 1)),
            dimension_numbers=("NCHW", "OIHW", "NCHW"), precision=_HI)
        return y + b[None, :, None, None]

    relu = lambda v: jnp.maximum(v, 0.0)
    elu = lambda v: jnp.where(v > 0.0, v, jnp.exp(jnp.minimum(v, 0.0)) - 1.0)
    lin = lambda v, w, b: jnp.dot(v, w.T, precision=_HI) + b

    h = relu(conv(x, params["l_c1_w"], params["l_c1_b"], 2))
    h = relu(conv(h, params["l_c2_w"], params["l_c2_b"], 2))
    h = relu(conv(h, params["l_c3_w"], params["l_c3_b"], 2))
    h = relu(conv(h, params["l_c4_w"], params["l_c4_b"], 1))
    h = h.reshape(h.shape[0], -1)
    h = elu(lin(h, params["l_fc1_w"], params["l_fc1_b"]))
    h = elu(lin(h, params["l_fc2_w"], params["l_fc2_b"]))
    pred = lin(h, params["l_fc3_w"], params["l_fc3_b"])

    t = elu(conv(x, params["t_c1_w"], params["t_c1_b"], 2))
    t = elu(conv(t, params["t_c2_w"], params["t_c2_b"], 2))
    t = elu(conv(t, params["t_c3_w"], params["t_c3_b"], 2))
    t = elu(conv(t, params["t_c4_w"], params["t_c4_b"], 1))
    t = t.reshape(t.shape[0], -1)
    targ = lin(t, params["t_fc_w"], params["t_fc_b"])
    return pred, targ


if __name__ == "__main__":
    key = jax.random.PRNGKey(0)
    k_param, k_state = jax.random.split(key)

    batch, height, width, feature_dim = 2, 16, 16, 32
    params = make_params(k_param, (height, width), feature_dim)
    prepped = prepare_params(params, batch, (height, width))
    state = jax.random.normal(k_state, (batch, 4, height, width), dtype=jnp.float32)

    fwd = jax.jit(barlow_twins_forward)
    predicted, target = fwd(prepped, state)
    jax.block_until_ready((predicted, target))

    assert predicted.shape == (batch, feature_dim), predicted.shape
    assert target.shape == (batch, feature_dim), target.shape

    # Cross-check the fused Pallas kernel against the plain-JAX reference.
    pred_ref, targ_ref = reference_forward(params, state)
    np.testing.assert_allclose(np.asarray(predicted), np.asarray(pred_ref),
                               rtol=2e-2, atol=1e-3)
    np.testing.assert_allclose(np.asarray(target), np.asarray(targ_ref),
                               rtol=2e-2, atol=1e-3)

    print("KERNEL_OK")
</pallas_src>

<mosaic_0001>
module attributes {stable_mosaic.version = 11 : i64} {
  func.func @_fused_forward_kernel(%arg0: memref<128x9xf32, #tpu.memory_space<vmem>>, %arg1: memref<288x128xf32, #tpu.memory_space<vmem>>, %arg2: memref<72x32xf32, #tpu.memory_space<vmem>>, %arg3: memref<72x8xf32, #tpu.memory_space<vmem>>, %arg4: memref<9x64xf32, #tpu.memory_space<vmem>>, %arg5: memref<1x64xf32, #tpu.memory_space<vmem>>, %arg6: memref<576x128xf32, #tpu.memory_space<vmem>>, %arg7: memref<1x128xf32, #tpu.memory_space<vmem>>, %arg8: memref<1152x128xf32, #tpu.memory_space<vmem>>, %arg9: memref<1x128xf32, #tpu.memory_space<vmem>>, %arg10: memref<1152x256xf32, #tpu.memory_space<vmem>>, %arg11: memref<1x256xf32, #tpu.memory_space<vmem>>, %arg12: memref<512x32xf32, #tpu.memory_space<vmem>>, %arg13: memref<1x32xf32, #tpu.memory_space<vmem>>, %arg14: memref<512x32xf32, #tpu.memory_space<vmem>>, %arg15: memref<1x32xf32, #tpu.memory_space<vmem>>, %arg16: memref<32x32xf32, #tpu.memory_space<vmem>>, %arg17: memref<1x32xf32, #tpu.memory_space<vmem>>, %arg18: memref<32x32xf32, #tpu.memory_space<vmem>>, %arg19: memref<1x32xf32, #tpu.memory_space<vmem>>, %arg20: memref<2x32xf32, #tpu.memory_space<vmem>>, %arg21: memref<2x32xf32, #tpu.memory_space<vmem>>, %arg22: memref<8x256xf32, #tpu.memory_space<vmem>>) attributes {dimension_semantics = [], scalar_prefetch = 0 : i64, scratch_operands = 1 : i64, tpu.core_type = #tpu.core_type<tc>} {
    %c0 = arith.constant 0 : index
    %c0_0 = arith.constant 0 : index
    %0 = vector.load %arg0[%c0, %c0_0] : memref<128x9xf32, #tpu.memory_space<vmem>>, vector<128x9xf32>
    %c0_1 = arith.constant 0 : index
    %c0_2 = arith.constant 0 : index
    %1 = vector.load %arg4[%c0_1, %c0_2] : memref<9x64xf32, #tpu.memory_space<vmem>>, vector<9x64xf32>
    %cst = arith.constant dense<0.000000e+00> : vector<128x64xf32>
    %2 = tpu.matmul %0, %1, %cst {dimension_numbers = #tpu.dot_dimension_numbers<[1], [0], [0], [1], [0, 0, 1, 1], [], []>} : vector<128x9xf32>, vector<9x64xf32>, vector<128x64xf32> -> vector<128x64xf32>
    %c0_3 = arith.constant 0 : index
    %c0_4 = arith.constant 0 : index
    %3 = vector.load %arg5[%c0_3, %c0_4] : memref<1x64xf32, #tpu.memory_space<vmem>>, vector<1x64xf32>
    %4 = vector.broadcast %3 : vector<1x64xf32> to vector<128x64xf32>
    %5 = arith.addf %2, %4 : vector<128x64xf32>
    %cst_5 = arith.constant 0.000000e+00 : f32
    %6 = vector.broadcast %cst_5 : f32 to vector<128x64xf32>
    %7 = arith.maximumf %5, %6 : vector<128x64xf32>
    %cst_6 = arith.constant 0.000000e+00 : f32
    %8 = vector.broadcast %cst_6 : f32 to vector<128x64xf32>
    %9 = arith.cmpf ogt, %5, %8 : vector<128x64xf32>
    %cst_7 = arith.constant 0.000000e+00 : f32
    %10 = vector.broadcast %cst_7 : f32 to vector<128x64xf32>
    %11 = arith.minimumf %5, %10 : vector<128x64xf32>
    %12 = math.exp %11 : vector<128x64xf32>
    %cst_8 = arith.constant 1.000000e+00 : f32
    %13 = vector.broadcast %cst_8 : f32 to vector<128x64xf32>
    %14 = arith.subf %12, %13 : vector<128x64xf32>
    %15 = arith.select %9, %5, %14 : vector<128x64xi1>, vector<128x64xf32>
    %16 = tpu.iota {dimensions = array<i32: 1>} : vector<128x64xi32>
    %c32_i32 = arith.constant 32 : i32
    %17 = vector.broadcast %c32_i32 : i32 to vector<128x64xi32>
    %18 = arith.cmpi slt, %16, %17 : vector<128x64xi32>
    %19 = arith.select %18, %7, %15 : vector<128x64xi1>, vector<128x64xf32>
    %c0_9 = arith.constant 0 : index
    %c0_10 = arith.constant 0 : index
    %20 = vector.load %arg1[%c0_9, %c0_10] : memref<288x128xf32, #tpu.memory_space<vmem>>, vector<288x128xf32>
    %cst_11 = arith.constant dense<0.000000e+00> : vector<288x64xf32>
    %21 = tpu.matmul %20, %19, %cst_11 {dimension_numbers = #tpu.dot_dimension_numbers<[1], [0], [0], [1], [0, 0, 1, 1], [], []>} : vector<288x128xf32>, vector<128x64xf32>, vector<288x64xf32> -> vector<288x64xf32>
    %cst_12 = arith.constant 0.000000e+00 : f32
    %22 = vector.broadcast %cst_12 : f32 to vector<32x128xf32>
    %23 = vector.extract_strided_slice %21 {offsets = [0, 0], sizes = [32, 64], strides = [1, 1]} : vector<288x64xf32> to vector<32x64xf32>
    %c0_13 = arith.constant 0 : index
    %c0_14 = arith.constant 0 : index
    %24 = vector.load %arg6[%c0_13, %c0_14] : memref<576x128xf32, #tpu.memory_space<vmem>>, vector<64x128xf32>
    %cst_15 = arith.constant dense<0.000000e+00> : vector<32x128xf32>
    %25 = tpu.matmul %23, %24, %cst_15 {dimension_numbers = #tpu.dot_dimension_numbers<[1], [0], [0], [1], [0, 0, 1, 1], [], []>} : vector<32x64xf32>, vector<64x128xf32>, vector<32x128xf32> -> vector<32x128xf32>
    %26 = arith.addf %22, %25 : vector<32x128xf32>
    %27 = vector.extract_strided_slice %21 {offsets = [32, 0], sizes = [32, 64], strides = [1, 1]} : vector<288x64xf32> to vector<32x64xf32>
    %c64 = arith.constant 64 : index
    %c0_16 = arith.constant 0 : index
    %28 = vector.load %arg6[%c64, %c0_16] : memref<576x128xf32, #tpu.memory_space<vmem>>, vector<64x128xf32>
    %cst_17 = arith.constant dense<0.000000e+00> : vector<32x128xf32>
    %29 = tpu.matmul %27, %28, %cst_17 {dimension_numbers = #tpu.dot_dimension_numbers<[1], [0], [0], [1], [0, 0, 1, 1], [], []>} : vector<32x64xf32>, vector<64x128xf32>, vector<32x128xf32> -> vector<32x128xf32>
    %30 = arith.addf %26, %29 : vector<32x128xf32>
    %31 = vector.extract_strided_slice %21 {offsets = [64, 0], sizes = [32, 64], strides = [1, 1]} : vector<288x64xf32> to vector<32x64xf32>
    %c128 = arith.constant 128 : index
    %c0_18 = arith.constant 0 : index
    %32 = vector.load %arg6[%c128, %c0_18] : memref<576x128xf32, #tpu.memory_space<vmem>>, vector<64x128xf32>
    %cst_19 = arith.constant dense<0.000000e+00> : vector<32x128xf32>
    %33 = tpu.matmul %31, %32, %cst_19 {dimension_numbers = #tpu.dot_dimension_numbers<[1], [0], [0], [1], [0, 0, 1, 1], [], []>} : vector<32x64xf32>, vector<64x128xf32>, vector<32x128xf32> -> vector<32x128xf32>
    %34 = arith.addf %30, %33 : vector<32x128xf32>
    %35 = vector.extract_strided_slice %21 {offsets = [96, 0], sizes = [32, 64], strides = [1, 1]} : vector<288x64xf32> to vector<32x64xf32>
    %c192 = arith.constant 192 : index
    %c0_20 = arith.constant 0 : index
    %36 = vector.load %arg6[%c192, %c0_20] : memref<576x128xf32, #tpu.memory_space<vmem>>, vector<64x128xf32>
    %cst_21 = arith.constant dense<0.000000e+00> : vector<32x128xf32>
    %37 = tpu.matmul %35, %36, %cst_21 {dimension_numbers = #tpu.dot_dimension_numbers<[1], [0], [0], [1], [0, 0, 1, 1], [], []>} : vector<32x64xf32>, vector<64x128xf32>, vector<32x128xf32> -> vector<32x128xf32>
    %38 = arith.addf %34, %37 : vector<32x128xf32>
    %39 = vector.extract_strided_slice %21 {offsets = [128, 0], sizes = [32, 64], strides = [1, 1]} : vector<288x64xf32> to vector<32x64xf32>
    %c256 = arith.constant 256 : index
    %c0_22 = arith.constant 0 : index
    %40 = vector.load %arg6[%c256, %c0_22] : memref<576x128xf32, #tpu.memory_space<vmem>>, vector<64x128xf32>
    %cst_23 = arith.constant dense<0.000000e+00> : vector<32x128xf32>
    %41 = tpu.matmul %39, %40, %cst_23 {dimension_numbers = #tpu.dot_dimension_numbers<[1], [0], [0], [1], [0, 0, 1, 1], [], []>} : vector<32x64xf32>, vector<64x128xf32>, vector<32x128xf32> -> vector<32x128xf32>
    %42 = arith.addf %38, %41 : vector<32x128xf32>
    %43 = vector.extract_strided_slice %21 {offsets = [160, 0], sizes = [32, 64], strides = [1, 1]} : vector<288x64xf32> to vector<32x64xf32>
    %c320 = arith.constant 320 : index
    %c0_24 = arith.constant 0 : index
    %44 = vector.load %arg6[%c320, %c0_24] : memref<576x128xf32, #tpu.memory_space<vmem>>, vector<64x128xf32>
    %cst_25 = arith.constant dense<0.000000e+00> : vector<32x128xf32>
    %45 = tpu.matmul %43, %44, %cst_25 {dimension_numbers = #tpu.dot_dimension_numbers<[1], [0], [0], [1], [0, 0, 1, 1], [], []>} : vector<32x64xf32>, vector<64x128xf32>, vector<32x128xf32> -> vector<32x128xf32>
    %46 = arith.addf %42, %45 : vector<32x128xf32>
    %47 = vector.extract_strided_slice %21 {offsets = [192, 0], sizes = [32, 64], strides = [1, 1]} : vector<288x64xf32> to vector<32x64xf32>
    %c384 = arith.constant 384 : index
    %c0_26 = arith.constant 0 : index
    %48 = vector.load %arg6[%c384, %c0_26] : memref<576x128xf32, #tpu.memory_space<vmem>>, vector<64x128xf32>
    %cst_27 = arith.constant dense<0.000000e+00> : vector<32x128xf32>
    %49 = tpu.matmul %47, %48, %cst_27 {dimension_numbers = #tpu.dot_dimension_numbers<[1], [0], [0], [1], [0, 0, 1, 1], [], []>} : vector<32x64xf32>, vector<64x128xf32>, vector<32x128xf32> -> vector<32x128xf32>
    %50 = arith.addf %46, %49 : vector<32x128xf32>
    %51 = vector.extract_strided_slice %21 {offsets = [224, 0], sizes = [32, 64], strides = [1, 1]} : vector<288x64xf32> to vector<32x64xf32>
    %c448 = arith.constant 448 : index
    %c0_28 = arith.constant 0 : index
    %52 = vector.load %arg6[%c448, %c0_28] : memref<576x128xf32, #tpu.memory_space<vmem>>, vector<64x128xf32>
    %cst_29 = arith.constant dense<0.000000e+00> : vector<32x128xf32>
    %53 = tpu.matmul %51, %52, %cst_29 {dimension_numbers = #tpu.dot_dimension_numbers<[1], [0], [0], [1], [0, 0, 1, 1], [], []>} : vector<32x64xf32>, vector<64x128xf32>, vector<32x128xf32> -> vector<32x128xf32>
    %54 = arith.addf %50, %53 : vector<32x128xf32>
    %55 = vector.extract_strided_slice %21 {offsets = [256, 0], sizes = [32, 64], strides = [1, 1]} : vector<288x64xf32> to vector<32x64xf32>
    %c512 = arith.constant 512 : index
    %c0_30 = arith.constant 0 : index
    %56 = vector.load %arg6[%c512, %c0_30] : memref<576x128xf32, #tpu.memory_space<vmem>>, vector<64x128xf32>
    %cst_31 = arith.constant dense<0.000000e+00> : vector<32x128xf32>
    %57 = tpu.matmul %55, %56, %cst_31 {dimension_numbers = #tpu.dot_dimension_numbers<[1], [0], [0], [1], [0, 0, 1, 1], [], []>} : vector<32x64xf32>, vector<64x128xf32>, vector<32x128xf32> -> vector<32x128xf32>
    %58 = arith.addf %54, %57 : vector<32x128xf32>
    %c0_32 = arith.constant 0 : index
    %c0_33 = arith.constant 0 : index
    %59 = vector.load %arg7[%c0_32, %c0_33] : memref<1x128xf32, #tpu.memory_space<vmem>>, vector<1x128xf32>
    %60 = vector.broadcast %59 : vector<1x128xf32> to vector<32x128xf32>
    %61 = arith.addf %58, %60 : vector<32x128xf32>
    %cst_34 = arith.constant 0.000000e+00 : f32
    %62 = vector.broadcast %cst_34 : f32 to vector<32x128xf32>
    %63 = arith.maximumf %61, %62 : vector<32x128xf32>
    %cst_35 = arith.constant 0.000000e+00 : f32
    %64 = vector.broadcast %cst_35 : f32 to vector<32x128xf32>
    %65 = arith.cmpf ogt, %61, %64 : vector<32x128xf32>
    %cst_36 = arith.constant 0.000000e+00 : f32
    %66 = vector.broadcast %cst_36 : f32 to vector<32x128xf32>
    %67 = arith.minimumf %61, %66 : vector<32x128xf32>
    %68 = math.exp %67 : vector<32x128xf32>
    %cst_37 = arith.constant 1.000000e+00 : f32
    %69 = vector.broadcast %cst_37 : f32 to vector<32x128xf32>
    %70 = arith.subf %68, %69 : vector<32x128xf32>
    %71 = arith.select %65, %61, %70 : vector<32x128xi1>, vector<32x128xf32>
    %72 = tpu.iota {dimensions = array<i32: 1>} : vector<32x128xi32>
    %c64_i32 = arith.constant 64 : i32
    %73 = vector.broadcast %c64_i32 : i32 to vector<32x128xi32>
    %74 = arith.cmpi slt, %72, %73 : vector<32x128xi32>
    %75 = arith.select %74, %63, %71 : vector<32x128xi1>, vector<32x128xf32>
    %c0_38 = arith.constant 0 : index
    %c0_39 = arith.constant 0 : index
    %76 = vector.load %arg2[%c0_38, %c0_39] : memref<72x32xf32, #tpu.memory_space<vmem>>, vector<72x32xf32>
    %cst_40 = arith.constant dense<0.000000e+00> : vector<72x128xf32>
    %77 = tpu.matmul %76, %75, %cst_40 {dimension_numbers = #tpu.dot_dimension_numbers<[1], [0], [0], [1], [0, 0, 1, 1], [], []>} : vector<72x32xf32>, vector<32x128xf32>, vector<72x128xf32> -> vector<72x128xf32>
    %cst_41 = arith.constant 0.000000e+00 : f32
    %78 = vector.broadcast %cst_41 : f32 to vector<8x128xf32>
    %79 = vector.extract_strided_slice %77 {offsets = [0, 0], sizes = [8, 128], strides = [1, 1]} : vector<72x128xf32> to vector<8x128xf32>
    %c0_42 = arith.constant 0 : index
    %c0_43 = arith.constant 0 : index
    %80 = vector.load %arg8[%c0_42, %c0_43] : memref<1152x128xf32, #tpu.memory_space<vmem>>, vector<128x128xf32>
    %cst_44 = arith.constant dense<0.000000e+00> : vector<8x128xf32>
    %81 = tpu.matmul %79, %80, %cst_44 {dimension_numbers = #tpu.dot_dimension_numbers<[1], [0], [0], [1], [0, 0, 1, 1], [], []>} : vector<8x128xf32>, vector<128x128xf32>, vector<8x128xf32> -> vector<8x128xf32>
    %82 = arith.addf %78, %81 : vector<8x128xf32>
    %83 = vector.extract_strided_slice %77 {offsets = [8, 0], sizes = [8, 128], strides = [1, 1]} : vector<72x128xf32> to vector<8x128xf32>
    %c128_45 = arith.constant 128 : index
    %c0_46 = arith.constant 0 : index
    %84 = vector.load %arg8[%c128_45, %c0_46] : memref<1152x128xf32, #tpu.memory_space<vmem>>, vector<128x128xf32>
    %cst_47 = arith.constant dense<0.000000e+00> : vector<8x128xf32>
    %85 = tpu.matmul %83, %84, %cst_47 {dimension_numbers = #tpu.dot_dimension_numbers<[1], [0], [0], [1], [0, 0, 1, 1], [], []>} : vector<8x128xf32>, vector<128x128xf32>, vector<8x128xf32> -> vector<8x128xf32>
    %86 = arith.addf %82, %85 : vector<8x128xf32>
    %87 = vector.extract_strided_slice %77 {offsets = [16, 0], sizes = [8, 128], strides = [1, 1]} : vector<72x128xf32> to vector<8x128xf32>
    %c256_48 = arith.constant 256 : index
    %c0_49 = arith.constant 0 : index
    %88 = vector.load %arg8[%c256_48, %c0_49] : memref<1152x128xf32, #tpu.memory_space<vmem>>, vector<128x128xf32>
    %cst_50 = arith.constant dense<0.000000e+00> : vector<8x128xf32>
    %89 = tpu.matmul %87, %88, %cst_50 {dimension_numbers = #tpu.dot_dimension_numbers<[1], [0], [0], [1], [0, 0, 1, 1], [], []>} : vector<8x128xf32>, vector<128x128xf32>, vector<8x128xf32> -> vector<8x128xf32>
    %90 = arith.addf %86, %89 : vector<8x128xf32>
    %91 = vector.extract_strided_slice %77 {offsets = [24, 0], sizes = [8, 128], strides = [1, 1]} : vector<72x128xf32> to vector<8x128xf32>
    %c384_51 = arith.constant 384 : index
    %c0_52 = arith.constant 0 : index
    %92 = vector.load %arg8[%c384_51, %c0_52] : memref<1152x128xf32, #tpu.memory_space<vmem>>, vector<128x128xf32>
    %cst_53 = arith.constant dense<0.000000e+00> : vector<8x128xf32>
    %93 = tpu.matmul %91, %92, %cst_53 {dimension_numbers = #tpu.dot_dimension_numbers<[1], [0], [0], [1], [0, 0, 1, 1], [], []>} : vector<8x128xf32>, vector<128x128xf32>, vector<8x128xf32> -> vector<8x128xf32>
    %94 = arith.addf %90, %93 : vector<8x128xf32>
    %95 = vector.extract_strided_slice %77 {offsets = [32, 0], sizes = [8, 128], strides = [1, 1]} : vector<72x128xf32> to vector<8x128xf32>
    %c512_54 = arith.constant 512 : index
    %c0_55 = arith.constant 0 : index
    %96 = vector.load %arg8[%c512_54, %c0_55] : memref<1152x128xf32, #tpu.memory_space<vmem>>, vector<128x128xf32>
    %cst_56 = arith.constant dense<0.000000e+00> : vector<8x128xf32>
    %97 = tpu.matmul %95, %96, %cst_56 {dimension_numbers = #tpu.dot_dimension_numbers<[1], [0], [0], [1], [0, 0, 1, 1], [], []>} : vector<8x128xf32>, vector<128x128xf32>, vector<8x128xf32> -> vector<8x128xf32>
    %98 = arith.addf %94, %97 : vector<8x128xf32>
    %99 = vector.extract_strided_slice %77 {offsets = [40, 0], sizes = [8, 128], strides = [1, 1]} : vector<72x128xf32> to vector<8x128xf32>
    %c640 = arith.constant 640 : index
    %c0_57 = arith.constant 0 : index
    %100 = vector.load %arg8[%c640, %c0_57] : memref<1152x128xf32, #tpu.memory_space<vmem>>, vector<128x128xf32>
    %cst_58 = arith.constant dense<0.000000e+00> : vector<8x128xf32>
    %101 = tpu.matmul %99, %100, %cst_58 {dimension_numbers = #tpu.dot_dimension_numbers<[1], [0], [0], [1], [0, 0, 1, 1], [], []>} : vector<8x128xf32>, vector<128x128xf32>, vector<8x128xf32> -> vector<8x128xf32>
    %102 = arith.addf %98, %101 : vector<8x128xf32>
    %103 = vector.extract_strided_slice %77 {offsets = [48, 0], sizes = [8, 128], strides = [1, 1]} : vector<72x128xf32> to vector<8x128xf32>
    %c768 = arith.constant 768 : index
    %c0_59 = arith.constant 0 : index
    %104 = vector.load %arg8[%c768, %c0_59] : memref<1152x128xf32, #tpu.memory_space<vmem>>, vector<128x128xf32>
    %cst_60 = arith.constant dense<0.000000e+00> : vector<8x128xf32>
    %105 = tpu.matmul %103, %104, %cst_60 {dimension_numbers = #tpu.dot_dimension_numbers<[1], [0], [0], [1], [0, 0, 1, 1], [], []>} : vector<8x128xf32>, vector<128x128xf32>, vector<8x128xf32> -> vector<8x128xf32>
    %106 = arith.addf %102, %105 : vector<8x128xf32>
    %107 = vector.extract_strided_slice %77 {offsets = [56, 0], sizes = [8, 128], strides = [1, 1]} : vector<72x128xf32> to vector<8x128xf32>
    %c896 = arith.constant 896 : index
    %c0_61 = arith.constant 0 : index
    %108 = vector.load %arg8[%c896, %c0_61] : memref<1152x128xf32, #tpu.memory_space<vmem>>, vector<128x128xf32>
    %cst_62 = arith.constant dense<0.000000e+00> : vector<8x128xf32>
    %109 = tpu.matmul %107, %108, %cst_62 {dimension_numbers = #tpu.dot_dimension_numbers<[1], [0], [0], [1], [0, 0, 1, 1], [], []>} : vector<8x128xf32>, vector<128x128xf32>, vector<8x128xf32> -> vector<8x128xf32>
    %110 = arith.addf %106, %109 : vector<8x128xf32>
    %111 = vector.extract_strided_slice %77 {offsets = [64, 0], sizes = [8, 128], strides = [1, 1]} : vector<72x128xf32> to vector<8x128xf32>
    %c1024 = arith.constant 1024 : index
    %c0_63 = arith.constant 0 : index
    %112 = vector.load %arg8[%c1024, %c0_63] : memref<1152x128xf32, #tpu.memory_space<vmem>>, vector<128x128xf32>
    %cst_64 = arith.constant dense<0.000000e+00> : vector<8x128xf32>
    %113 = tpu.matmul %111, %112, %cst_64 {dimension_numbers = #tpu.dot_dimension_numbers<[1], [0], [0], [1], [0, 0, 1, 1], [], []>} : vector<8x128xf32>, vector<128x128xf32>, vector<8x128xf32> -> vector<8x128xf32>
    %114 = arith.addf %110, %113 : vector<8x128xf32>
    %c0_65 = arith.constant 0 : index
    %c0_66 = arith.constant 0 : index
    %115 = vector.load %arg9[%c0_65, %c0_66] : memref<1x128xf32, #tpu.memory_space<vmem>>, vector<1x128xf32>
    %116 = vector.broadcast %115 : vector<1x128xf32> to vector<8x128xf32>
    %117 = arith.addf %114, %116 : vector<8x128xf32>
    %cst_67 = arith.constant 0.000000e+00 : f32
    %118 = vector.broadcast %cst_67 : f32 to vector<8x128xf32>
    %119 = arith.maximumf %117, %118 : vector<8x128xf32>
    %cst_68 = arith.constant 0.000000e+00 : f32
    %120 = vector.broadcast %cst_68 : f32 to vector<8x128xf32>
    %121 = arith.cmpf ogt, %117, %120 : vector<8x128xf32>
    %cst_69 = arith.constant 0.000000e+00 : f32
    %122 = vector.broadcast %cst_69 : f32 to vector<8x128xf32>
    %123 = arith.minimumf %117, %122 : vector<8x128xf32>
    %124 = math.exp %123 : vector<8x128xf32>
    %cst_70 = arith.constant 1.000000e+00 : f32
    %125 = vector.broadcast %cst_70 : f32 to vector<8x128xf32>
    %126 = arith.subf %124, %125 : vector<8x128xf32>
    %127 = arith.select %121, %117, %126 : vector<8x128xi1>, vector<8x128xf32>
    %128 = tpu.iota {dimensions = array<i32: 1>} : vector<8x128xi32>
    %c64_i32_71 = arith.constant 64 : i32
    %129 = vector.broadcast %c64_i32_71 : i32 to vector<8x128xi32>
    %130 = arith.cmpi slt, %128, %129 : vector<8x128xi32>
    %131 = arith.select %130, %119, %127 : vector<8x128xi1>, vector<8x128xf32>
    %c0_72 = arith.constant 0 : index
    %c0_73 = arith.constant 0 : index
    %132 = vector.load %arg3[%c0_72, %c0_73] : memref<72x8xf32, #tpu.memory_space<vmem>>, vector<72x8xf32>
    %cst_74 = arith.constant dense<0.000000e+00> : vector<72x128xf32>
    %133 = tpu.matmul %132, %131, %cst_74 {dimension_numbers = #tpu.dot_dimension_numbers<[1], [0], [0], [1], [0, 0, 1, 1], [], []>} : vector<72x8xf32>, vector<8x128xf32>, vector<72x128xf32> -> vector<72x128xf32>
    %cst_75 = arith.constant 0.000000e+00 : f32
    %134 = vector.broadcast %cst_75 : f32 to vector<8x256xf32>
    %135 = vector.extract_strided_slice %133 {offsets = [0, 0], sizes = [8, 128], strides = [1, 1]} : vector<72x128xf32> to vector<8x128xf32>
    %c0_76 = arith.constant 0 : index
    %c0_77 = arith.constant 0 : index
    %136 = vector.load %arg10[%c0_76, %c0_77] : memref<1152x256xf32, #tpu.memory_space<vmem>>, vector<128x256xf32>
    %cst_78 = arith.constant dense<0.000000e+00> : vector<8x256xf32>
    %137 = tpu.matmul %135, %136, %cst_78 {dimension_numbers = #tpu.dot_dimension_numbers<[1], [0], [0], [1], [0, 0, 1, 1], [], []>} : vector<8x128xf32>, vector<128x256xf32>, vector<8x256xf32> -> vector<8x256xf32>
    %138 = arith.addf %134, %137 : vector<8x256xf32>
    %139 = vector.extract_strided_slice %133 {offsets = [8, 0], sizes = [8, 128], strides = [1, 1]} : vector<72x128xf32> to vector<8x128xf32>
    %c128_79 = arith.constant 128 : index
    %c0_80 = arith.constant 0 : index
    %140 = vector.load %arg10[%c128_79, %c0_80] : memref<1152x256xf32, #tpu.memory_space<vmem>>, vector<128x256xf32>
    %cst_81 = arith.constant dense<0.000000e+00> : vector<8x256xf32>
    %141 = tpu.matmul %139, %140, %cst_81 {dimension_numbers = #tpu.dot_dimension_numbers<[1], [0], [0], [1], [0, 0, 1, 1], [], []>} : vector<8x128xf32>, vector<128x256xf32>, vector<8x256xf32> -> vector<8x256xf32>
    %142 = arith.addf %138, %141 : vector<8x256xf32>
    %143 = vector.extract_strided_slice %133 {offsets = [16, 0], sizes = [8, 128], strides = [1, 1]} : vector<72x128xf32> to vector<8x128xf32>
    %c256_82 = arith.constant 256 : index
    %c0_83 = arith.constant 0 : index
    %144 = vector.load %arg10[%c256_82, %c0_83] : memref<1152x256xf32, #tpu.memory_space<vmem>>, vector<128x256xf32>
    %cst_84 = arith.constant dense<0.000000e+00> : vector<8x256xf32>
    %145 = tpu.matmul %143, %144, %cst_84 {dimension_numbers = #tpu.dot_dimension_numbers<[1], [0], [0], [1], [0, 0, 1, 1], [], []>} : vector<8x128xf32>, vector<128x256xf32>, vector<8x256xf32> -> vector<8x256xf32>
    %146 = arith.addf %142, %145 : vector<8x256xf32>
    %147 = vector.extract_strided_slice %133 {offsets = [24, 0], sizes = [8, 128], strides = [1, 1]} : vector<72x128xf32> to vector<8x128xf32>
    %c384_85 = arith.constant 384 : index
    %c0_86 = arith.constant 0 : index
    %148 = vector.load %arg10[%c384_85, %c0_86] : memref<1152x256xf32, #tpu.memory_space<vmem>>, vector<128x256xf32>
    %cst_87 = arith.constant dense<0.000000e+00> : vector<8x256xf32>
    %149 = tpu.matmul %147, %148, %cst_87 {dimension_numbers = #tpu.dot_dimension_numbers<[1], [0], [0], [1], [0, 0, 1, 1], [], []>} : vector<8x128xf32>, vector<128x256xf32>, vector<8x256xf32> -> vector<8x256xf32>
    %150 = arith.addf %146, %149 : vector<8x256xf32>
    %151 = vector.extract_strided_slice %133 {offsets = [32, 0], sizes = [8, 128], strides = [1, 1]} : vector<72x128xf32> to vector<8x128xf32>
    %c512_88 = arith.constant 512 : index
    %c0_89 = arith.constant 0 : index
    %152 = vector.load %arg10[%c512_88, %c0_89] : memref<1152x256xf32, #tpu.memory_space<vmem>>, vector<128x256xf32>
    %cst_90 = arith.constant dense<0.000000e+00> : vector<8x256xf32>
    %153 = tpu.matmul %151, %152, %cst_90 {dimension_numbers = #tpu.dot_dimension_numbers<[1], [0], [0], [1], [0, 0, 1, 1], [], []>} : vector<8x128xf32>, vector<128x256xf32>, vector<8x256xf32> -> vector<8x256xf32>
    %154 = arith.addf %150, %153 : vector<8x256xf32>
    %155 = vector.extract_strided_slice %133 {offsets = [40, 0], sizes = [8, 128], strides = [1, 1]} : vector<72x128xf32> to vector<8x128xf32>
    %c640_91 = arith.constant 640 : index
    %c0_92 = arith.constant 0 : index
    %156 = vector.load %arg10[%c640_91, %c0_92] : memref<1152x256xf32, #tpu.memory_space<vmem>>, vector<128x256xf32>
    %cst_93 = arith.constant dense<0.000000e+00> : vector<8x256xf32>
    %157 = tpu.matmul %155, %156, %cst_93 {dimension_numbers = #tpu.dot_dimension_numbers<[1], [0], [0], [1], [0, 0, 1, 1], [], []>} : vector<8x128xf32>, vector<128x256xf32>, vector<8x256xf32> -> vector<8x256xf32>
    %158 = arith.addf %154, %157 : vector<8x256xf32>
    %159 = vector.extract_strided_slice %133 {offsets = [48, 0], sizes = [8, 128], strides = [1, 1]} : vector<72x128xf32> to vector<8x128xf32>
    %c768_94 = arith.constant 768 : index
    %c0_95 = arith.constant 0 : index
    %160 = vector.load %arg10[%c768_94, %c0_95] : memref<1152x256xf32, #tpu.memory_space<vmem>>, vector<128x256xf32>
    %cst_96 = arith.constant dense<0.000000e+00> : vector<8x256xf32>
    %161 = tpu.matmul %159, %160, %cst_96 {dimension_numbers = #tpu.dot_dimension_numbers<[1], [0], [0], [1], [0, 0, 1, 1], [], []>} : vector<8x128xf32>, vector<128x256xf32>, vector<8x256xf32> -> vector<8x256xf32>
    %162 = arith.addf %158, %161 : vector<8x256xf32>
    %163 = vector.extract_strided_slice %133 {offsets = [56, 0], sizes = [8, 128], strides = [1, 1]} : vector<72x128xf32> to vector<8x128xf32>
    %c896_97 = arith.constant 896 : index
    %c0_98 = arith.constant 0 : index
    %164 = vector.load %arg10[%c896_97, %c0_98] : memref<1152x256xf32, #tpu.memory_space<vmem>>, vector<128x256xf32>
    %cst_99 = arith.constant dense<0.000000e+00> : vector<8x256xf32>
    %165 = tpu.matmul %163, %164, %cst_99 {dimension_numbers = #tpu.dot_dimension_numbers<[1], [0], [0], [1], [0, 0, 1, 1], [], []>} : vector<8x128xf32>, vector<128x256xf32>, vector<8x256xf32> -> vector<8x256xf32>
    %166 = arith.addf %162, %165 : vector<8x256xf32>
    %167 = vector.extract_strided_slice %133 {offsets = [64, 0], sizes = [8, 128], strides = [1, 1]} : vector<72x128xf32> to vector<8x128xf32>
    %c1024_100 = arith.constant 1024 : index
    %c0_101 = arith.constant 0 : index
    %168 = vector.load %arg10[%c1024_100, %c0_101] : memref<1152x256xf32, #tpu.memory_space<vmem>>, vector<128x256xf32>
    %cst_102 = arith.constant dense<0.000000e+00> : vector<8x256xf32>
    %169 = tpu.matmul %167, %168, %cst_102 {dimension_numbers = #tpu.dot_dimension_numbers<[1], [0], [0], [1], [0, 0, 1, 1], [], []>} : vector<8x128xf32>, vector<128x256xf32>, vector<8x256xf32> -> vector<8x256xf32>
    %170 = arith.addf %166, %169 : vector<8x256xf32>
    %c0_103 = arith.constant 0 : index
    %c0_104 = arith.constant 0 : index
    %171 = vector.load %arg11[%c0_103, %c0_104] : memref<1x256xf32, #tpu.memory_space<vmem>>, vector<1x256xf32>
    %172 = vector.broadcast %171 : vector<1x256xf32> to vector<8x256xf32>
    %173 = arith.addf %170, %172 : vector<8x256xf32>
    %cst_105 = arith.constant 0.000000e+00 : f32
    %174 = vector.broadcast %cst_105 : f32 to vector<8x256xf32>
    %175 = arith.maximumf %173, %174 : vector<8x256xf32>
    %cst_106 = arith.constant 0.000000e+00 : f32
    %176 = vector.broadcast %cst_106 : f32 to vector<8x256xf32>
    %177 = arith.cmpf ogt, %173, %176 : vector<8x256xf32>
    %cst_107 = arith.constant 0.000000e+00 : f32
    %178 = vector.broadcast %cst_107 : f32 to vector<8x256xf32>
    %179 = arith.minimumf %173, %178 : vector<8x256xf32>
    %180 = math.exp %179 : vector<8x256xf32>
    %cst_108 = arith.constant 1.000000e+00 : f32
    %181 = vector.broadcast %cst_108 : f32 to vector<8x256xf32>
    %182 = arith.subf %180, %181 : vector<8x256xf32>
    %183 = arith.select %177, %173, %182 : vector<8x256xi1>, vector<8x256xf32>
    %184 = tpu.iota {dimensions = array<i32: 1>} : vector<8x256xi32>
    %c128_i32 = arith.constant 128 : i32
    %185 = vector.broadcast %c128_i32 : i32 to vector<8x256xi32>
    %186 = arith.cmpi slt, %184, %185 : vector<8x256xi32>
    %187 = arith.select %186, %175, %183 : vector<8x256xi1>, vector<8x256xf32>
    %c0_109 = arith.constant 0 : index
    %c0_110 = arith.constant 0 : index
    %188 = vector.load %arg22[%c0_109, %c0_110] : memref<8x256xf32, #tpu.memory_space<vmem>>, vector<8x256xf32>
    tpu.vector_store %arg22[%c0_109, %c0_110], %187 {strides = array<i32>} : memref<8x256xf32, #tpu.memory_space<vmem>>, vector<8x256xf32>,
    %cst_111 = arith.constant 0.000000e+00 : f32
    %189 = vector.broadcast %cst_111 : f32 to vector<2x32xf32>
    %cst_112 = arith.constant 0.000000e+00 : f32
    %190 = vector.broadcast %cst_112 : f32 to vector<2x32xf32>
    %c0_113 = arith.constant 0 : index
    %c0_114 = arith.constant 0 : index
    %191 = vector.load %arg22[%c0_113, %c0_114] : memref<8x256xf32, #tpu.memory_space<vmem>>, vector<2x128xf32>
    %c0_115 = arith.constant 0 : index
    %c0_116 = arith.constant 0 : index
    %192 = vector.load %arg12[%c0_115, %c0_116] : memref<512x32xf32, #tpu.memory_space<vmem>>, vector<128x32xf32>
    %cst_117 = arith.constant dense<0.000000e+00> : vector<2x32xf32>
    %193 = tpu.matmul %191, %192, %cst_117 {dimension_numbers = #tpu.dot_dimension_numbers<[1], [0], [0], [1], [0, 0, 1, 1], [], []>} : vector<2x128xf32>, vector<128x32xf32>, vector<2x32xf32> -> vector<2x32xf32>
    %194 = arith.addf %189, %193 : vector<2x32xf32>
    %c0_118 = arith.constant 0 : index
    %c128_119 = arith.constant 128 : index
    %195 = vector.load %arg22[%c0_118, %c128_119] : memref<8x256xf32, #tpu.memory_space<vmem>>, vector<2x128xf32>
    %c0_120 = arith.constant 0 : index
    %c0_121 = arith.constant 0 : index
    %196 = vector.load %arg14[%c0_120, %c0_121] : memref<512x32xf32, #tpu.memory_space<vmem>>, vector<128x32xf32>
    %cst_122 = arith.constant dense<0.000000e+00> : vector<2x32xf32>
    %197 = tpu.matmul %195, %196, %cst_122 {dimension_numbers = #tpu.dot_dimension_numbers<[1], [0], [0], [1], [0, 0, 1, 1], [], []>} : vector<2x128xf32>, vector<128x32xf32>, vector<2x32xf32> -> vector<2x32xf32>
    %198 = arith.addf %190, %197 : vector<2x32xf32>
    %c2 = arith.constant 2 : index
    %c0_123 = arith.constant 0 : index
    %199 = vector.load %arg22[%c2, %c0_123] : memref<8x256xf32, #tpu.memory_space<vmem>>, vector<2x128xf32>
    %c128_124 = arith.constant 128 : index
    %c0_125 = arith.constant 0 : index
    %200 = vector.load %arg12[%c128_124, %c0_125] : memref<512x32xf32, #tpu.memory_space<vmem>>, vector<128x32xf32>
    %cst_126 = arith.constant dense<0.000000e+00> : vector<2x32xf32>
    %201 = tpu.matmul %199, %200, %cst_126 {dimension_numbers = #tpu.dot_dimension_numbers<[1], [0], [0], [1], [0, 0, 1, 1], [], []>} : vector<2x128xf32>, vector<128x32xf32>, vector<2x32xf32> -> vector<2x32xf32>
    %202 = arith.addf %194, %201 : vector<2x32xf32>
    %c2_127 = arith.constant 2 : index
    %c128_128 = arith.constant 128 : index
    %203 = vector.load %arg22[%c2_127, %c128_128] : memref<8x256xf32, #tpu.memory_space<vmem>>, vector<2x128xf32>
    %c128_129 = arith.constant 128 : index
    %c0_130 = arith.constant 0 : index
    %204 = vector.load %arg14[%c128_129, %c0_130] : memref<512x32xf32, #tpu.memory_space<vmem>>, vector<128x32xf32>
    %cst_131 = arith.constant dense<0.000000e+00> : vector<2x32xf32>
    %205 = tpu.matmul %203, %204, %cst_131 {dimension_numbers = #tpu.dot_dimension_numbers<[1], [0], [0], [1], [0, 0, 1, 1], [], []>} : vector<2x128xf32>, vector<128x32xf32>, vector<2x32xf32> -> vector<2x32xf32>
    %206 = arith.addf %198, %205 : vector<2x32xf32>
    %c4 = arith.constant 4 : index
    %c0_132 = arith.constant 0 : index
    %207 = vector.load %arg22[%c4, %c0_132] : memref<8x256xf32, #tpu.memory_space<vmem>>, vector<2x128xf32>
    %c256_133 = arith.constant 256 : index
    %c0_134 = arith.constant 0 : index
    %208 = vector.load %arg12[%c256_133, %c0_134] : memref<512x32xf32, #tpu.memory_space<vmem>>, vector<128x32xf32>
    %cst_135 = arith.constant dense<0.000000e+00> : vector<2x32xf32>
    %209 = tpu.matmul %207, %208, %cst_135 {dimension_numbers = #tpu.dot_dimension_numbers<[1], [0], [0], [1], [0, 0, 1, 1], [], []>} : vector<2x128xf32>, vector<128x32xf32>, vector<2x32xf32> -> vector<2x32xf32>
    %210 = arith.addf %202, %209 : vector<2x32xf32>
    %c4_136 = arith.constant 4 : index
    %c128_137 = arith.constant 128 : index
    %211 = vector.load %arg22[%c4_136, %c128_137] : memref<8x256xf32, #tpu.memory_space<vmem>>, vector<2x128xf32>
    %c256_138 = arith.constant 256 : index
    %c0_139 = arith.constant 0 : index
    %212 = vector.load %arg14[%c256_138, %c0_139] : memref<512x32xf32, #tpu.memory_space<vmem>>, vector<128x32xf32>
    %cst_140 = arith.constant dense<0.000000e+00> : vector<2x32xf32>
    %213 = tpu.matmul %211, %212, %cst_140 {dimension_numbers = #tpu.dot_dimension_numbers<[1], [0], [0], [1], [0, 0, 1, 1], [], []>} : vector<2x128xf32>, vector<128x32xf32>, vector<2x32xf32> -> vector<2x32xf32>
    %214 = arith.addf %206, %213 : vector<2x32xf32>
    %c6 = arith.constant 6 : index
    %c0_141 = arith.constant 0 : index
    %215 = vector.load %arg22[%c6, %c0_141] : memref<8x256xf32, #tpu.memory_space<vmem>>, vector<2x128xf32>
    %c384_142 = arith.constant 384 : index
    %c0_143 = arith.constant 0 : index
    %216 = vector.load %arg12[%c384_142, %c0_143] : memref<512x32xf32, #tpu.memory_space<vmem>>, vector<128x32xf32>
    %cst_144 = arith.constant dense<0.000000e+00> : vector<2x32xf32>
    %217 = tpu.matmul %215, %216, %cst_144 {dimension_numbers = #tpu.dot_dimension_numbers<[1], [0], [0], [1], [0, 0, 1, 1], [], []>} : vector<2x128xf32>, vector<128x32xf32>, vector<2x32xf32> -> vector<2x32xf32>
    %218 = arith.addf %210, %217 : vector<2x32xf32>
    %c6_145 = arith.constant 6 : index
    %c128_146 = arith.constant 128 : index
    %219 = vector.load %arg22[%c6_145, %c128_146] : memref<8x256xf32, #tpu.memory_space<vmem>>, vector<2x128xf32>
    %c384_147 = arith.constant 384 : index
    %c0_148 = arith.constant 0 : index
    %220 = vector.load %arg14[%c384_147, %c0_148] : memref<512x32xf32, #tpu.memory_space<vmem>>, vector<128x32xf32>
    %cst_149 = arith.constant dense<0.000000e+00> : vector<2x32xf32>
    %221 = tpu.matmul %219, %220, %cst_149 {dimension_numbers = #tpu.dot_dimension_numbers<[1], [0], [0], [1], [0, 0, 1, 1], [], []>} : vector<2x128xf32>, vector<128x32xf32>, vector<2x32xf32> -> vector<2x32xf32>
    %222 = arith.addf %214, %221 : vector<2x32xf32>
    %c0_150 = arith.constant 0 : index
    %c0_151 = arith.constant 0 : index
    %223 = vector.load %arg13[%c0_150, %c0_151] : memref<1x32xf32, #tpu.memory_space<vmem>>, vector<1x32xf32>
    %224 = vector.broadcast %223 : vector<1x32xf32> to vector<2x32xf32>
    %225 = arith.addf %218, %224 : vector<2x32xf32>
    %cst_152 = arith.constant 0.000000e+00 : f32
    %226 = vector.broadcast %cst_152 : f32 to vector<2x32xf32>
    %227 = arith.cmpf ogt, %225, %226 : vector<2x32xf32>
    %cst_153 = arith.constant 0.000000e+00 : f32
    %228 = vector.broadcast %cst_153 : f32 to vector<2x32xf32>
    %229 = arith.minimumf %225, %228 : vector<2x32xf32>
    %230 = math.exp %229 : vector<2x32xf32>
    %cst_154 = arith.constant 1.000000e+00 : f32
    %231 = vector.broadcast %cst_154 : f32 to vector<2x32xf32>
    %232 = arith.subf %230, %231 : vector<2x32xf32>
    %233 = arith.select %227, %225, %232 : vector<2x32xi1>, vector<2x32xf32>
    %c0_155 = arith.constant 0 : index
    %c0_156 = arith.constant 0 : index
    %234 = vector.load %arg16[%c0_155, %c0_156] : memref<32x32xf32, #tpu.memory_space<vmem>>, vector<32x32xf32>
    %cst_157 = arith.constant dense<0.000000e+00> : vector<2x32xf32>
    %235 = tpu.matmul %233, %234, %cst_157 {dimension_numbers = #tpu.dot_dimension_numbers<[1], [0], [0], [1], [0, 0, 1, 1], [], []>} : vector<2x32xf32>, vector<32x32xf32>, vector<2x32xf32> -> vector<2x32xf32>
    %c0_158 = arith.constant 0 : index
    %c0_159 = arith.constant 0 : index
    %236 = vector.load %arg17[%c0_158, %c0_159] : memref<1x32xf32, #tpu.memory_space<vmem>>, vector<1x32xf32>
    %237 = vector.broadcast %236 : vector<1x32xf32> to vector<2x32xf32>
    %238 = arith.addf %235, %237 : vector<2x32xf32>
    %cst_160 = arith.constant 0.000000e+00 : f32
    %239 = vector.broadcast %cst_160 : f32 to vector<2x32xf32>
    %240 = arith.cmpf ogt, %238, %239 : vector<2x32xf32>
    %cst_161 = arith.constant 0.000000e+00 : f32
    %241 = vector.broadcast %cst_161 : f32 to vector<2x32xf32>
    %242 = arith.minimumf %238, %241 : vector<2x32xf32>
    %243 = math.exp %242 : vector<2x32xf32>
    %cst_162 = arith.constant 1.000000e+00 : f32
    %244 = vector.broadcast %cst_162 : f32 to vector<2x32xf32>
    %245 = arith.subf %243, %244 : vector<2x32xf32>
    %246 = arith.select %240, %238, %245 : vector<2x32xi1>, vector<2x32xf32>
    %c0_163 = arith.constant 0 : index
    %c0_164 = arith.constant 0 : index
    %247 = vector.load %arg18[%c0_163, %c0_164] : memref<32x32xf32, #tpu.memory_space<vmem>>, vector<32x32xf32>
    %cst_165 = arith.constant dense<0.000000e+00> : vector<2x32xf32>
    %248 = tpu.matmul %246, %247, %cst_165 {dimension_numbers = #tpu.dot_dimension_numbers<[1], [0], [0], [1], [0, 0, 1, 1], [], []>} : vector<2x32xf32>, vector<32x32xf32>, vector<2x32xf32> -> vector<2x32xf32>
    %c0_166 = arith.constant 0 : index
    %c0_167 = arith.constant 0 : index
    %249 = vector.load %arg19[%c0_166, %c0_167] : memref<1x32xf32, #tpu.memory_space<vmem>>, vector<1x32xf32>
    %250 = vector.broadcast %249 : vector<1x32xf32> to vector<2x32xf32>
    %251 = arith.addf %248, %250 : vector<2x32xf32>
    %c0_168 = arith.constant 0 : index
    %c0_169 = arith.constant 0 : index
    %252 = vector.load %arg20[%c0_168, %c0_169] : memref<2x32xf32, #tpu.memory_space<vmem>>, vector<2x32xf32>
    tpu.vector_store %arg20[%c0_168, %c0_169], %251 {strides = array<i32>} : memref<2x32xf32, #tpu.memory_space<vmem>>, vector<2x32xf32>,
    %c0_170 = arith.constant 0 : index
    %c0_171 = arith.constant 0 : index
    %253 = vector.load %arg15[%c0_170, %c0_171] : memref<1x32xf32, #tpu.memory_space<vmem>>, vector<1x32xf32>
    %254 = vector.broadcast %253 : vector<1x32xf32> to vector<2x32xf32>
    %255 = arith.addf %222, %254 : vector<2x32xf32>
    %c0_172 = arith.constant 0 : index
    %c0_173 = arith.constant 0 : index
    %256 = vector.load %arg21[%c0_172, %c0_173] : memref<2x32xf32, #tpu.memory_space<vmem>>, vector<2x32xf32>
    tpu.vector_store %arg21[%c0_172, %c0_173], %255 {strides = array<i32>} : memref<2x32xf32, #tpu.memory_space<vmem>>, vector<2x32xf32>,
    return
  }
}

</mosaic_0001>

<llo_original>
// kernel: barlow_twins_forward.1
$region0: #{barlow_twins_forward.1}
  #allocation0 [shape = 'u32[]', space=smem, size = 0x4, offset = 0x4, fixed_abs, tag = 'smem constant byte address 0x4 - core index']
  #allocation1 [shape = 'u32[144,128]{1,0:T(1,128)}', space=vmem, size = 0x12000, scoped, tag = 'internal scratch']
  #allocation2 [shape = 'f32[8,256]{1,0:T(8,128)}', space=vmem, size = 0x2000, scoped, tag = 'scratch operand']
  %s0 = inlined_call_operand.vmem [shape: f32[128,9], index: 0, kind: input, shape index: {}]
  %s1 = inlined_call_operand.hbm [shape: f32[288,128], index: 1, kind: input, shape index: {}]
  %s2 = inlined_call_operand.vmem [shape: f32[72,32], index: 2, kind: input, shape index: {}]
  %s3 = inlined_call_operand.vmem [shape: f32[72,8], index: 3, kind: input, shape index: {}]
  %s4 = inlined_call_operand.vmem [shape: f32[9,64], index: 4, kind: input, shape index: {}]
  %s5 = inlined_call_operand.vmem [shape: f32[1,64], index: 5, kind: input, shape index: {}]
  %s6 = inlined_call_operand.hbm [shape: f32[576,128], index: 6, kind: input, shape index: {}]
  %s7 = inlined_call_operand.vmem [shape: f32[1,128], index: 7, kind: input, shape index: {}]
  %s8 = inlined_call_operand.hbm [shape: f32[1152,128], index: 8, kind: input, shape index: {}]
  %s9 = inlined_call_operand.vmem [shape: f32[1,128], index: 9, kind: input, shape index: {}]
  %s10 = inlined_call_operand.vmem [shape: f32[1152,256], index: 10, kind: input, shape index: {}]
  %s11 = inlined_call_operand.vmem [shape: f32[1,256], index: 11, kind: input, shape index: {}]
  %s12 = inlined_call_operand.vmem [shape: f32[512,32], index: 12, kind: input, shape index: {}]
  %s13 = inlined_call_operand.vmem [shape: f32[1,32], index: 13, kind: input, shape index: {}]
  %s14 = inlined_call_operand.vmem [shape: f32[512,32], index: 14, kind: input, shape index: {}]
  %s15 = inlined_call_operand.vmem [shape: f32[1,32], index: 15, kind: input, shape index: {}]
  %s16 = inlined_call_operand.vmem [shape: f32[32,32], index: 16, kind: input, shape index: {}]
  %s17 = inlined_call_operand.vmem [shape: f32[1,32], index: 17, kind: input, shape index: {}]
  %s18 = inlined_call_operand.vmem [shape: f32[32,32], index: 18, kind: input, shape index: {}]
  %s19 = inlined_call_operand.vmem [shape: f32[1,32], index: 19, kind: input, shape index: {}]
  %s20 = inlined_call_operand.hbm [shape: f32[2,32], index: 20, kind: output, shape index: {0}]
  %s21 = inlined_call_operand.hbm [shape: f32[2,32], index: 21, kind: output, shape index: {1}]
  %22 = xla_tuple %s20, %s21
  %s23 = sld [smem:[#allocation0]]
  $region110: #{barlow_twins_forward.1} parent=0
    _
  %s25 = ssub.s32 1, %s23
  %s26 = scalar_select 0, %s25, %s23
  $region1: #{barlow_twins_forward.1} parent=0
    #allocation3 [shape = 'u8[147456]{0}', space=vmem, size = 0x24000, scoped, tag = 'input window, operand 1, single buffered']
    #allocation4 [shape = 's32[1]{0}', space=sflag, size = 0x4, scoped, tag = 'scoped memory for barlow_twins_forward.1']
    #allocation5 [shape = 's32[1]{0}', space=sflag, size = 0x4, scoped, tag = 'scoped memory for barlow_twins_forward.1']
    #allocation6 [shape = 'u8[294912]{0}', space=vmem, size = 0x48000, scoped, tag = 'input window, operand 6, single buffered']
    #allocation7 [shape = 's32[1]{0}', space=sflag, size = 0x4, scoped, tag = 'scoped memory for barlow_twins_forward.1']
    #allocation8 [shape = 'u8[589824]{0}', space=vmem, size = 0x90000, scoped, tag = 'input window, operand 8, single buffered']
    #allocation9 [shape = 'u8[1024]{0}', space=vmem, size = 0x400, scoped, tag = 'output window, operand 0, single buffered']
    #allocation10 [shape = 'u8[1024]{0}', space=vmem, size = 0x400, scoped, tag = 'output window, operand 1, single buffered']
    #allocation11 [shape = 's32[1]{0}', space=sflag, size = 0x4, scoped, tag = 'scoped memory for barlow_twins_forward.1']
    %27 = vsyncpa [#allocation4], 0
    %28 = vsyncpa [#allocation7], 0
    %29 = vsyncpa [#allocation5], 0
    %30 = vsyncpa [#allocation11], 0
    // Predicated region
    $region2: #{barlow_twins_forward.1} parent=1 // pred_check
      _
    $region3: #{barlow_twins_forward.1} parent=1 // pred_check_branch
      %32 = sbr.rel (0) target = $region5
    $region4: #{barlow_twins_forward.1} parent=1 // pred_region
      _
    $region5: #{barlow_twins_forward.1} parent=1 // pred_fallthru
      _
    // Predicated region
    $region6: #{barlow_twins_forward.1} parent=1 // pred_check
      _
    $region7: #{barlow_twins_forward.1} parent=1 // pred_check_branch
      %34 = sbr.rel (0) target = $region9
    $region8: #{barlow_twins_forward.1} parent=1 // pred_region
      %s36 = ssub.s32 4608, 4608
      %37 = vsyncadd [#allocation4], %s36
      %s38 = sshll.u32 [#allocation3], 4
      %s39 = int_to_ptr.vmem [resolvable:$true] %s38
      %44 = dma.hbm_to_vmem [thread:$0]  %s1, 4608, %s39, [#allocation4], 128, 128, 8
    $region9: #{barlow_twins_forward.1} parent=1 // pred_fallthru
      _
    // Predicated region
    $region10: #{barlow_twins_forward.1} parent=1 // pred_check
      _
    $region11: #{barlow_twins_forward.1} parent=1 // pred_check_branch
      %46 = sbr.rel (0) target = $region13
    $region12: #{barlow_twins_forward.1} parent=1 // pred_region
      _
    $region13: #{barlow_twins_forward.1} parent=1 // pred_fallthru
      _
    // Predicated region
    $region14: #{barlow_twins_forward.1} parent=1 // pred_check
      _
    $region15: #{barlow_twins_forward.1} parent=1 // pred_check_branch
      %48 = sbr.rel (0) target = $region17
    $region16: #{barlow_twins_forward.1} parent=1 // pred_region
      _
    $region17: #{barlow_twins_forward.1} parent=1 // pred_fallthru
      _
    // Predicated region
    $region18: #{barlow_twins_forward.1} parent=1 // pred_check
      _
    $region19: #{barlow_twins_forward.1} parent=1 // pred_check_branch
      %50 = sbr.rel (0) target = $region21
    $region20: #{barlow_twins_forward.1} parent=1 // pred_region
      _
    $region21: #{barlow_twins_forward.1} parent=1 // pred_fallthru
      _
    // Predicated region
    $region22: #{barlow_twins_forward.1} parent=1 // pred_check
      _
    $region23: #{barlow_twins_forward.1} parent=1 // pred_check_branch
      %52 = sbr.rel (0) target = $region25
    $region24: #{barlow_twins_forward.1} parent=1 // pred_region
      _
    $region25: #{barlow_twins_forward.1} parent=1 // pred_fallthru
      _
    // Predicated region
    $region26: #{barlow_twins_forward.1} parent=1 // pred_check
      _
    $region27: #{barlow_twins_forward.1} parent=1 // pred_check_branch
      %54 = sbr.rel (0) target = $region29
    $region28: #{barlow_twins_forward.1} parent=1 // pred_region
      %s56 = ssub.s32 9216, 9216
      %57 = vsyncadd [#allocation7], %s56
      %s58 = sshll.u32 [#allocation6], 4
      %s59 = int_to_ptr.vmem [resolvable:$true] %s58
      %64 = dma.hbm_to_vmem [thread:$0]  %s6, 9216, %s59, [#allocation7], 128, 128, 8
    $region29: #{barlow_twins_forward.1} parent=1 // pred_fallthru
      _
    // Predicated region
    $region30: #{barlow_twins_forward.1} parent=1 // pred_check
      _
    $region31: #{barlow_twins_forward.1} parent=1 // pred_check_branch
      %66 = sbr.rel (0) target = $region33
    $region32: #{barlow_twins_forward.1} parent=1 // pred_region
      _
    $region33: #{barlow_twins_forward.1} parent=1 // pred_fallthru
      _
    // Predicated region
    $region34: #{barlow_twins_forward.1} parent=1 // pred_check
      _
    $region35: #{barlow_twins_forward.1} parent=1 // pred_check_branch
      %68 = sbr.rel (0) target = $region37
    $region36: #{barlow_twins_forward.1} parent=1 // pred_region
      %s70 = ssub.s32 18432, 18432
      %71 = vsyncadd [#allocation7], %s70
      %s72 = sshll.u32 [#allocation8], 4
      %s73 = int_to_ptr.vmem [resolvable:$true] %s72
      %78 = dma.hbm_to_vmem [thread:$0]  %s8, 18432, %s73, [#allocation7], 128, 128, 8
    $region37: #{barlow_twins_forward.1} parent=1 // pred_fallthru
      _
    // Predicated region
    $region38: #{barlow_twins_forward.1} parent=1 // pred_check
      _
    $region39: #{barlow_twins_forward.1} parent=1 // pred_check_branch
      %80 = sbr.rel (0) target = $region41
    $region40: #{barlow_twins_forward.1} parent=1 // pred_region
      _
    $region41: #{barlow_twins_forward.1} parent=1 // pred_fallthru
      _
    // Predicated region
    $region42: #{barlow_twins_forward.1} parent=1 // pred_check
      _
    $region43: #{barlow_twins_forward.1} parent=1 // pred_check_branch
      %82 = sbr.rel (0) target = $region45
    $region44: #{barlow_twins_forward.1} parent=1 // pred_region
      _
    $region45: #{barlow_twins_forward.1} parent=1 // pred_fallthru
      _
    // Predicated region
    $region46: #{barlow_twins_forward.1} parent=1 // pred_check
      _
    $region47: #{barlow_twins_forward.1} parent=1 // pred_check_branch
      %84 = sbr.rel (0) target = $region49
    $region48: #{barlow_twins_forward.1} parent=1 // pred_region
      _
    $region49: #{barlow_twins_forward.1} parent=1 // pred_fallthru
      _
    // Predicated region
    $region50: #{barlow_twins_forward.1} parent=1 // pred_check
      _
    $region51: #{barlow_twins_forward.1} parent=1 // pred_check_branch
      %86 = sbr.rel (0) target = $region53
    $region52: #{barlow_twins_forward.1} parent=1 // pred_region
      _
    $region53: #{barlow_twins_forward.1} parent=1 // pred_fallthru
      _
    // Predicated region
    $region54: #{barlow_twins_forward.1} parent=1 // pred_check
      _
    $region55: #{barlow_twins_forward.1} parent=1 // pred_check_branch
      %88 = sbr.rel (0) target = $region57
    $region56: #{barlow_twins_forward.1} parent=1 // pred_region
      _
    $region57: #{barlow_twins_forward.1} parent=1 // pred_fallthru
      _
    // Predicated region
    $region58: #{barlow_twins_forward.1} parent=1 // pred_check
      _
    $region59: #{barlow_twins_forward.1} parent=1 // pred_check_branch
      %90 = sbr.rel (0) target = $region61
    $region60: #{barlow_twins_forward.1} parent=1 // pred_region
      _
    $region61: #{barlow_twins_forward.1} parent=1 // pred_fallthru
      _
    // Predicated region
    $region62: #{barlow_twins_forward.1} parent=1 // pred_check
      _
    $region63: #{barlow_twins_forward.1} parent=1 // pred_check_branch
      %92 = sbr.rel (0) target = $region65
    $region64: #{barlow_twins_forward.1} parent=1 // pred_region
      _
    $region65: #{barlow_twins_forward.1} parent=1 // pred_fallthru
      _
    // Predicated region
    $region66: #{barlow_twins_forward.1} parent=1 // pred_check
      _
    $region67: #{barlow_twins_forward.1} parent=1 // pred_check_branch
      %94 = sbr.rel (0) target = $region69
    $region68: #{barlow_twins_forward.1} parent=1 // pred_region
      _
    $region69: #{barlow_twins_forward.1} parent=1 // pred_fallthru
      _
    // Predicated region
    $region70: #{barlow_twins_forward.1} parent=1 // pred_check
      _
    $region71: #{barlow_twins_forward.1} parent=1 // pred_check_branch
      %96 = sbr.rel (0) target = $region73
    $region72: #{barlow_twins_forward.1} parent=1 // pred_region
      _
    $region73: #{barlow_twins_forward.1} parent=1 // pred_fallthru
      _
    // Predicated region
    $region74: #{barlow_twins_forward.1} parent=1 // pred_check
      _
    $region75: #{barlow_twins_forward.1} parent=1 // pred_check_branch
      %98 = sbr.rel (0) target = $region77
    $region76: #{barlow_twins_forward.1} parent=1 // pred_region
      _
    $region77: #{barlow_twins_forward.1} parent=1 // pred_fallthru
      _
    // Predicated region
    $region78: #{barlow_twins_forward.1} parent=1 // pred_check
      _
    $region79: #{barlow_twins_forward.1} parent=1 // pred_check_branch
      %100 = sbr.rel (0) target = $region81
    $region80: #{barlow_twins_forward.1} parent=1 // pred_region
      _
    $region81: #{barlow_twins_forward.1} parent=1 // pred_fallthru
      _
    // Predicated region
    $region82: #{barlow_twins_forward.1} parent=1 // pred_check
      _
    $region83: #{barlow_twins_forward.1} parent=1 // pred_check_branch
      %102 = sbr.rel (0) target = $region85
    $region84: #{barlow_twins_forward.1} parent=1 // pred_region
      %103 = dma.done [#allocation4], 4608
    $region85: #{barlow_twins_forward.1} parent=1 // pred_fallthru
      _
    // Predicated region
    $region86: #{barlow_twins_forward.1} parent=1 // pred_check
      _
    $region87: #{barlow_twins_forward.1} parent=1 // pred_check_branch
      %105 = sbr.rel (0) target = $region89
    $region88: #{barlow_twins_forward.1} parent=1 // pred_region
      %106 = dma.done [#allocation7], 9216
    $region89: #{barlow_twins_forward.1} parent=1 // pred_fallthru
      _
    // Predicated region
    $region90: #{barlow_twins_forward.1} parent=1 // pred_check
      _
    $region91: #{barlow_twins_forward.1} parent=1 // pred_check_branch
      %108 = sbr.rel (0) target = $region93
    $region92: #{barlow_twins_forward.1} parent=1 // pred_region
      %109 = dma.done [#allocation7], 18432
    $region93: #{barlow_twins_forward.1} parent=1 // pred_fallthru
      _
    %v110 = vld [vmem:[%s0] sm:$0xff]
    %v111 = vld [vmem:[%s0 + $0x8] sm:$0xff]
    %v112 = vld [vmem:[%s0 + $0x10] sm:$0xff]
    %v113 = vld [vmem:[%s0 + $0x18] sm:$0xff]
    %v114 = vld [vmem:[%s0 + $0x20] sm:$0xff]
    %v115 = vld [vmem:[%s0 + $0x28] sm:$0xff]
    %v116 = vld [vmem:[%s0 + $0x30] sm:$0xff]
    %v117 = vld [vmem:[%s0 + $0x38] sm:$0xff]
    %v118 = vld [vmem:[%s0 + $0x40] sm:$0xff]
    %v119 = vld [vmem:[%s0 + $0x48] sm:$0xff]
    %v120 = vld [vmem:[%s0 + $0x50] sm:$0xff]
    %v121 = vld [vmem:[%s0 + $0x58] sm:$0xff]
    %v122 = vld [vmem:[%s0 + $0x60] sm:$0xff]
    %v123 = vld [vmem:[%s0 + $0x68] sm:$0xff]
    %v124 = vld [vmem:[%s0 + $0x70] sm:$0xff]
    %v125 = vld [vmem:[%s0 + $0x78] sm:$0xff]
    %v126 = vld [vmem:[%s4] sm:$0xff]
    %v127 = vld [vmem:[%s4 + $0x8] sm:$0x1]
    %v128 = vld [vmem:[%s5] sm:$0x1]
    %v130 = vlaneseq
    %v131 = vshrl.u32 %v130, 7
    %v132 = vsub.s32 0, %v131
    %v133 = vrot.slane %v128, %v132
    %vm135 = vcmask 72704
    %v137 = vsel %vm135, %v110, 0
    %v140 = vsel %vm135, %v111, 0
    %v143 = vsel %vm135, %v112, 0
    %v146 = vsel %vm135, %v113, 0
    %v149 = vsel %vm135, %v114, 0
    %v152 = vsel %vm135, %v115, 0
    %v155 = vsel %vm135, %v116, 0
    %v158 = vsel %vm135, %v117, 0
    %v161 = vsel %vm135, %v118, 0
    %v164 = vsel %vm135, %v119, 0
    %v167 = vsel %vm135, %v120, 0
    %v170 = vsel %vm135, %v121, 0
    %v173 = vsel %vm135, %v122, 0
    %v176 = vsel %vm135, %v123, 0
    %v179 = vsel %vm135, %v124, 0
    %v182 = vsel %vm135, %v125, 0
    %vm184 = vcmask 1040384
    %v186 = vsel %vm184, %v127, 0
    %188 = vmatprep.subr.mxu0 0.0
    %189 = vmatpush1.msra.mxu0 %v126
    %190 = vmatprep.subr.mxu0 0.0
    %191 = vmatpush1.msra.mxu0 %v186
    %192 = vmatprep.subr.mxu0 0.0
    %193 = vmatpush1.msra.mxu0 0.0
    %194 = vmatprep.subr.mxu0 0.0
    %195 = vmatpush1.msra.mxu0 0.0
    %196 = vmatprep.subr.mxu0 0.0
    %197 = vmatpush1.msra.mxu0 0.0
    %198 = vmatprep.subr.mxu0 0.0
    %199 = vmatpush1.msra.mxu0 0.0
    %200 = vmatprep.subr.mxu0 0.0
    %201 = vmatpush1.msra.mxu0 0.0
    %202 = vmatprep.subr.mxu0 0.0
    %203 = vmatpush1.msra.mxu0 0.0
    %204 = vmatprep.subr.mxu0 0.0
    %205 = vmatpush1.msra.mxu0 0.0
    %206 = vmatprep.subr.mxu0 0.0
    %207 = vmatpush1.msra.mxu0 0.0
    %208 = vmatprep.subr.mxu0 0.0
    %209 = vmatpush1.msra.mxu0 0.0
    %210 = vmatprep.subr.mxu0 0.0
    %211 = vmatpush1.msra.mxu0 0.0
    %212 = vmatprep.subr.mxu0 0.0
    %213 = vmatpush1.msra.mxu0 0.0
    %214 = vmatprep.subr.mxu0 0.0
    %215 = vmatpush1.msra.mxu0 0.0
    %216 = vmatprep.subr.mxu0 0.0
    %217 = vmatpush1.msra.mxu0 0.0
    %218 = vmatprep.subr.mxu0 0.0
    %219 = vmatpush1.msra.mxu0 0.0
    %220 = vmatprep.subr.mxu0 0.0
    %221 = vmatpush1.msra.mxu0 0.0
    %222 = vmatprep.subr.mxu0 0.0
    %223 = vmatpush1.msra.mxu0 0.0
    %224 = vmatprep.subr.mxu0 0.0
    %225 = vmatpush1.msra.mxu0 0.0
    %226 = vmatprep.subr.mxu0 0.0
    %227 = vmatpush1.msra.mxu0 0.0
    %228 = vmatprep.subr.mxu0 0.0
    %229 = vmatpush1.msra.mxu0 0.0
    %230 = vmatprep.subr.mxu0 0.0
    %231 = vmatpush1.msra.mxu0 0.0
    %232 = vmatprep.subr.mxu0 0.0
    %233 = vmatpush1.msra.mxu0 0.0
    %234 = vmatprep.subr.mxu0 0.0
    %235 = vmatpush1.msra.mxu0 0.0
    %236 = vmatprep.subr.mxu0 0.0
    %237 = vmatpush1.msra.mxu0 0.0
    %238 = vmatprep.subr.mxu0 0.0
    %239 = vmatpush1.msra.mxu0 0.0
    %240 = vmatprep.subr.mxu0 0.0
    %241 = vmatpush1.msra.mxu0 0.0
    %242 = vmatprep.subr.mxu0 0.0
    %243 = vmatpush1.msra.mxu0 0.0
    %244 = vmatprep.subr.mxu0 0.0
    %245 = vmatpush1.msra.mxu0 0.0
    %246 = vmatprep.subr.mxu0 0.0
    %247 = vmatpush1.msra.mxu0 0.0
    %248 = vmatprep.subr.mxu0 0.0
    %249 = vmatpush1.msra.mxu0 0.0
    %250 = vmatprep.subr.mxu0 0.0
    %251 = vmatpush1.msra.mxu0 0.0
    %252 = vmatprep.mubr.f32.mxu0 0.0
    %253 = vmatmul.mubr.f32.gmra.mrb[0].mxu0 %v137
    %v254 = vpop.f32.mrb[0].mxu0
    %v255 = vadd.f32 %v133, %v254
    %v256 = vpop.f32.mrb[0].mxu0
    %257 = vmatprep.mubr.f32.mxu0 0.0
    %258 = vmatmul.mubr.f32.gmra.mrb[0].mxu0 %v140
    %v259 = vpop.f32.mrb[0].mxu0
    %v260 = vadd.f32 %v133, %v259
    %v261 = vpop.f32.mrb[0].mxu0
    %262 = vmatprep.mubr.f32.mxu0 0.0
    %263 = vmatmul.mubr.f32.gmra.mrb[0].mxu0 %v143
    %v264 = vpop.f32.mrb[0].mxu0
    %v265 = vadd.f32 %v133, %v264
    %v266 = vpop.f32.mrb[0].mxu0
    %267 = vmatprep.mubr.f32.mxu0 0.0
    %268 = vmatmul.mubr.f32.gmra.mrb[0].mxu0 %v146
    %v269 = vpop.f32.mrb[0].mxu0
    %v270 = vadd.f32 %v133, %v269
    %v271 = vpop.f32.mrb[0].mxu0
    %272 = vmatprep.mubr.f32.mxu0 0.0
    %273 = vmatmul.mubr.f32.gmra.mrb[0].mxu0 %v149
    %v274 = vpop.f32.mrb[0].mxu0
    %v275 = vadd.f32 %v133, %v274
    %v276 = vpop.f32.mrb[0].mxu0
    %277 = vmatprep.mubr.f32.mxu0 0.0
    %278 = vmatmul.mubr.f32.gmra.mrb[0].mxu0 %v152
    %v279 = vpop.f32.mrb[0].mxu0
    %v280 = vadd.f32 %v133, %v279
    %v281 = vpop.f32.mrb[0].mxu0
    %282 = vmatprep.mubr.f32.mxu0 0.0
    %283 = vmatmul.mubr.f32.gmra.mrb[0].mxu0 %v155
    %v284 = vpop.f32.mrb[0].mxu0
    %v285 = vadd.f32 %v133, %v284
    %v286 = vpop.f32.mrb[0].mxu0
    %287 = vmatprep.mubr.f32.mxu0 0.0
    %288 = vmatmul.mubr.f32.gmra.mrb[0].mxu0 %v158
    %v289 = vpop.f32.mrb[0].mxu0
    %v290 = vadd.f32 %v133, %v289
    %v291 = vpop.f32.mrb[0].mxu0
    %292 = vmatprep.mubr.f32.mxu0 0.0
    %293 = vmatmul.mubr.f32.gmra.mrb[0].mxu0 %v161
    %v294 = vpop.f32.mrb[0].mxu0
    %v295 = vadd.f32 %v133, %v294
    %v296 = vpop.f32.mrb[0].mxu0
    %297 = vmatprep.mubr.f32.mxu0 0.0
    %298 = vmatmul.mubr.f32.gmra.mrb[0].mxu0 %v164
    %v299 = vpop.f32.mrb[0].mxu0
    %v300 = vadd.f32 %v133, %v299
    %v301 = vpop.f32.mrb[0].mxu0
    %302 = vmatprep.mubr.f32.mxu0 0.0
    %303 = vmatmul.mubr.f32.gmra.mrb[0].mxu0 %v167
    %v304 = vpop.f32.mrb[0].mxu0
    %v305 = vadd.f32 %v133, %v304
    %v306 = vpop.f32.mrb[0].mxu0
    %307 = vmatprep.mubr.f32.mxu0 0.0
    %308 = vmatmul.mubr.f32.gmra.mrb[0].mxu0 %v170
    %v309 = vpop.f32.mrb[0].mxu0
    %v310 = vadd.f32 %v133, %v309
    %v311 = vpop.f32.mrb[0].mxu0
    %312 = vmatprep.mubr.f32.mxu0 0.0
    %313 = vmatmul.mubr.f32.gmra.mrb[0].mxu0 %v173
    %v314 = vpop.f32.mrb[0].mxu0
    %v315 = vadd.f32 %v133, %v314
    %v316 = vpop.f32.mrb[0].mxu0
    %317 = vmatprep.mubr.f32.mxu0 0.0
    %318 = vmatmul.mubr.f32.gmra.mrb[0].mxu0 %v176
    %v319 = vpop.f32.mrb[0].mxu0
    %v320 = vadd.f32 %v133, %v319
    %v321 = vpop.f32.mrb[0].mxu0
    %322 = vmatprep.mubr.f32.mxu0 0.0
    %323 = vmatmul.mubr.f32.gmra.mrb[0].mxu0 %v179
    %v324 = vpop.f32.mrb[0].mxu0
    %v325 = vadd.f32 %v133, %v324
    %v326 = vpop.f32.mrb[0].mxu0
    %327 = vmatprep.mubr.f32.mxu0 0.0
    %328 = vmatmul.mubr.f32.gmra.mrb[0].mxu0 %v182
    %v329 = vpop.f32.mrb[0].mxu0
    %v330 = vadd.f32 %v133, %v329
    %v331 = vpop.f32.mrb[0].mxu0
    %332 = vdwg.mxu0
    %v333 = vmax.f32 %v255, 0.0
    %v334 = vmax.f32 %v260, 0.0
    %v335 = vmax.f32 %v265, 0.0
    %v336 = vmax.f32 %v270, 0.0
    %v337 = vmax.f32 %v275, 0.0
    %v338 = vmax.f32 %v280, 0.0
    %v339 = vmax.f32 %v285, 0.0
    %v340 = vmax.f32 %v290, 0.0
    %v341 = vmax.f32 %v295, 0.0
    %v342 = vmax.f32 %v300, 0.0
    %v343 = vmax.f32 %v305, 0.0
    %v344 = vmax.f32 %v310, 0.0
    %v345 = vmax.f32 %v315, 0.0
    %v346 = vmax.f32 %v320, 0.0
    %v347 = vmax.f32 %v325, 0.0
    %v348 = vmax.f32 %v330, 0.0
    %vm349 = vcmp.gt.f32.partialorder %v255, 0.0
    %vm350 = vcmp.gt.f32.partialorder %v260, 0.0
    %vm351 = vcmp.gt.f32.partialorder %v265, 0.0
    %vm352 = vcmp.gt.f32.partialorder %v270, 0.0
    %vm353 = vcmp.gt.f32.partialorder %v275, 0.0
    %vm354 = vcmp.gt.f32.partialorder %v280, 0.0
    %vm355 = vcmp.gt.f32.partialorder %v285, 0.0
    %vm356 = vcmp.gt.f32.partialorder %v290, 0.0
    %vm357 = vcmp.gt.f32.partialorder %v295, 0.0
    %vm358 = vcmp.gt.f32.partialorder %v300, 0.0
    %vm359 = vcmp.gt.f32.partialorder %v305, 0.0
    %vm360 = vcmp.gt.f32.partialorder %v310, 0.0
    %vm361 = vcmp.gt.f32.partialorder %v315, 0.0
    %vm362 = vcmp.gt.f32.partialorder %v320, 0.0
    %vm363 = vcmp.gt.f32.partialorder %v325, 0.0
    %vm364 = vcmp.gt.f32.partialorder %v330, 0.0
    %v365 = vmin.f32 %v255, 0.0
    %v366 = vmin.f32 %v260, 0.0
    %v367 = vmin.f32 %v265, 0.0
    %v368 = vmin.f32 %v270, 0.0
    %v369 = vmin.f32 %v275, 0.0
    %v370 = vmin.f32 %v280, 0.0
    %v371 = vmin.f32 %v285, 0.0
    %v372 = vmin.f32 %v290, 0.0
    %v373 = vmin.f32 %v295, 0.0
    %v374 = vmin.f32 %v300, 0.0
    %v375 = vmin.f32 %v305, 0.0
    %v376 = vmin.f32 %v310, 0.0
    %v377 = vmin.f32 %v315, 0.0
    %v378 = vmin.f32 %v320, 0.0
    %v379 = vmin.f32 %v325, 0.0
    %v380 = vmin.f32 %v330, 0.0
    %v381 = vmul.f32 %v365, 1.442695
    %v382 = vpow.pop %v381
    %v383 = vmul.f32 %v366, 1.442695
    %v384 = vpow.pop %v383
    %v385 = vmul.f32 %v367, 1.442695
    %v386 = vpow.pop %v385
    %v387 = vmul.f32 %v368, 1.442695
    %v388 = vpow.pop %v387
    %v389 = vmul.f32 %v369, 1.442695
    %v390 = vpow.pop %v389
    %v391 = vmul.f32 %v370, 1.442695
    %v392 = vpow.pop %v391
    %v393 = vmul.f32 %v371, 1.442695
    %v394 = vpow.pop %v393
    %v395 = vmul.f32 %v372, 1.442695
    %v396 = vpow.pop %v395
    %v397 = vmul.f32 %v373, 1.442695
    %v398 = vpow.pop %v397
    %v399 = vmul.f32 %v374, 1.442695
    %v400 = vpow.pop %v399
    %v401 = vmul.f32 %v375, 1.442695
    %v402 = vpow.pop %v401
    %v403 = vmul.f32 %v376, 1.442695
    %v404 = vpow.pop %v403
    %v405 = vmul.f32 %v377, 1.442695
    %v406 = vpow.pop %v405
    %v407 = vmul.f32 %v378, 1.442695
    %v408 = vpow.pop %v407
    %v409 = vmul.f32 %v379, 1.442695
    %v410 = vpow.pop %v409
    %v411 = vmul.f32 %v380, 1.442695
    %v412 = vpow.pop %v411
    %v413 = vsub.f32 %v382, 1.0
    %v414 = vsub.f32 %v384, 1.0
    %v415 = vsub.f32 %v386, 1.0
    %v416 = vsub.f32 %v388, 1.0
    %v417 = vsub.f32 %v390, 1.0
    %v418 = vsub.f32 %v392, 1.0
    %v419 = vsub.f32 %v394, 1.0
    %v420 = vsub.f32 %v396, 1.0
    %v421 = vsub.f32 %v398, 1.0
    %v422 = vsub.f32 %v400, 1.0
    %v423 = vsub.f32 %v402, 1.0
    %v424 = vsub.f32 %v404, 1.0
    %v425 = vsub.f32 %v406, 1.0
    %v426 = vsub.f32 %v408, 1.0
    %v427 = vsub.f32 %v410, 1.0
    %v428 = vsub.f32 %v412, 1.0
    %v429 = vsel %vm349, %v255, %v413
    %v430 = vsel %vm350, %v260, %v414
    %v431 = vsel %vm351, %v265, %v415
    %v432 = vsel %vm352, %v270, %v416
    %v433 = vsel %vm353, %v275, %v417
    %v434 = vsel %vm354, %v280, %v418
    %v435 = vsel %vm355, %v285, %v419
    %v436 = vsel %vm356, %v290, %v420
    %v437 = vsel %vm357, %v295, %v421
    %v438 = vsel %vm358, %v300, %v422
    %v439 = vsel %vm359, %v305, %v423
    %v440 = vsel %vm360, %v310, %v424
    %v441 = vsel %vm361, %v315, %v425
    %v442 = vsel %vm362, %v320, %v426
    %v443 = vsel %vm363, %v325, %v427
    %v444 = vsel %vm364, %v330, %v428
    %v445 = vlaneseq
    %v446 = vand.u32 %v445, 127
    %vm447 = vcmp.lt.s32.totalorder %v446, 32
    %v448 = vsel %vm447, %v333, %v429
    %v449 = vsel %vm447, %v334, %v430
    %v450 = vsel %vm447, %v335, %v431
    %v451 = vsel %vm447, %v336, %v432
    %v452 = vsel %vm447, %v337, %v433
    %v453 = vsel %vm447, %v338, %v434
    %v454 = vsel %vm447, %v339, %v435
    %v455 = vsel %vm447, %v340, %v436
    %v456 = vsel %vm447, %v341, %v437
    %v457 = vsel %vm447, %v342, %v438
    %v458 = vsel %vm447, %v343, %v439
    %v459 = vsel %vm447, %v344, %v440
    %v460 = vsel %vm447, %v345, %v441
    %v461 = vsel %vm447, %v346, %v442
    %v462 = vsel %vm447, %v347, %v443
    %v463 = vsel %vm447, %v348, %v444
    %v464 = vld [vmem:[#allocation3] sm:$0xff]
    %v465 = vld [vmem:[#allocation3 + $0x8] sm:$0xff]
    %v466 = vld [vmem:[#allocation3 + $0x10] sm:$0xff]
    %v467 = vld [vmem:[#allocation3 + $0x18] sm:$0xff]
    %v468 = vld [vmem:[#allocation3 + $0x20] sm:$0xff]
    %v469 = vld [vmem:[#allocation3 + $0x28] sm:$0xff]
    %v470 = vld [vmem:[#allocation3 + $0x30] sm:$0xff]
    %v471 = vld [vmem:[#allocation3 + $0x38] sm:$0xff]
    %v472 = vld [vmem:[#allocation3 + $0x40] sm:$0xff]
    %v473 = vld [vmem:[#allocation3 + $0x48] sm:$0xff]
    %v474 = vld [vmem:[#allocation3 + $0x50] sm:$0xff]
    %v475 = vld [vmem:[#allocation3 + $0x58] sm:$0xff]
    %v476 = vld [vmem:[#allocation3 + $0x60] sm:$0xff]
    %v477 = vld [vmem:[#allocation3 + $0x68] sm:$0xff]
    %v478 = vld [vmem:[#allocation3 + $0x70] sm:$0xff]
    %v479 = vld [vmem:[#allocation3 + $0x78] sm:$0xff]
    %v480 = vld [vmem:[#allocation3 + $0x80] sm:$0xff]
    %v481 = vld [vmem:[#allocation3 + $0x88] sm:$0xff]
    %v482 = vld [vmem:[#allocation3 + $0x90] sm:$0xff]
    %v483 = vld [vmem:[#allocation3 + $0x98] sm:$0xff]
    %v484 = vld [vmem:[#allocation3 + $0xa0] sm:$0xff]
    %v485 = vld [vmem:[#allocation3 + $0xa8] sm:$0xff]
    %v486 = vld [vmem:[#allocation3 + $0xb0] sm:$0xff]
    %v487 = vld [vmem:[#allocation3 + $0xb8] sm:$0xff]
    %v488 = vld [vmem:[#allocation3 + $0xc0] sm:$0xff]
    %v489 = vld [vmem:[#allocation3 + $0xc8] sm:$0xff]
    %v490 = vld [vmem:[#allocation3 + $0xd0] sm:$0xff]
    %v491 = vld [vmem:[#allocation3 + $0xd8] sm:$0xff]
    %v492 = vld [vmem:[#allocation3 + $0xe0] sm:$0xff]
    %v493 = vld [vmem:[#allocation3 + $0xe8] sm:$0xff]
    %v494 = vld [vmem:[#allocation3 + $0xf0] sm:$0xff]
    %v495 = vld [vmem:[#allocation3 + $0xf8] sm:$0xff]
    %v496 = vld [vmem:[#allocation3 + $0x100] sm:$0xff]
    %v497 = vld [vmem:[#allocation3 + $0x108] sm:$0xff]
    %v498 = vld [vmem:[#allocation3 + $0x110] sm:$0xff]
    %v499 = vld [vmem:[#allocation3 + $0x118] sm:$0xff]
    %500 = vmatprep.subr.mxu0 0.0
    %501 = vmatpush1.msra.mxu0 %v448
    %502 = vmatprep.subr.mxu0 0.0
    %503 = vmatpush1.msra.mxu0 %v449
    %504 = vmatprep.subr.mxu0 0.0
    %505 = vmatpush1.msra.mxu0 %v450
    %506 = vmatprep.subr.mxu0 0.0
    %507 = vmatpush1.msra.mxu0 %v451
    %508 = vmatprep.subr.mxu0 0.0
    %509 = vmatpush1.msra.mxu0 %v452
    %510 = vmatprep.subr.mxu0 0.0
    %511 = vmatpush1.msra.mxu0 %v453
    %512 = vmatprep.subr.mxu0 0.0
    %513 = vmatpush1.msra.mxu0 %v454
    %514 = vmatprep.subr.mxu0 0.0
    %515 = vmatpush1.msra.mxu0 %v455
    %516 = vmatprep.subr.mxu0 0.0
    %517 = vmatpush1.msra.mxu0 %v456
    %518 = vmatprep.subr.mxu0 0.0
    %519 = vmatpush1.msra.mxu0 %v457
    %520 = vmatprep.subr.mxu0 0.0
    %521 = vmatpush1.msra.mxu0 %v458
    %522 = vmatprep.subr.mxu0 0.0
    %523 = vmatpush1.msra.mxu0 %v459
    %524 = vmatprep.subr.mxu0 0.0
    %525 = vmatpush1.msra.mxu0 %v460
    %526 = vmatprep.subr.mxu0 0.0
    %527 = vmatpush1.msra.mxu0 %v461
    %528 = vmatprep.subr.mxu0 0.0
    %529 = vmatpush1.msra.mxu0 %v462
    %530 = vmatprep.subr.mxu0 0.0
    %531 = vmatpush1.msra.mxu0 %v463
    %532 = vmatprep.subr.mxu0 0.0
    %533 = vmatpush1.msra.mxu0 0.0
    %534 = vmatprep.subr.mxu0 0.0
    %535 = vmatpush1.msra.mxu0 0.0
    %536 = vmatprep.subr.mxu0 0.0
    %537 = vmatpush1.msra.mxu0 0.0
    %538 = vmatprep.subr.mxu0 0.0
    %539 = vmatpush1.msra.mxu0 0.0
    %540 = vmatprep.subr.mxu0 0.0
    %541 = vmatpush1.msra.mxu0 0.0
    %542 = vmatprep.subr.mxu0 0.0
    %543 = vmatpush1.msra.mxu0 0.0
    %544 = vmatprep.subr.mxu0 0.0
    %545 = vmatpush1.msra.mxu0 0.0
    %546 = vmatprep.subr.mxu0 0.0
    %547 = vmatpush1.msra.mxu0 0.0
    %548 = vmatprep.subr.mxu0 0.0
    %549 = vmatpush1.msra.mxu0 0.0
    %550 = vmatprep.subr.mxu0 0.0
    %551 = vmatpush1.msra.mxu0 0.0
    %552 = vmatprep.subr.mxu0 0.0
    %553 = vmatpush1.msra.mxu0 0.0
    %554 = vmatprep.subr.mxu0 0.0
    %555 = vmatpush1.msra.mxu0 0.0
    %556 = vmatprep.subr.mxu0 0.0
    %557 = vmatpush1.msra.mxu0 0.0
    %558 = vmatprep.subr.mxu0 0.0
    %559 = vmatpush1.msra.mxu0 0.0
    %560 = vmatprep.subr.mxu0 0.0
    %561 = vmatpush1.msra.mxu0 0.0
    %562 = vmatprep.subr.mxu0 0.0
    %563 = vmatpush1.msra.mxu0 0.0
    %564 = vmatprep.mubr.f32.mxu0 0.0
    %565 = vmatmul.mubr.f32.gmra.mrb[0].mxu0 %v464
    %v566 = vpop.f32.mrb[0].mxu0
    %v567 = vadd.f32 0.0, %v566
    %v568 = vpop.f32.mrb[0].mxu0
    %569 = vmatprep.mubr.f32.mxu0 0.0
    %570 = vmatmul.mubr.f32.gmra.mrb[0].mxu0 %v465
    %v571 = vpop.f32.mrb[0].mxu0
    %v572 = vadd.f32 0.0, %v571
    %v573 = vpop.f32.mrb[0].mxu0
    %574 = vmatprep.mubr.f32.mxu0 0.0
    %575 = vmatmul.mubr.f32.gmra.mrb[0].mxu0 %v466
    %v576 = vpop.f32.mrb[0].mxu0
    %v577 = vadd.f32 0.0, %v576
    %v578 = vpop.f32.mrb[0].mxu0
    %579 = vmatprep.mubr.f32.mxu0 0.0
    %580 = vmatmul.mubr.f32.gmra.mrb[0].mxu0 %v467
    %v581 = vpop.f32.mrb[0].mxu0
    %v582 = vadd.f32 0.0, %v581
    %v583 = vpop.f32.mrb[0].mxu0
    %584 = vmatprep.mubr.f32.mxu0 0.0
    %585 = vmatmul.mubr.f32.gmra.mrb[0].mxu0 %v468
    %v586 = vpop.f32.mrb[0].mxu0
    %v587 = vadd.f32 0.0, %v586
    %v588 = vpop.f32.mrb[0].mxu0
    %589 = vmatprep.mubr.f32.mxu0 0.0
    %590 = vmatmul.mubr.f32.gmra.mrb[0].mxu0 %v469
    %v591 = vpop.f32.mrb[0].mxu0
    %v592 = vadd.f32 0.0, %v591
    %v593 = vpop.f32.mrb[0].mxu0
    %594 = vmatprep.mubr.f32.mxu0 0.0
    %595 = vmatmul.mubr.f32.gmra.mrb[0].mxu0 %v470
    %v596 = vpop.f32.mrb[0].mxu0
    %v597 = vadd.f32 0.0, %v596
    %v598 = vpop.f32.mrb[0].mxu0
    %599 = vmatprep.mubr.f32.mxu0 0.0
    %600 = vmatmul.mubr.f32.gmra.mrb[0].mxu0 %v471
    %v601 = vpop.f32.mrb[0].mxu0
    %v602 = vadd.f32 0.0, %v601
    %v603 = vpop.f32.mrb[0].mxu0
    %604 = vmatprep.mubr.f32.mxu0 0.0
    %605 = vmatmul.mubr.f32.gmra.mrb[0].mxu0 %v472
    %v606 = vpop.f32.mrb[0].mxu0
    %v607 = vadd.f32 0.0, %v606
    %v608 = vpop.f32.mrb[0].mxu0
    %609 = vmatprep.mubr.f32.mxu0 0.0
    %610 = vmatmul.mubr.f32.gmra.mrb[0].mxu0 %v473
    %v611 = vpop.f32.mrb[0].mxu0
    %v612 = vadd.f32 0.0, %v611
    %v613 = vpop.f32.mrb[0].mxu0
    %614 = vmatprep.mubr.f32.mxu0 0.0
    %615 = vmatmul.mubr.f32.gmra.mrb[0].mxu0 %v474
    %v616 = vpop.f32.mrb[0].mxu0
    %v617 = vadd.f32 0.0, %v616
    %v618 = vpop.f32.mrb[0].mxu0
    %619 = vmatprep.mubr.f32.mxu0 0.0
    %620 = vmatmul.mubr.f32.gmra.mrb[0].mxu0 %v475
    %v621 = vpop.f32.mrb[0].mxu0
    %v622 = vadd.f32 0.0, %v621
    %v623 = vpop.f32.mrb[0].mxu0
    %624 = vmatprep.mubr.f32.mxu0 0.0
    %625 = vmatmul.mubr.f32.gmra.mrb[0].mxu0 %v476
    %v626 = vpop.f32.mrb[0].mxu0
    %v627 = vadd.f32 0.0, %v626
    %v628 = vpop.f32.mrb[0].mxu0
    %629 = vmatprep.mubr.f32.mxu0 0.0
    %630 = vmatmul.mubr.f32.gmra.mrb[0].mxu0 %v477
    %v631 = vpop.f32.mrb[0].mxu0
    %v632 = vadd.f32 0.0, %v631
    %v633 = vpop.f32.mrb[0].mxu0
    %634 = vmatprep.mubr.f32.mxu0 0.0
    %635 = vmatmul.mubr.f32.gmra.mrb[0].mxu0 %v478
    %v636 = vpop.f32.mrb[0].mxu0
    %v637 = vadd.f32 0.0, %v636
    %v638 = vpop.f32.mrb[0].mxu0
    %639 = vmatprep.mubr.f32.mxu0 0.0
    %640 = vmatmul.mubr.f32.gmra.mrb[0].mxu0 %v479
    %v641 = vpop.f32.mrb[0].mxu0
    %v642 = vadd.f32 0.0, %v641
    %v643 = vpop.f32.mrb[0].mxu0
    %644 = vmatprep.mubr.f32.mxu0 0.0
    %645 = vmatmul.mubr.f32.gmra.mrb[0].mxu0 %v480
    %v646 = vpop.f32.mrb[0].mxu0
    %v647 = vadd.f32 0.0, %v646
    %v648 = vpop.f32.mrb[0].mxu0
    %649 = vmatprep.mubr.f32.mxu0 0.0
    %650 = vmatmul.mubr.f32.gmra.mrb[0].mxu0 %v481
    %v651 = vpop.f32.mrb[0].mxu0
    %v652 = vadd.f32 0.0, %v651
    %v653 = vpop.f32.mrb[0].mxu0
    %654 = vmatprep.mubr.f32.mxu0 0.0
    %655 = vmatmul.mubr.f32.gmra.mrb[0].mxu0 %v482
    %v656 = vpop.f32.mrb[0].mxu0
    %v657 = vadd.f32 0.0, %v656
    %v658 = vpop.f32.mrb[0].mxu0
    %659 = vmatprep.mubr.f32.mxu0 0.0
    %660 = vmatmul.mubr.f32.gmra.mrb[0].mxu0 %v483
    %v661 = vpop.f32.mrb[0].mxu0
    %v662 = vadd.f32 0.0, %v661
    %v663 = vpop.f32.mrb[0].mxu0
    %664 = vmatprep.mubr.f32.mxu0 0.0
    %665 = vmatmul.mubr.f32.gmra.mrb[0].mxu0 %v484
    %v666 = vpop.f32.mrb[0].mxu0
    %v667 = vadd.f32 0.0, %v666
    %v668 = vpop.f32.mrb[0].mxu0
    %669 = vmatprep.mubr.f32.mxu0 0.0
    %670 = vmatmul.mubr.f32.gmra.mrb[0].mxu0 %v485
    %v671 = vpop.f32.mrb[0].mxu0
    %v672 = vadd.f32 0.0, %v671
    %v673 = vpop.f32.mrb[0].mxu0
    %674 = vmatprep.mubr.f32.mxu0 0.0
    %675 = vmatmul.mubr.f32.gmra.mrb[0].mxu0 %v486
    %v676 = vpop.f32.mrb[0].mxu0
    %v677 = vadd.f32 0.0, %v676
    %v678 = vpop.f32.mrb[0].mxu0
    %679 = vmatprep.mubr.f32.mxu0 0.0
    %680 = vmatmul.mubr.f32.gmra.mrb[0].mxu0 %v487
    %v681 = vpop.f32.mrb[0].mxu0
    %v682 = vadd.f32 0.0, %v681
    %v683 = vpop.f32.mrb[0].mxu0
    %684 = vmatprep.mubr.f32.mxu0 0.0
    %685 = vmatmul.mubr.f32.gmra.mrb[0].mxu0 %v488
    %v686 = vpop.f32.mrb[0].mxu0
    %v687 = vadd.f32 0.0, %v686
    %v688 = vpop.f32.mrb[0].mxu0
    %689 = vmatprep.mubr.f32.mxu0 0.0
    %690 = vmatmul.mubr.f32.gmra.mrb[0].mxu0 %v489
    %v691 = vpop.f32.mrb[0].mxu0
    %v692 = vadd.f32 0.0, %v691
    %v693 = vpop.f32.mrb[0].mxu0
    %694 = vmatprep.mubr.f32.mxu0 0.0
    %695 = vmatmul.mubr.f32.gmra.mrb[0].mxu0 %v490
    %v696 = vpop.f32.mrb[0].mxu0
    %v697 = vadd.f32 0.0, %v696
    %v698 = vpop.f32.mrb[0].mxu0
    %699 = vmatprep.mubr.f32.mxu0 0.0
    %700 = vmatmul.mubr.f32.gmra.mrb[0].mxu0 %v491
    %v701 = vpop.f32.mrb[0].mxu0
    %v702 = vadd.f32 0.0, %v701
    %v703 = vpop.f32.mrb[0].mxu0
    %704 = vmatprep.mubr.f32.mxu0 0.0
    %705 = vmatmul.mubr.f32.gmra.mrb[0].mxu0 %v492
    %v706 = vpop.f32.mrb[0].mxu0
    %v707 = vadd.f32 0.0, %v706
    %v708 = vpop.f32.mrb[0].mxu0
    %709 = vmatprep.mubr.f32.mxu0 0.0
    %710 = vmatmul.mubr.f32.gmra.mrb[0].mxu0 %v493
    %v711 = vpop.f32.mrb[0].mxu0
    %v712 = vadd.f32 0.0, %v711
    %v713 = vpop.f32.mrb[0].mxu0
    %714 = vmatprep.mubr.f32.mxu0 0.0
    %715 = vmatmul.mubr.f32.gmra.mrb[0].mxu0 %v494
    %v716 = vpop.f32.mrb[0].mxu0
    %v717 = vadd.f32 0.0, %v716
    %v718 = vpop.f32.mrb[0].mxu0
    %719 = vmatprep.mubr.f32.mxu0 0.0
    %720 = vmatmul.mubr.f32.gmra.mrb[0].mxu0 %v495
    %v721 = vpop.f32.mrb[0].mxu0
    %v722 = vadd.f32 0.0, %v721
    %v723 = vpop.f32.mrb[0].mxu0
    %724 = vmatprep.mubr.f32.mxu0 0.0
    %725 = vmatmul.mubr.f32.gmra.mrb[0].mxu0 %v496
    %v726 = vpop.f32.mrb[0].mxu0
    %v727 = vadd.f32 0.0, %v726
    %v728 = vpop.f32.mrb[0].mxu0
    %729 = vmatprep.mubr.f32.mxu0 0.0
    %730 = vmatmul.mubr.f32.gmra.mrb[0].mxu0 %v497
    %v731 = vpop.f32.mrb[0].mxu0
    %v732 = vadd.f32 0.0, %v731
    %v733 = vpop.f32.mrb[0].mxu0
    %734 = vmatprep.mubr.f32.mxu0 0.0
    %735 = vmatmul.mubr.f32.gmra.mrb[0].mxu0 %v498
    %v736 = vpop.f32.mrb[0].mxu0
    %v737 = vadd.f32 0.0, %v736
    %v738 = vpop.f32.mrb[0].mxu0
    %739 = vmatprep.mubr.f32.mxu0 0.0
    %740 = vmatmul.mubr.f32.gmra.mrb[0].mxu0 %v499
    %v741 = vpop.f32.mrb[0].mxu0
    %v742 = vadd.f32 0.0, %v741
    %v743 = vpop.f32.mrb[0].mxu0
    %744 = vdwg.mxu0
    %v745 = vld [vmem:[#allocation6] sm:$0xff]
    %v746 = vld [vmem:[#allocation6 + $0x8] sm:$0xff]
    %v747 = vld [vmem:[#allocation6 + $0x10] sm:$0xff]
    %v748 = vld [vmem:[#allocation6 + $0x18] sm:$0xff]
    %v749 = vld [vmem:[#allocation6 + $0x20] sm:$0xff]
    %v750 = vld [vmem:[#allocation6 + $0x28] sm:$0xff]
    %v751 = vld [vmem:[#allocation6 + $0x30] sm:$0xff]
    %v752 = vld [vmem:[#allocation6 + $0x38] sm:$0xff]
    %v753 = vld [vmem:[#allocation6 + $0x40] sm:$0xff]
    %v754 = vld [vmem:[#allocation6 + $0x48] sm:$0xff]
    %v755 = vld [vmem:[#allocation6 + $0x50] sm:$0xff]
    %v756 = vld [vmem:[#allocation6 + $0x58] sm:$0xff]
    %v757 = vld [vmem:[#allocation6 + $0x60] sm:$0xff]
    %v758 = vld [vmem:[#allocation6 + $0x68] sm:$0xff]
    %v759 = vld [vmem:[#allocation6 + $0x70] sm:$0xff]
    %v760 = vld [vmem:[#allocation6 + $0x78] sm:$0xff]
    %vm761 = vcmask 523264
    %v763 = vsel %vm761, %v587, 0
    %v766 = vsel %vm761, %v592, 0
    %v769 = vsel %vm761, %v597, 0
    %v772 = vsel %vm761, %v602, 0
    %774 = vmatprep.subr.mxu0 0.0
    %775 = vmatpush1.msra.mxu0 %v753
    %776 = vmatprep.subr.mxu0 0.0
    %777 = vmatpush1.msra.mxu0 %v754
    %778 = vmatprep.subr.mxu0 0.0
    %779 = vmatpush1.msra.mxu0 %v755
    %780 = vmatprep.subr.mxu0 0.0
    %781 = vmatpush1.msra.mxu0 %v756
    %782 = vmatprep.subr.mxu0 0.0
    %783 = vmatpush1.msra.mxu0 %v757
    %784 = vmatprep.subr.mxu0 0.0
    %785 = vmatpush1.msra.mxu0 %v758
    %786 = vmatprep.subr.mxu0 0.0
    %787 = vmatpush1.msra.mxu0 %v759
    %788 = vmatprep.subr.mxu0 0.0
    %789 = vmatpush1.msra.mxu0 %v760
    %790 = vmatprep.subr.mxu0 0.0
    %791 = vmatpush1.msra.mxu0 0.0
    %792 = vmatprep.subr.mxu0 0.0
    %793 = vmatpush1.msra.mxu0 0.0
    %794 = vmatprep.subr.mxu0 0.0
    %795 = vmatpush1.msra.mxu0 0.0
    %796 = vmatprep.subr.mxu0 0.0
    %797 = vmatpush1.msra.mxu0 0.0
    %798 = vmatprep.subr.mxu0 0.0
    %799 = vmatpush1.msra.mxu0 0.0
    %800 = vmatprep.subr.mxu0 0.0
    %801 = vmatpush1.msra.mxu0 0.0
    %802 = vmatprep.subr.mxu0 0.0
    %803 = vmatpush1.msra.mxu0 0.0
    %804 = vmatprep.subr.mxu0 0.0
    %805 = vmatpush1.msra.mxu0 0.0
    %806 = vmatprep.subr.mxu0 0.0
    %807 = vmatpush1.msra.mxu0 0.0
    %808 = vmatprep.subr.mxu0 0.0
    %809 = vmatpush1.msra.mxu0 0.0
    %810 = vmatprep.subr.mxu0 0.0
    %811 = vmatpush1.msra.mxu0 0.0
    %812 = vmatprep.subr.mxu0 0.0
    %813 = vmatpush1.msra.mxu0 0.0
    %814 = vmatprep.subr.mxu0 0.0
    %815 = vmatpush1.msra.mxu0 0.0
    %816 = vmatprep.subr.mxu0 0.0
    %817 = vmatpush1.msra.mxu0 0.0
    %818 = vmatprep.subr.mxu0 0.0
    %819 = vmatpush1.msra.mxu0 0.0
    %820 = vmatprep.subr.mxu0 0.0
    %821 = vmatpush1.msra.mxu0 0.0
    %822 = vmatprep.subr.mxu0 0.0
    %823 = vmatpush1.msra.mxu0 0.0
    %824 = vmatprep.subr.mxu0 0.0
    %825 = vmatpush1.msra.mxu0 0.0
    %826 = vmatprep.subr.mxu0 0.0
    %827 = vmatpush1.msra.mxu0 0.0
    %828 = vmatprep.subr.mxu0 0.0
    %829 = vmatpush1.msra.mxu0 0.0
    %830 = vmatprep.subr.mxu0 0.0
    %831 = vmatpush1.msra.mxu0 0.0
    %832 = vmatprep.subr.mxu0 0.0
    %833 = vmatpush1.msra.mxu0 0.0
    %834 = vmatprep.subr.mxu0 0.0
    %835 = vmatpush1.msra.mxu0 0.0
    %836 = vmatprep.subr.mxu0 0.0
    %837 = vmatpush1.msra.mxu0 0.0
    %838 = vmatprep.mubr.f32.mxu0 0.0
    %839 = vmatmul.mubr.f32.gmra.mrb[0].mxu0 %v763
    %v840 = vpop.f32.mrb[0].mxu0
    %v841 = vadd.f32 0.0, %v840
    %v842 = vpop.f32.mrb[0].mxu0
    %843 = vmatprep.mubr.f32.mxu0 0.0
    %844 = vmatmul.mubr.f32.gmra.mrb[0].mxu0 %v766
    %v845 = vpop.f32.mrb[0].mxu0
    %v846 = vadd.f32 0.0, %v845
    %v847 = vpop.f32.mrb[0].mxu0
    %848 = vmatprep.mubr.f32.mxu0 0.0
    %849 = vmatmul.mubr.f32.gmra.mrb[0].mxu0 %v769
    %v850 = vpop.f32.mrb[0].mxu0
    %v851 = vadd.f32 0.0, %v850
    %v852 = vpop.f32.mrb[0].mxu0
    %853 = vmatprep.mubr.f32.mxu0 0.0
    %854 = vmatmul.mubr.f32.gmra.mrb[0].mxu0 %v772
    %v855 = vpop.f32.mrb[0].mxu0
    %v856 = vadd.f32 0.0, %v855
    %v857 = vpop.f32.mrb[0].mxu0
    %858 = vdwg.mxu0
    %v860 = vsel %vm761, %v567, 0
    %v863 = vsel %vm761, %v572, 0
    %v866 = vsel %vm761, %v577, 0
    %v869 = vsel %vm761, %v582, 0
    %871 = vmatprep.subr.mxu0 0.0
    %872 = vmatpush1.msra.mxu0 %v745
    %873 = vmatprep.subr.mxu0 0.0
    %874 = vmatpush1.msra.mxu0 %v746
    %875 = vmatprep.subr.mxu0 0.0
    %876 = vmatpush1.msra.mxu0 %v747
    %877 = vmatprep.subr.mxu0 0.0
    %878 = vmatpush1.msra.mxu0 %v748
    %879 = vmatprep.subr.mxu0 0.0
    %880 = vmatpush1.msra.mxu0 %v749
    %881 = vmatprep.subr.mxu0 0.0
    %882 = vmatpush1.msra.mxu0 %v750
    %883 = vmatprep.subr.mxu0 0.0
    %884 = vmatpush1.msra.mxu0 %v751
    %885 = vmatprep.subr.mxu0 0.0
    %886 = vmatpush1.msra.mxu0 %v752
    %887 = vmatprep.subr.mxu0 0.0
    %888 = vmatpush1.msra.mxu0 0.0
    %889 = vmatprep.subr.mxu0 0.0
    %890 = vmatpush1.msra.mxu0 0.0
    %891 = vmatprep.subr.mxu0 0.0
    %892 = vmatpush1.msra.mxu0 0.0
    %893 = vmatprep.subr.mxu0 0.0
    %894 = vmatpush1.msra.mxu0 0.0
    %895 = vmatprep.subr.mxu0 0.0
    %896 = vmatpush1.msra.mxu0 0.0
    %897 = vmatprep.subr.mxu0 0.0
    %898 = vmatpush1.msra.mxu0 0.0
    %899 = vmatprep.subr.mxu0 0.0
    %900 = vmatpush1.msra.mxu0 0.0
    %901 = vmatprep.subr.mxu0 0.0
    %902 = vmatpush1.msra.mxu0 0.0
    %903 = vmatprep.subr.mxu0 0.0
    %904 = vmatpush1.msra.mxu0 0.0
    %905 = vmatprep.subr.mxu0 0.0
    %906 = vmatpush1.msra.mxu0 0.0
    %907 = vmatprep.subr.mxu0 0.0
    %908 = vmatpush1.msra.mxu0 0.0
    %909 = vmatprep.subr.mxu0 0.0
    %910 = vmatpush1.msra.mxu0 0.0
    %911 = vmatprep.subr.mxu0 0.0
    %912 = vmatpush1.msra.mxu0 0.0
    %913 = vmatprep.subr.mxu0 0.0
    %914 = vmatpush1.msra.mxu0 0.0
    %915 = vmatprep.subr.mxu0 0.0
    %916 = vmatpush1.msra.mxu0 0.0
    %917 = vmatprep.subr.mxu0 0.0
    %918 = vmatpush1.msra.mxu0 0.0
    %919 = vmatprep.subr.mxu0 0.0
    %920 = vmatpush1.msra.mxu0 0.0
    %921 = vmatprep.subr.mxu0 0.0
    %922 = vmatpush1.msra.mxu0 0.0
    %923 = vmatprep.subr.mxu0 0.0
    %924 = vmatpush1.msra.mxu0 0.0
    %925 = vmatprep.subr.mxu0 0.0
    %926 = vmatpush1.msra.mxu0 0.0
    %927 = vmatprep.subr.mxu0 0.0
    %928 = vmatpush1.msra.mxu0 0.0
    %929 = vmatprep.subr.mxu0 0.0
    %930 = vmatpush1.msra.mxu0 0.0
    %931 = vmatprep.subr.mxu0 0.0
    %932 = vmatpush1.msra.mxu0 0.0
    %933 = vmatprep.subr.mxu0 0.0
    %934 = vmatpush1.msra.mxu0 0.0
    %935 = vmatprep.mubr.f32.mxu0 0.0
    %936 = vmatmul.mubr.f32.gmra.mrb[0].mxu0 %v860
    %v937 = vpop.f32.mrb[0].mxu0
    %v938 = vadd.f32 %v841, %v937
    %v939 = vpop.f32.mrb[0].mxu0
    %940 = vmatprep.mubr.f32.mxu0 0.0
    %941 = vmatmul.mubr.f32.gmra.mrb[0].mxu0 %v863
    %v942 = vpop.f32.mrb[0].mxu0
    %v943 = vadd.f32 %v846, %v942
    %v944 = vpop.f32.mrb[0].mxu0
    %945 = vmatprep.mubr.f32.mxu0 0.0
    %946 = vmatmul.mubr.f32.gmra.mrb[0].mxu0 %v866
    %v947 = vpop.f32.mrb[0].mxu0
    %v948 = vadd.f32 %v851, %v947
    %v949 = vpop.f32.mrb[0].mxu0
    %950 = vmatprep.mubr.f32.mxu0 0.0
    %951 = vmatmul.mubr.f32.gmra.mrb[0].mxu0 %v869
    %v952 = vpop.f32.mrb[0].mxu0
    %v953 = vadd.f32 %v856, %v952
    %v954 = vpop.f32.mrb[0].mxu0
    %955 = vdwg.mxu0
    %v956 = vld [vmem:[#allocation6 + $0x80] sm:$0xff]
    %v957 = vld [vmem:[#allocation6 + $0x88] sm:$0xff]
    %v958 = vld [vmem:[#allocation6 + $0x90] sm:$0xff]
    %v959 = vld [vmem:[#allocation6 + $0x98] sm:$0xff]
    %v960 = vld [vmem:[#allocation6 + $0xa0] sm:$0xff]
    %v961 = vld [vmem:[#allocation6 + $0xa8] sm:$0xff]
    %v962 = vld [vmem:[#allocation6 + $0xb0] sm:$0xff]
    %v963 = vld [vmem:[#allocation6 + $0xb8] sm:$0xff]
    %v965 = vsel %vm761, %v607, 0
    %v968 = vsel %vm761, %v612, 0
    %v971 = vsel %vm761, %v617, 0
    %v974 = vsel %vm761, %v622, 0
    %976 = vmatprep.subr.mxu0 0.0
    %977 = vmatpush1.msra.mxu0 %v956
    %978 = vmatprep.subr.mxu0 0.0
    %979 = vmatpush1.msra.mxu0 %v957
    %980 = vmatprep.subr.mxu0 0.0
    %981 = vmatpush1.msra.mxu0 %v958
    %982 = vmatprep.subr.mxu0 0.0
    %983 = vmatpush1.msra.mxu0 %v959
    %984 = vmatprep.subr.mxu0 0.0
    %985 = vmatpush1.msra.mxu0 %v960
    %986 = vmatprep.subr.mxu0 0.0
    %987 = vmatpush1.msra.mxu0 %v961
    %988 = vmatprep.subr.mxu0 0.0
    %989 = vmatpush1.msra.mxu0 %v962
    %990 = vmatprep.subr.mxu0 0.0
    %991 = vmatpush1.msra.mxu0 %v963
    %992 = vmatprep.subr.mxu0 0.0
    %993 = vmatpush1.msra.mxu0 0.0
    %994 = vmatprep.subr.mxu0 0.0
    %995 = vmatpush1.msra.mxu0 0.0
    %996 = vmatprep.subr.mxu0 0.0
    %997 = vmatpush1.msra.mxu0 0.0
    %998 = vmatprep.subr.mxu0 0.0
    %999 = vmatpush1.msra.mxu0 0.0
    %1000 = vmatprep.subr.mxu0 0.0
    %1001 = vmatpush1.msra.mxu0 0.0
    %1002 = vmatprep.subr.mxu0 0.0
    %1003 = vmatpush1.msra.mxu0 0.0
    %1004 = vmatprep.subr.mxu0 0.0
    %1005 = vmatpush1.msra.mxu0 0.0
    %1006 = vmatprep.subr.mxu0 0.0
    %1007 = vmatpush1.msra.mxu0 0.0
    %1008 = vmatprep.subr.mxu0 0.0
    %1009 = vmatpush1.msra.mxu0 0.0
    %1010 = vmatprep.subr.mxu0 0.0
    %1011 = vmatpush1.msra.mxu0 0.0
    %1012 = vmatprep.subr.mxu0 0.0
    %1013 = vmatpush1.msra.mxu0 0.0
    %1014 = vmatprep.subr.mxu0 0.0
    %1015 = vmatpush1.msra.mxu0 0.0
    %1016 = vmatprep.subr.mxu0 0.0
    %1017 = vmatpush1.msra.mxu0 0.0
    %1018 = vmatprep.subr.mxu0 0.0
    %1019 = vmatpush1.msra.mxu0 0.0
    %1020 = vmatprep.subr.mxu0 0.0
    %1021 = vmatpush1.msra.mxu0 0.0
    %1022 = vmatprep.subr.mxu0 0.0
    %1023 = vmatpush1.msra.mxu0 0.0
    %1024 = vmatprep.subr.mxu0 0.0
    %1025 = vmatpush1.msra.mxu0 0.0
    %1026 = vmatprep.subr.mxu0 0.0
    %1027 = vmatpush1.msra.mxu0 0.0
    %1028 = vmatprep.subr.mxu0 0.0
    %1029 = vmatpush1.msra.mxu0 0.0
    %1030 = vmatprep.subr.mxu0 0.0
    %1031 = vmatpush1.msra.mxu0 0.0
    %1032 = vmatprep.subr.mxu0 0.0
    %1033 = vmatpush1.msra.mxu0 0.0
    %1034 = vmatprep.subr.mxu0 0.0
    %1035 = vmatpush1.msra.mxu0 0.0
    %1036 = vmatprep.subr.mxu0 0.0
    %1037 = vmatpush1.msra.mxu0 0.0
    %1038 = vmatprep.subr.mxu0 0.0
    %1039 = vmatpush1.msra.mxu0 0.0
    %1040 = vmatprep.mubr.f32.mxu0 0.0
    %1041 = vmatmul.mubr.f32.gmra.mrb[0].mxu0 %v965
    %v1042 = vpop.f32.mrb[0].mxu0
    %v1043 = vadd.f32 0.0, %v1042
    %v1044 = vpop.f32.mrb[0].mxu0
    %1045 = vmatprep.mubr.f32.mxu0 0.0
    %1046 = vmatmul.mubr.f32.gmra.mrb[0].mxu0 %v968
    %v1047 = vpop.f32.mrb[0].mxu0
    %v1048 = vadd.f32 0.0, %v1047
    %v1049 = vpop.f32.mrb[0].mxu0
    %1050 = vmatprep.mubr.f32.mxu0 0.0
    %1051 = vmatmul.mubr.f32.gmra.mrb[0].mxu0 %v971
    %v1052 = vpop.f32.mrb[0].mxu0
    %v1053 = vadd.f32 0.0, %v1052
    %v1054 = vpop.f32.mrb[0].mxu0
    %1055 = vmatprep.mubr.f32.mxu0 0.0
    %1056 = vmatmul.mubr.f32.gmra.mrb[0].mxu0 %v974
    %v1057 = vpop.f32.mrb[0].mxu0
    %v1058 = vadd.f32 0.0, %v1057
    %v1059 = vpop.f32.mrb[0].mxu0
    %1060 = vdwg.mxu0
    %v1061 = vadd.f32 %v938, %v1043
    %v1062 = vadd.f32 %v943, %v1048
    %v1063 = vadd.f32 %v948, %v1053
    %v1064 = vadd.f32 %v953, %v1058
    %v1065 = vld [vmem:[#allocation6 + $0xc0] sm:$0xff]
    %v1066 = vld [vmem:[#allocation6 + $0xc8] sm:$0xff]
    %v1067 = vld [vmem:[#allocation6 + $0xd0] sm:$0xff]
    %v1068 = vld [vmem:[#allocation6 + $0xd8] sm:$0xff]
    %v1069 = vld [vmem:[#allocation6 + $0xe0] sm:$0xff]
    %v1070 = vld [vmem:[#allocation6 + $0xe8] sm:$0xff]
    %v1071 = vld [vmem:[#allocation6 + $0xf0] sm:$0xff]
    %v1072 = vld [vmem:[#allocation6 + $0xf8] sm:$0xff]
    %v1074 = vsel %vm761, %v627, 0
    %v1077 = vsel %vm761, %v632, 0
    %v1080 = vsel %vm761, %v637, 0
    %v1083 = vsel %vm761, %v642, 0
    %1085 = vmatprep.subr.mxu0 0.0
    %1086 = vmatpush1.msra.mxu0 %v1065
    %1087 = vmatprep.subr.mxu0 0.0
    %1088 = vmatpush1.msra.mxu0 %v1066
    %1089 = vmatprep.subr.mxu0 0.0
    %1090 = vmatpush1.msra.mxu0 %v1067
    %1091 = vmatprep.subr.mxu0 0.0
    %1092 = vmatpush1.msra.mxu0 %v1068
    %1093 = vmatprep.subr.mxu0 0.0
    %1094 = vmatpush1.msra.mxu0 %v1069
    %1095 = vmatprep.subr.mxu0 0.0
    %1096 = vmatpush1.msra.mxu0 %v1070
    %1097 = vmatprep.subr.mxu0 0.0
    %1098 = vmatpush1.msra.mxu0 %v1071
    %1099 = vmatprep.subr.mxu0 0.0
    %1100 = vmatpush1.msra.mxu0 %v1072
    %1101 = vmatprep.subr.mxu0 0.0
    %1102 = vmatpush1.msra.mxu0 0.0
    %1103 = vmatprep.subr.mxu0 0.0
    %1104 = vmatpush1.msra.mxu0 0.0
    %1105 = vmatprep.subr.mxu0 0.0
    %1106 = vmatpush1.msra.mxu0 0.0
    %1107 = vmatprep.subr.mxu0 0.0
    %1108 = vmatpush1.msra.mxu0 0.0
    %1109 = vmatprep.subr.mxu0 0.0
    %1110 = vmatpush1.msra.mxu0 0.0
    %1111 = vmatprep.subr.mxu0 0.0
    %1112 = vmatpush1.msra.mxu0 0.0
    %1113 = vmatprep.subr.mxu0 0.0
    %1114 = vmatpush1.msra.mxu0 0.0
    %1115 = vmatprep.subr.mxu0 0.0
    %1116 = vmatpush1.msra.mxu0 0.0
    %1117 = vmatprep.subr.mxu0 0.0
    %1118 = vmatpush1.msra.mxu0 0.0
    %1119 = vmatprep.subr.mxu0 0.0
    %1120 = vmatpush1.msra.mxu0 0.0
    %1121 = vmatprep.subr.mxu0 0.0
    %1122 = vmatpush1.msra.mxu0 0.0
    %1123 = vmatprep.subr.mxu0 0.0
    %1124 = vmatpush1.msra.mxu0 0.0
    %1125 = vmatprep.subr.mxu0 0.0
    %1126 = vmatpush1.msra.mxu0 0.0
    %1127 = vmatprep.subr.mxu0 0.0
    %1128 = vmatpush1.msra.mxu0 0.0
    %1129 = vmatprep.subr.mxu0 0.0
    %1130 = vmatpush1.msra.mxu0 0.0
    %1131 = vmatprep.subr.mxu0 0.0
    %1132 = vmatpush1.msra.mxu0 0.0
    %1133 = vmatprep.subr.mxu0 0.0
    %1134 = vmatpush1.msra.mxu0 0.0
    %1135 = vmatprep.subr.mxu0 0.0
    %1136 = vmatpush1.msra.mxu0 0.0
    %1137 = vmatprep.subr.mxu0 0.0
    %1138 = vmatpush1.msra.mxu0 0.0
    %1139 = vmatprep.subr.mxu0 0.0
    %1140 = vmatpush1.msra.mxu0 0.0
    %1141 = vmatprep.subr.mxu0 0.0
    %1142 = vmatpush1.msra.mxu0 0.0
    %1143 = vmatprep.subr.mxu0 0.0
    %1144 = vmatpush1.msra.mxu0 0.0
    %1145 = vmatprep.subr.mxu0 0.0
    %1146 = vmatpush1.msra.mxu0 0.0
    %1147 = vmatprep.subr.mxu0 0.0
    %1148 = vmatpush1.msra.mxu0 0.0
    %1149 = vmatprep.mubr.f32.mxu0 0.0
    %1150 = vmatmul.mubr.f32.gmra.mrb[0].mxu0 %v1074
    %v1151 = vpop.f32.mrb[0].mxu0
    %v1152 = vadd.f32 0.0, %v1151
    %v1153 = vpop.f32.mrb[0].mxu0
    %1154 = vmatprep.mubr.f32.mxu0 0.0
    %1155 = vmatmul.mubr.f32.gmra.mrb[0].mxu0 %v1077
    %v1156 = vpop.f32.mrb[0].mxu0
    %v1157 = vadd.f32 0.0, %v1156
    %v1158 = vpop.f32.mrb[0].mxu0
    %1159 = vmatprep.mubr.f32.mxu0 0.0
    %1160 = vmatmul.mubr.f32.gmra.mrb[0].mxu0 %v1080
    %v1161 = vpop.f32.mrb[0].mxu0
    %v1162 = vadd.f32 0.0, %v1161
    %v1163 = vpop.f32.mrb[0].mxu0
    %1164 = vmatprep.mubr.f32.mxu0 0.0
    %1165 = vmatmul.mubr.f32.gmra.mrb[0].mxu0 %v1083
    %v1166 = vpop.f32.mrb[0].mxu0
    %v1167 = vadd.f32 0.0, %v1166
    %v1168 = vpop.f32.mrb[0].mxu0
    %1169 = vdwg.mxu0
    %v1170 = vadd.f32 %v1061, %v1152
    %v1171 = vadd.f32 %v1062, %v1157
    %v1172 = vadd.f32 %v1063, %v1162
    %v1173 = vadd.f32 %v1064, %v1167
    %v1174 = vld [vmem:[#allocation6 + $0x100] sm:$0xff]
    %v1175 = vld [vmem:[#allocation6 + $0x108] sm:$0xff]
    %v1176 = vld [vmem:[#allocation6 + $0x110] sm:$0xff]
    %v1177 = vld [vmem:[#allocation6 + $0x118] sm:$0xff]
    %v1178 = vld [vmem:[#allocation6 + $0x120] sm:$0xff]
    %v1179 = vld [vmem:[#allocation6 + $0x128] sm:$0xff]
    %v1180 = vld [vmem:[#allocation6 + $0x130] sm:$0xff]
    %v1181 = vld [vmem:[#allocation6 + $0x138] sm:$0xff]
    %v1183 = vsel %vm761, %v647, 0
    %v1186 = vsel %vm761, %v652, 0
    %v1189 = vsel %vm761, %v657, 0
    %v1192 = vsel %vm761, %v662, 0
    %1194 = vmatprep.subr.mxu0 0.0
    %1195 = vmatpush1.msra.mxu0 %v1174
    %1196 = vmatprep.subr.mxu0 0.0
    %1197 = vmatpush1.msra.mxu0 %v1175
    %1198 = vmatprep.subr.mxu0 0.0
    %1199 = vmatpush1.msra.mxu0 %v1176
    %1200 = vmatprep.subr.mxu0 0.0
    %1201 = vmatpush1.msra.mxu0 %v1177
    %1202 = vmatprep.subr.mxu0 0.0
    %1203 = vmatpush1.msra.mxu0 %v1178
    %1204 = vmatprep.subr.mxu0 0.0
    %1205 = vmatpush1.msra.mxu0 %v1179
    %1206 = vmatprep.subr.mxu0 0.0
    %1207 = vmatpush1.msra.mxu0 %v1180
    %1208 = vmatprep.subr.mxu0 0.0
    %1209 = vmatpush1.msra.mxu0 %v1181
    %1210 = vmatprep.subr.mxu0 0.0
    %1211 = vmatpush1.msra.mxu0 0.0
    %1212 = vmatprep.subr.mxu0 0.0
    %1213 = vmatpush1.msra.mxu0 0.0
    %1214 = vmatprep.subr.mxu0 0.0
    %1215 = vmatpush1.msra.mxu0 0.0
    %1216 = vmatprep.subr.mxu0 0.0
    %1217 = vmatpush1.msra.mxu0 0.0
    %1218 = vmatprep.subr.mxu0 0.0
    %1219 = vmatpush1.msra.mxu0 0.0
    %1220 = vmatprep.subr.mxu0 0.0
    %1221 = vmatpush1.msra.mxu0 0.0
    %1222 = vmatprep.subr.mxu0 0.0
    %1223 = vmatpush1.msra.mxu0 0.0
    %1224 = vmatprep.subr.mxu0 0.0
    %1225 = vmatpush1.msra.mxu0 0.0
    %1226 = vmatprep.subr.mxu0 0.0
    %1227 = vmatpush1.msra.mxu0 0.0
    %1228 = vmatprep.subr.mxu0 0.0
    %1229 = vmatpush1.msra.mxu0 0.0
    %1230 = vmatprep.subr.mxu0 0.0
    %1231 = vmatpush1.msra.mxu0 0.0
    %1232 = vmatprep.subr.mxu0 0.0
    %1233 = vmatpush1.msra.mxu0 0.0
    %1234 = vmatprep.subr.mxu0 0.0
    %1235 = vmatpush1.msra.mxu0 0.0
    %1236 = vmatprep.subr.mxu0 0.0
    %1237 = vmatpush1.msra.mxu0 0.0
    %1238 = vmatprep.subr.mxu0 0.0
    %1239 = vmatpush1.msra.mxu0 0.0
    %1240 = vmatprep.subr.mxu0 0.0
    %1241 = vmatpush1.msra.mxu0 0.0
    %1242 = vmatprep.subr.mxu0 0.0
    %1243 = vmatpush1.msra.mxu0 0.0
    %1244 = vmatprep.subr.mxu0 0.0
    %1245 = vmatpush1.msra.mxu0 0.0
    %1246 = vmatprep.subr.mxu0 0.0
    %1247 = vmatpush1.msra.mxu0 0.0
    %1248 = vmatprep.subr.mxu0 0.0
    %1249 = vmatpush1.msra.mxu0 0.0
    %1250 = vmatprep.subr.mxu0 0.0
    %1251 = vmatpush1.msra.mxu0 0.0
    %1252 = vmatprep.subr.mxu0 0.0
    %1253 = vmatpush1.msra.mxu0 0.0
    %1254 = vmatprep.subr.mxu0 0.0
    %1255 = vmatpush1.msra.mxu0 0.0
    %1256 = vmatprep.subr.mxu0 0.0
    %1257 = vmatpush1.msra.mxu0 0.0
    %1258 = vmatprep.mubr.f32.mxu0 0.0
    %1259 = vmatmul.mubr.f32.gmra.mrb[0].mxu0 %v1183
    %v1260 = vpop.f32.mrb[0].mxu0
    %v1261 = vadd.f32 0.0, %v1260
    %v1262 = vpop.f32.mrb[0].mxu0
    %1263 = vmatprep.mubr.f32.mxu0 0.0
    %1264 = vmatmul.mubr.f32.gmra.mrb[0].mxu0 %v1186
    %v1265 = vpop.f32.mrb[0].mxu0
    %v1266 = vadd.f32 0.0, %v1265
    %v1267 = vpop.f32.mrb[0].mxu0
    %1268 = vmatprep.mubr.f32.mxu0 0.0
    %1269 = vmatmul.mubr.f32.gmra.mrb[0].mxu0 %v1189
    %v1270 = vpop.f32.mrb[0].mxu0
    %v1271 = vadd.f32 0.0, %v1270
    %v1272 = vpop.f32.mrb[0].mxu0
    %1273 = vmatprep.mubr.f32.mxu0 0.0
    %1274 = vmatmul.mubr.f32.gmra.mrb[0].mxu0 %v1192
    %v1275 = vpop.f32.mrb[0].mxu0
    %v1276 = vadd.f32 0.0, %v1275
    %v1277 = vpop.f32.mrb[0].mxu0
    %1278 = vdwg.mxu0
    %v1279 = vadd.f32 %v1170, %v1261
    %v1280 = vadd.f32 %v1171, %v1266
    %v1281 = vadd.f32 %v1172, %v1271
    %v1282 = vadd.f32 %v1173, %v1276
    %v1283 = vld [vmem:[#allocation6 + $0x140] sm:$0xff]
    %v1284 = vld [vmem:[#allocation6 + $0x148] sm:$0xff]
    %v1285 = vld [vmem:[#allocation6 + $0x150] sm:$0xff]
    %v1286 = vld [vmem:[#allocation6 + $0x158] sm:$0xff]
    %v1287 = vld [vmem:[#allocation6 + $0x160] sm:$0xff]
    %v1288 = vld [vmem:[#allocation6 + $0x168] sm:$0xff]
    %v1289 = vld [vmem:[#allocation6 + $0x170] sm:$0xff]
    %v1290 = vld [vmem:[#allocation6 + $0x178] sm:$0xff]
    %v1292 = vsel %vm761, %v667, 0
    %v1295 = vsel %vm761, %v672, 0
    %v1298 = vsel %vm761, %v677, 0
    %v1301 = vsel %vm761, %v682, 0
    %1303 = vmatprep.subr.mxu0 0.0
    %1304 = vmatpush1.msra.mxu0 %v1283
    %1305 = vmatprep.subr.mxu0 0.0
    %1306 = vmatpush1.msra.mxu0 %v1284
    %1307 = vmatprep.subr.mxu0 0.0
    %1308 = vmatpush1.msra.mxu0 %v1285
    %1309 = vmatprep.subr.mxu0 0.0
    %1310 = vmatpush1.msra.mxu0 %v1286
    %1311 = vmatprep.subr.mxu0 0.0
    %1312 = vmatpush1.msra.mxu0 %v1287
    %1313 = vmatprep.subr.mxu0 0.0
    %1314 = vmatpush1.msra.mxu0 %v1288
    %1315 = vmatprep.subr.mxu0 0.0
    %1316 = vmatpush1.msra.mxu0 %v1289
    %1317 = vmatprep.subr.mxu0 0.0
    %1318 = vmatpush1.msra.mxu0 %v1290
    %1319 = vmatprep.subr.mxu0 0.0
    %1320 = vmatpush1.msra.mxu0 0.0
    %1321 = vmatprep.subr.mxu0 0.0
    %1322 = vmatpush1.msra.mxu0 0.0
    %1323 = vmatprep.subr.mxu0 0.0
    %1324 = vmatpush1.msra.mxu0 0.0
    %1325 = vmatprep.subr.mxu0 0.0
    %1326 = vmatpush1.msra.mxu0 0.0
    %1327 = vmatprep.subr.mxu0 0.0
    %1328 = vmatpush1.msra.mxu0 0.0
    %1329 = vmatprep.subr.mxu0 0.0
    %1330 = vmatpush1.msra.mxu0 0.0
    %1331 = vmatprep.subr.mxu0 0.0
    %1332 = vmatpush1.msra.mxu0 0.0
    %1333 = vmatprep.subr.mxu0 0.0
    %1334 = vmatpush1.msra.mxu0 0.0
    %1335 = vmatprep.subr.mxu0 0.0
    %1336 = vmatpush1.msra.mxu0 0.0
    %1337 = vmatprep.subr.mxu0 0.0
    %1338 = vmatpush1.msra.mxu0 0.0
    %1339 = vmatprep.subr.mxu0 0.0
    %1340 = vmatpush1.msra.mxu0 0.0
    %1341 = vmatprep.subr.mxu0 0.0
    %1342 = vmatpush1.msra.mxu0 0.0
    %1343 = vmatprep.subr.mxu0 0.0
    %1344 = vmatpush1.msra.mxu0 0.0
    %1345 = vmatprep.subr.mxu0 0.0
    %1346 = vmatpush1.msra.mxu0 0.0
    %1347 = vmatprep.subr.mxu0 0.0
    %1348 = vmatpush1.msra.mxu0 0.0
    %1349 = vmatprep.subr.mxu0 0.0
    %1350 = vmatpush1.msra.mxu0 0.0
    %1351 = vmatprep.subr.mxu0 0.0
    %1352 = vmatpush1.msra.mxu0 0.0
    %1353 = vmatprep.subr.mxu0 0.0
    %1354 = vmatpush1.msra.mxu0 0.0
    %1355 = vmatprep.subr.mxu0 0.0
    %1356 = vmatpush1.msra.mxu0 0.0
    %1357 = vmatprep.subr.mxu0 0.0
    %1358 = vmatpush1.msra.mxu0 0.0
    %1359 = vmatprep.subr.mxu0 0.0
    %1360 = vmatpush1.msra.mxu0 0.0
    %1361 = vmatprep.subr.mxu0 0.0
    %1362 = vmatpush1.msra.mxu0 0.0
    %1363 = vmatprep.subr.mxu0 0.0
    %1364 = vmatpush1.msra.mxu0 0.0
    %1365 = vmatprep.subr.mxu0 0.0
    %1366 = vmatpush1.msra.mxu0 0.0
    %1367 = vmatprep.mubr.f32.mxu0 0.0
    %1368 = vmatmul.mubr.f32.gmra.mrb[0].mxu0 %v1292
    %v1369 = vpop.f32.mrb[0].mxu0
    %v1370 = vadd.f32 0.0, %v1369
    %v1371 = vpop.f32.mrb[0].mxu0
    %1372 = vmatprep.mubr.f32.mxu0 0.0
    %1373 = vmatmul.mubr.f32.gmra.mrb[0].mxu0 %v1295
    %v1374 = vpop.f32.mrb[0].mxu0
    %v1375 = vadd.f32 0.0, %v1374
    %v1376 = vpop.f32.mrb[0].mxu0
    %1377 = vmatprep.mubr.f32.mxu0 0.0
    %1378 = vmatmul.mubr.f32.gmra.mrb[0].mxu0 %v1298
    %v1379 = vpop.f32.mrb[0].mxu0
    %v1380 = vadd.f32 0.0, %v1379
    %v1381 = vpop.f32.mrb[0].mxu0
    %1382 = vmatprep.mubr.f32.mxu0 0.0
    %1383 = vmatmul.mubr.f32.gmra.mrb[0].mxu0 %v1301
    %v1384 = vpop.f32.mrb[0].mxu0
    %v1385 = vadd.f32 0.0, %v1384
    %v1386 = vpop.f32.mrb[0].mxu0
    %1387 = vdwg.mxu0
    %v1388 = vadd.f32 %v1279, %v1370
    %v1389 = vadd.f32 %v1280, %v1375
    %v1390 = vadd.f32 %v1281, %v1380
    %v1391 = vadd.f32 %v1282, %v1385
    %v1392 = vld [vmem:[#allocation6 + $0x180] sm:$0xff]
    %v1393 = vld [vmem:[#allocation6 + $0x188] sm:$0xff]
    %v1394 = vld [vmem:[#allocation6 + $0x190] sm:$0xff]
    %v1395 = vld [vmem:[#allocation6 + $0x198] sm:$0xff]
    %v1396 = vld [vmem:[#allocation6 + $0x1a0] sm:$0xff]
    %v1397 = vld [vmem:[#allocation6 + $0x1a8] sm:$0xff]
    %v1398 = vld [vmem:[#allocation6 + $0x1b0] sm:$0xff]
    %v1399 = vld [vmem:[#allocation6 + $0x1b8] sm:$0xff]
    %v1401 = vsel %vm761, %v687, 0
    %v1404 = vsel %vm761, %v692, 0
    %v1407 = vsel %vm761, %v697, 0
    %v1410 = vsel %vm761, %v702, 0
    %1412 = vmatprep.subr.mxu0 0.0
    %1413 = vmatpush1.msra.mxu0 %v1392
    %1414 = vmatprep.subr.mxu0 0.0
    %1415 = vmatpush1.msra.mxu0 %v1393
    %1416 = vmatprep.subr.mxu0 0.0
    %1417 = vmatpush1.msra.mxu0 %v1394
    %1418 = vmatprep.subr.mxu0 0.0
    %1419 = vmatpush1.msra.mxu0 %v1395
    %1420 = vmatprep.subr.mxu0 0.0
    %1421 = vmatpush1.msra.mxu0 %v1396
    %1422 = vmatprep.subr.mxu0 0.0
    %1423 = vmatpush1.msra.mxu0 %v1397
    %1424 = vmatprep.subr.mxu0 0.0
    %1425 = vmatpush1.msra.mxu0 %v1398
    %1426 = vmatprep.subr.mxu0 0.0
    %1427 = vmatpush1.msra.mxu0 %v1399
    %1428 = vmatprep.subr.mxu0 0.0
    %1429 = vmatpush1.msra.mxu0 0.0
    %1430 = vmatprep.subr.mxu0 0.0
    %1431 = vmatpush1.msra.mxu0 0.0
    %1432 = vmatprep.subr.mxu0 0.0
    %1433 = vmatpush1.msra.mxu0 0.0
    %1434 = vmatprep.subr.mxu0 0.0
    %1435 = vmatpush1.msra.mxu0 0.0
    %1436 = vmatprep.subr.mxu0 0.0
    %1437 = vmatpush1.msra.mxu0 0.0
    %1438 = vmatprep.subr.mxu0 0.0
    %1439 = vmatpush1.msra.mxu0 0.0
    %1440 = vmatprep.subr.mxu0 0.0
    %1441 = vmatpush1.msra.mxu0 0.0
    %1442 = vmatprep.subr.mxu0 0.0
    %1443 = vmatpush1.msra.mxu0 0.0
    %1444 = vmatprep.subr.mxu0 0.0
    %1445 = vmatpush1.msra.mxu0 0.0
    %1446 = vmatprep.subr.mxu0 0.0
    %1447 = vmatpush1.msra.mxu0 0.0
    %1448 = vmatprep.subr.mxu0 0.0
    %1449 = vmatpush1.msra.mxu0 0.0
    %1450 = vmatprep.subr.mxu0 0.0
    %1451 = vmatpush1.msra.mxu0 0.0
    %1452 = vmatprep.subr.mxu0 0.0
    %1453 = vmatpush1.msra.mxu0 0.0
    %1454 = vmatprep.subr.mxu0 0.0
    %1455 = vmatpush1.msra.mxu0 0.0
    %1456 = vmatprep.subr.mxu0 0.0
    %1457 = vmatpush1.msra.mxu0 0.0
    %1458 = vmatprep.subr.mxu0 0.0
    %1459 = vmatpush1.msra.mxu0 0.0
    %1460 = vmatprep.subr.mxu0 0.0
    %1461 = vmatpush1.msra.mxu0 0.0
    %1462 = vmatprep.subr.mxu0 0.0
    %1463 = vmatpush1.msra.mxu0 0.0
    %1464 = vmatprep.subr.mxu0 0.0
    %1465 = vmatpush1.msra.mxu0 0.0
    %1466 = vmatprep.subr.mxu0 0.0
    %1467 = vmatpush1.msra.mxu0 0.0
    %1468 = vmatprep.subr.mxu0 0.0
    %1469 = vmatpush1.msra.mxu0 0.0
    %1470 = vmatprep.subr.mxu0 0.0
    %1471 = vmatpush1.msra.mxu0 0.0
    %1472 = vmatprep.subr.mxu0 0.0
    %1473 = vmatpush1.msra.mxu0 0.0
    %1474 = vmatprep.subr.mxu0 0.0
    %1475 = vmatpush1.msra.mxu0 0.0
    %1476 = vmatprep.mubr.f32.mxu0 0.0
    %1477 = vmatmul.mubr.f32.gmra.mrb[0].mxu0 %v1401
    %v1478 = vpop.f32.mrb[0].mxu0
    %v1479 = vadd.f32 0.0, %v1478
    %v1480 = vpop.f32.mrb[0].mxu0
    %1481 = vmatprep.mubr.f32.mxu0 0.0
    %1482 = vmatmul.mubr.f32.gmra.mrb[0].mxu0 %v1404
    %v1483 = vpop.f32.mrb[0].mxu0
    %v1484 = vadd.f32 0.0, %v1483
    %v1485 = vpop.f32.mrb[0].mxu0
    %1486 = vmatprep.mubr.f32.mxu0 0.0
    %1487 = vmatmul.mubr.f32.gmra.mrb[0].mxu0 %v1407
    %v1488 = vpop.f32.mrb[0].mxu0
    %v1489 = vadd.f32 0.0, %v1488
    %v1490 = vpop.f32.mrb[0].mxu0
    %1491 = vmatprep.mubr.f32.mxu0 0.0
    %1492 = vmatmul.mubr.f32.gmra.mrb[0].mxu0 %v1410
    %v1493 = vpop.f32.mrb[0].mxu0
    %v1494 = vadd.f32 0.0, %v1493
    %v1495 = vpop.f32.mrb[0].mxu0
    %1496 = vdwg.mxu0
    %v1497 = vadd.f32 %v1388, %v1479
    %v1498 = vadd.f32 %v1389, %v1484
    %v1499 = vadd.f32 %v1390, %v1489
    %v1500 = vadd.f32 %v1391, %v1494
    %v1501 = vld [vmem:[#allocation6 + $0x1c0] sm:$0xff]
    %v1502 = vld [vmem:[#allocation6 + $0x1c8] sm:$0xff]
    %v1503 = vld [vmem:[#allocation6 + $0x1d0] sm:$0xff]
    %v1504 = vld [vmem:[#allocation6 + $0x1d8] sm:$0xff]
    %v1505 = vld [vmem:[#allocation6 + $0x1e0] sm:$0xff]
    %v1506 = vld [vmem:[#allocation6 + $0x1e8] sm:$0xff]
    %v1507 = vld [vmem:[#allocation6 + $0x1f0] sm:$0xff]
    %v1508 = vld [vmem:[#allocation6 + $0x1f8] sm:$0xff]
    %v1510 = vsel %vm761, %v707, 0
    %v1513 = vsel %vm761, %v712, 0
    %v1516 = vsel %vm761, %v717, 0
    %v1519 = vsel %vm761, %v722, 0
    %1521 = vmatprep.subr.mxu0 0.0
    %1522 = vmatpush1.msra.mxu0 %v1501
    %1523 = vmatprep.subr.mxu0 0.0
    %1524 = vmatpush1.msra.mxu0 %v1502
    %1525 = vmatprep.subr.mxu0 0.0
    %1526 = vmatpush1.msra.mxu0 %v1503
    %1527 = vmatprep.subr.mxu0 0.0
    %1528 = vmatpush1.msra.mxu0 %v1504
    %1529 = vmatprep.subr.mxu0 0.0
    %1530 = vmatpush1.msra.mxu0 %v1505
    %1531 = vmatprep.subr.mxu0 0.0
    %1532 = vmatpush1.msra.mxu0 %v1506
    %1533 = vmatprep.subr.mxu0 0.0
    %1534 = vmatpush1.msra.mxu0 %v1507
    %1535 = vmatprep.subr.mxu0 0.0
    %1536 = vmatpush1.msra.mxu0 %v1508
    %1537 = vmatprep.subr.mxu0 0.0
    %1538 = vmatpush1.msra.mxu0 0.0
    %1539 = vmatprep.subr.mxu0 0.0
    %1540 = vmatpush1.msra.mxu0 0.0
    %1541 = vmatprep.subr.mxu0 0.0
    %1542 = vmatpush1.msra.mxu0 0.0
    %1543 = vmatprep.subr.mxu0 0.0
    %1544 = vmatpush1.msra.mxu0 0.0
    %1545 = vmatprep.subr.mxu0 0.0
    %1546 = vmatpush1.msra.mxu0 0.0
    %1547 = vmatprep.subr.mxu0 0.0
    %1548 = vmatpush1.msra.mxu0 0.0
    %1549 = vmatprep.subr.mxu0 0.0
    %1550 = vmatpush1.msra.mxu0 0.0
    %1551 = vmatprep.subr.mxu0 0.0
    %1552 = vmatpush1.msra.mxu0 0.0
    %1553 = vmatprep.subr.mxu0 0.0
    %1554 = vmatpush1.msra.mxu0 0.0
    %1555 = vmatprep.subr.mxu0 0.0
    %1556 = vmatpush1.msra.mxu0 0.0
    %1557 = vmatprep.subr.mxu0 0.0
    %1558 = vmatpush1.msra.mxu0 0.0
    %1559 = vmatprep.subr.mxu0 0.0
    %1560 = vmatpush1.msra.mxu0 0.0
    %1561 = vmatprep.subr.mxu0 0.0
    %1562 = vmatpush1.msra.mxu0 0.0
    %1563 = vmatprep.subr.mxu0 0.0
    %1564 = vmatpush1.msra.mxu0 0.0
    %1565 = vmatprep.subr.mxu0 0.0
    %1566 = vmatpush1.msra.mxu0 0.0
    %1567 = vmatprep.subr.mxu0 0.0
    %1568 = vmatpush1.msra.mxu0 0.0
    %1569 = vmatprep.subr.mxu0 0.0
    %1570 = vmatpush1.msra.mxu0 0.0
    %1571 = vmatprep.subr.mxu0 0.0
    %1572 = vmatpush1.msra.mxu0 0.0
    %1573 = vmatprep.subr.mxu0 0.0
    %1574 = vmatpush1.msra.mxu0 0.0
    %1575 = vmatprep.subr.mxu0 0.0
    %1576 = vmatpush1.msra.mxu0 0.0
    %1577 = vmatprep.subr.mxu0 0.0
    %1578 = vmatpush1.msra.mxu0 0.0
    %1579 = vmatprep.subr.mxu0 0.0
    %1580 = vmatpush1.msra.mxu0 0.0
    %1581 = vmatprep.subr.mxu0 0.0
    %1582 = vmatpush1.msra.mxu0 0.0
    %1583 = vmatprep.subr.mxu0 0.0
    %1584 = vmatpush1.msra.mxu0 0.0
    %1585 = vmatprep.mubr.f32.mxu0 0.0
    %1586 = vmatmul.mubr.f32.gmra.mrb[0].mxu0 %v1510
    %v1587 = vpop.f32.mrb[0].mxu0
    %v1588 = vadd.f32 0.0, %v1587
    %v1589 = vpop.f32.mrb[0].mxu0
    %1590 = vmatprep.mubr.f32.mxu0 0.0
    %1591 = vmatmul.mubr.f32.gmra.mrb[0].mxu0 %v1513
    %v1592 = vpop.f32.mrb[0].mxu0
    %v1593 = vadd.f32 0.0, %v1592
    %v1594 = vpop.f32.mrb[0].mxu0
    %1595 = vmatprep.mubr.f32.mxu0 0.0
    %1596 = vmatmul.mubr.f32.gmra.mrb[0].mxu0 %v1516
    %v1597 = vpop.f32.mrb[0].mxu0
    %v1598 = vadd.f32 0.0, %v1597
    %v1599 = vpop.f32.mrb[0].mxu0
    %1600 = vmatprep.mubr.f32.mxu0 0.0
    %1601 = vmatmul.mubr.f32.gmra.mrb[0].mxu0 %v1519
    %v1602 = vpop.f32.mrb[0].mxu0
    %v1603 = vadd.f32 0.0, %v1602
    %v1604 = vpop.f32.mrb[0].mxu0
    %1605 = vdwg.mxu0
    %v1606 = vadd.f32 %v1497, %v1588
    %v1607 = vadd.f32 %v1498, %v1593
    %v1608 = vadd.f32 %v1499, %v1598
    %v1609 = vadd.f32 %v1500, %v1603
    %v1610 = vld [vmem:[#allocation6 + $0x200] sm:$0xff]
    %v1611 = vld [vmem:[#allocation6 + $0x208] sm:$0xff]
    %v1612 = vld [vmem:[#allocation6 + $0x210] sm:$0xff]
    %v1613 = vld [vmem:[#allocation6 + $0x218] sm:$0xff]
    %v1614 = vld [vmem:[#allocation6 + $0x220] sm:$0xff]
    %v1615 = vld [vmem:[#allocation6 + $0x228] sm:$0xff]
    %v1616 = vld [vmem:[#allocation6 + $0x230] sm:$0xff]
    %v1617 = vld [vmem:[#allocation6 + $0x238] sm:$0xff]
    %v1619 = vsel %vm761, %v727, 0
    %v1622 = vsel %vm761, %v732, 0
    %v1625 = vsel %vm761, %v737, 0
    %v1628 = vsel %vm761, %v742, 0
    %1630 = vmatprep.subr.mxu0 0.0
    %1631 = vmatpush1.msra.mxu0 %v1610
    %1632 = vmatprep.subr.mxu0 0.0
    %1633 = vmatpush1.msra.mxu0 %v1611
    %1634 = vmatprep.subr.mxu0 0.0
    %1635 = vmatpush1.msra.mxu0 %v1612
    %1636 = vmatprep.subr.mxu0 0.0
    %1637 = vmatpush1.msra.mxu0 %v1613
    %1638 = vmatprep.subr.mxu0 0.0
    %1639 = vmatpush1.msra.mxu0 %v1614
    %1640 = vmatprep.subr.mxu0 0.0
    %1641 = vmatpush1.msra.mxu0 %v1615
    %1642 = vmatprep.subr.mxu0 0.0
    %1643 = vmatpush1.msra.mxu0 %v1616
    %1644 = vmatprep.subr.mxu0 0.0
    %1645 = vmatpush1.msra.mxu0 %v1617
    %1646 = vmatprep.subr.mxu0 0.0
    %1647 = vmatpush1.msra.mxu0 0.0
    %1648 = vmatprep.subr.mxu0 0.0
    %1649 = vmatpush1.msra.mxu0 0.0
    %1650 = vmatprep.subr.mxu0 0.0
    %1651 = vmatpush1.msra.mxu0 0.0
    %1652 = vmatprep.subr.mxu0 0.0
    %1653 = vmatpush1.msra.mxu0 0.0
    %1654 = vmatprep.subr.mxu0 0.0
    %1655 = vmatpush1.msra.mxu0 0.0
    %1656 = vmatprep.subr.mxu0 0.0
    %1657 = vmatpush1.msra.mxu0 0.0
    %1658 = vmatprep.subr.mxu0 0.0
    %1659 = vmatpush1.msra.mxu0 0.0
    %1660 = vmatprep.subr.mxu0 0.0
    %1661 = vmatpush1.msra.mxu0 0.0
    %1662 = vmatprep.subr.mxu0 0.0
    %1663 = vmatpush1.msra.mxu0 0.0
    %1664 = vmatprep.subr.mxu0 0.0
    %1665 = vmatpush1.msra.mxu0 0.0
    %1666 = vmatprep.subr.mxu0 0.0
    %1667 = vmatpush1.msra.mxu0 0.0
    %1668 = vmatprep.subr.mxu0 0.0
    %1669 = vmatpush1.msra.mxu0 0.0
    %1670 = vmatprep.subr.mxu0 0.0
    %1671 = vmatpush1.msra.mxu0 0.0
    %1672 = vmatprep.subr.mxu0 0.0
    %1673 = vmatpush1.msra.mxu0 0.0
    %1674 = vmatprep.subr.mxu0 0.0
    %1675 = vmatpush1.msra.mxu0 0.0
    %1676 = vmatprep.subr.mxu0 0.0
    %1677 = vmatpush1.msra.mxu0 0.0
    %1678 = vmatprep.subr.mxu0 0.0
    %1679 = vmatpush1.msra.mxu0 0.0
    %1680 = vmatprep.subr.mxu0 0.0
    %1681 = vmatpush1.msra.mxu0 0.0
    %1682 = vmatprep.subr.mxu0 0.0
    %1683 = vmatpush1.msra.mxu0 0.0
    %1684 = vmatprep.subr.mxu0 0.0
    %1685 = vmatpush1.msra.mxu0 0.0
    %1686 = vmatprep.subr.mxu0 0.0
    %1687 = vmatpush1.msra.mxu0 0.0
    %1688 = vmatprep.subr.mxu0 0.0
    %1689 = vmatpush1.msra.mxu0 0.0
    %1690 = vmatprep.subr.mxu0 0.0
    %1691 = vmatpush1.msra.mxu0 0.0
    %1692 = vmatprep.subr.mxu0 0.0
    %1693 = vmatpush1.msra.mxu0 0.0
    %1694 = vmatprep.mubr.f32.mxu0 0.0
    %1695 = vmatmul.mubr.f32.gmra.mrb[0].mxu0 %v1619
    %v1696 = vpop.f32.mrb[0].mxu0
    %v1697 = vadd.f32 0.0, %v1696
    %v1698 = vpop.f32.mrb[0].mxu0
    %1699 = vmatprep.mubr.f32.mxu0 0.0
    %1700 = vmatmul.mubr.f32.gmra.mrb[0].mxu0 %v1622
    %v1701 = vpop.f32.mrb[0].mxu0
    %v1702 = vadd.f32 0.0, %v1701
    %v1703 = vpop.f32.mrb[0].mxu0
    %1704 = vmatprep.mubr.f32.mxu0 0.0
    %1705 = vmatmul.mubr.f32.gmra.mrb[0].mxu0 %v1625
    %v1706 = vpop.f32.mrb[0].mxu0
    %v1707 = vadd.f32 0.0, %v1706
    %v1708 = vpop.f32.mrb[0].mxu0
    %1709 = vmatprep.mubr.f32.mxu0 0.0
    %1710 = vmatmul.mubr.f32.gmra.mrb[0].mxu0 %v1628
    %v1711 = vpop.f32.mrb[0].mxu0
    %v1712 = vadd.f32 0.0, %v1711
    %v1713 = vpop.f32.mrb[0].mxu0
    %1714 = vdwg.mxu0
    %v1715 = vadd.f32 %v1606, %v1697
    %v1716 = vadd.f32 %v1607, %v1702
    %v1717 = vadd.f32 %v1608, %v1707
    %v1718 = vadd.f32 %v1609, %v1712
    %v1719 = vld [vmem:[%s7] sm:$0x1]
    %v1721 = vlaneseq
    %v1722 = vshrl.u32 %v1721, 7
    %v1723 = vsub.s32 0, %v1722
    %v1724 = vrot.slane %v1719, %v1723
    %v1726 = vadd.f32 %v1715, %v1724
    %v1727 = vadd.f32 %v1716, %v1724
    %v1728 = vadd.f32 %v1717, %v1724
    %v1729 = vadd.f32 %v1718, %v1724
    %v1730 = vmax.f32 %v1726, 0.0
    %v1731 = vmax.f32 %v1727, 0.0
    %v1732 = vmax.f32 %v1728, 0.0
    %v1733 = vmax.f32 %v1729, 0.0
    %vm1734 = vcmp.gt.f32.partialorder %v1726, 0.0
    %vm1735 = vcmp.gt.f32.partialorder %v1727, 0.0
    %vm1736 = vcmp.gt.f32.partialorder %v1728, 0.0
    %vm1737 = vcmp.gt.f32.partialorder %v1729, 0.0
    %v1738 = vmin.f32 %v1726, 0.0
    %v1739 = vmin.f32 %v1727, 0.0
    %v1740 = vmin.f32 %v1728, 0.0
    %v1741 = vmin.f32 %v1729, 0.0
    %v1742 = vmul.f32 %v1738, 1.442695
    %v1743 = vpow.pop %v1742
    %v1744 = vmul.f32 %v1739, 1.442695
    %v1745 = vpow.pop %v1744
    %v1746 = vmul.f32 %v1740, 1.442695
    %v1747 = vpow.pop %v1746
    %v1748 = vmul.f32 %v1741, 1.442695
    %v1749 = vpow.pop %v1748
    %v1750 = vsub.f32 %v1743, 1.0
    %v1751 = vsub.f32 %v1745, 1.0
    %v1752 = vsub.f32 %v1747, 1.0
    %v1753 = vsub.f32 %v1749, 1.0
    %v1754 = vsel %vm1734, %v1726, %v1750
    %v1755 = vsel %vm1735, %v1727, %v1751
    %v1756 = vsel %vm1736, %v1728, %v1752
    %v1757 = vsel %vm1737, %v1729, %v1753
    %vm1758 = vcmp.lt.s32.totalorder %v446, 64
    %v1759 = vsel %vm1758, %v1730, %v1754
    %v1760 = vsel %vm1758, %v1731, %v1755
    %v1761 = vsel %vm1758, %v1732, %v1756
    %v1762 = vsel %vm1758, %v1733, %v1757
    %v1763 = vld [vmem:[%s2] sm:$0xff]
    %v1764 = vld [vmem:[%s2 + $0x8] sm:$0xff]
    %v1765 = vld [vmem:[%s2 + $0x10] sm:$0xff]
    %v1766 = vld [vmem:[%s2 + $0x18] sm:$0xff]
    %v1767 = vld [vmem:[%s2 + $0x20] sm:$0xff]
    %v1768 = vld [vmem:[%s2 + $0x28] sm:$0xff]
    %v1769 = vld [vmem:[%s2 + $0x30] sm:$0xff]
    %v1770 = vld [vmem:[%s2 + $0x38] sm:$0xff]
    %v1771 = vld [vmem:[%s2 + $0x40] sm:$0xff]
    %vm1772 = vcmask 261120
    %v1774 = vsel %vm1772, %v1763, 0
    %v1777 = vsel %vm1772, %v1764, 0
    %v1780 = vsel %vm1772, %v1765, 0
    %v1783 = vsel %vm1772, %v1766, 0
    %v1786 = vsel %vm1772, %v1767, 0
    %v1789 = vsel %vm1772, %v1768, 0
    %v1792 = vsel %vm1772, %v1769, 0
    %v1795 = vsel %vm1772, %v1770, 0
    %v1798 = vsel %vm1772, %v1771, 0
    %1800 = vmatprep.subr.mxu0 0.0
    %1801 = vmatpush1.msra.mxu0 %v1759
    %1802 = vmatprep.subr.mxu0 0.0
    %1803 = vmatpush1.msra.mxu0 %v1760
    %1804 = vmatprep.subr.mxu0 0.0
    %1805 = vmatpush1.msra.mxu0 %v1761
    %1806 = vmatprep.subr.mxu0 0.0
    %1807 = vmatpush1.msra.mxu0 %v1762
    %1808 = vmatprep.subr.mxu0 0.0
    %1809 = vmatpush1.msra.mxu0 0.0
    %1810 = vmatprep.subr.mxu0 0.0
    %1811 = vmatpush1.msra.mxu0 0.0
    %1812 = vmatprep.subr.mxu0 0.0
    %1813 = vmatpush1.msra.mxu0 0.0
    %1814 = vmatprep.subr.mxu0 0.0
    %1815 = vmatpush1.msra.mxu0 0.0
    %1816 = vmatprep.subr.mxu0 0.0
    %1817 = vmatpush1.msra.mxu0 0.0
    %1818 = vmatprep.subr.mxu0 0.0
    %1819 = vmatpush1.msra.mxu0 0.0
    %1820 = vmatprep.subr.mxu0 0.0
    %1821 = vmatpush1.msra.mxu0 0.0
    %1822 = vmatprep.subr.mxu0 0.0
    %1823 = vmatpush1.msra.mxu0 0.0
    %1824 = vmatprep.subr.mxu0 0.0
    %1825 = vmatpush1.msra.mxu0 0.0
    %1826 = vmatprep.subr.mxu0 0.0
    %1827 = vmatpush1.msra.mxu0 0.0
    %1828 = vmatprep.subr.mxu0 0.0
    %1829 = vmatpush1.msra.mxu0 0.0
    %1830 = vmatprep.subr.mxu0 0.0
    %1831 = vmatpush1.msra.mxu0 0.0
    %1832 = vmatprep.subr.mxu0 0.0
    %1833 = vmatpush1.msra.mxu0 0.0
    %1834 = vmatprep.subr.mxu0 0.0
    %1835 = vmatpush1.msra.mxu0 0.0
    %1836 = vmatprep.subr.mxu0 0.0
    %1837 = vmatpush1.msra.mxu0 0.0
    %1838 = vmatprep.subr.mxu0 0.0
    %1839 = vmatpush1.msra.mxu0 0.0
    %1840 = vmatprep.subr.mxu0 0.0
    %1841 = vmatpush1.msra.mxu0 0.0
    %1842 = vmatprep.subr.mxu0 0.0
    %1843 = vmatpush1.msra.mxu0 0.0
    %1844 = vmatprep.subr.mxu0 0.0
    %1845 = vmatpush1.msra.mxu0 0.0
    %1846 = vmatprep.subr.mxu0 0.0
    %1847 = vmatpush1.msra.mxu0 0.0
    %1848 = vmatprep.subr.mxu0 0.0
    %1849 = vmatpush1.msra.mxu0 0.0
    %1850 = vmatprep.subr.mxu0 0.0
    %1851 = vmatpush1.msra.mxu0 0.0
    %1852 = vmatprep.subr.mxu0 0.0
    %1853 = vmatpush1.msra.mxu0 0.0
    %1854 = vmatprep.subr.mxu0 0.0
    %1855 = vmatpush1.msra.mxu0 0.0
    %1856 = vmatprep.subr.mxu0 0.0
    %1857 = vmatpush1.msra.mxu0 0.0
    %1858 = vmatprep.subr.mxu0 0.0
    %1859 = vmatpush1.msra.mxu0 0.0
    %1860 = vmatprep.subr.mxu0 0.0
    %1861 = vmatpush1.msra.mxu0 0.0
    %1862 = vmatprep.subr.mxu0 0.0
    %1863 = vmatpush1.msra.mxu0 0.0
    %1864 = vmatprep.mubr.f32.mxu0 0.0
    %1865 = vmatmul.mubr.f32.gmra.mrb[0].mxu0 %v1774
    %v1866 = vpop.f32.mrb[0].mxu0
    %v1867 = vadd.f32 0.0, %v1866
    %v1868 = vpop.f32.mrb[0].mxu0
    %1869 = vmatprep.mubr.f32.mxu0 0.0
    %1870 = vmatmul.mubr.f32.gmra.mrb[0].mxu0 %v1777
    %v1871 = vpop.f32.mrb[0].mxu0
    %v1872 = vadd.f32 0.0, %v1871
    %v1873 = vpop.f32.mrb[0].mxu0
    %1874 = vmatprep.mubr.f32.mxu0 0.0
    %1875 = vmatmul.mubr.f32.gmra.mrb[0].mxu0 %v1780
    %v1876 = vpop.f32.mrb[0].mxu0
    %v1877 = vadd.f32 0.0, %v1876
    %v1878 = vpop.f32.mrb[0].mxu0
    %1879 = vmatprep.mubr.f32.mxu0 0.0
    %1880 = vmatmul.mubr.f32.gmra.mrb[0].mxu0 %v1783
    %v1881 = vpop.f32.mrb[0].mxu0
    %v1882 = vadd.f32 0.0, %v1881
    %v1883 = vpop.f32.mrb[0].mxu0
    %1884 = vmatprep.mubr.f32.mxu0 0.0
    %1885 = vmatmul.mubr.f32.gmra.mrb[0].mxu0 %v1786
    %v1886 = vpop.f32.mrb[0].mxu0
    %v1887 = vadd.f32 0.0, %v1886
    %v1888 = vpop.f32.mrb[0].mxu0
    %1889 = vmatprep.mubr.f32.mxu0 0.0
    %1890 = vmatmul.mubr.f32.gmra.mrb[0].mxu0 %v1789
    %v1891 = vpop.f32.mrb[0].mxu0
    %v1892 = vadd.f32 0.0, %v1891
    %v1893 = vpop.f32.mrb[0].mxu0
    %1894 = vmatprep.mubr.f32.mxu0 0.0
    %1895 = vmatmul.mubr.f32.gmra.mrb[0].mxu0 %v1792
    %v1896 = vpop.f32.mrb[0].mxu0
    %v1897 = vadd.f32 0.0, %v1896
    %v1898 = vpop.f32.mrb[0].mxu0
    %1899 = vmatprep.mubr.f32.mxu0 0.0
    %1900 = vmatmul.mubr.f32.gmra.mrb[0].mxu0 %v1795
    %v1901 = vpop.f32.mrb[0].mxu0
    %v1902 = vadd.f32 0.0, %v1901
    %v1903 = vpop.f32.mrb[0].mxu0
    %1904 = vmatprep.mubr.f32.mxu0 0.0
    %1905 = vmatmul.mubr.f32.gmra.mrb[0].mxu0 %v1798
    %v1906 = vpop.f32.mrb[0].mxu0
    %v1907 = vadd.f32 0.0, %v1906
    %v1908 = vpop.f32.mrb[0].mxu0
    %1909 = vdwg.mxu0
    %v1910 = vld [vmem:[#allocation8] sm:$0xff]
    %v1911 = vld [vmem:[#allocation8 + $0x8] sm:$0xff]
    %v1912 = vld [vmem:[#allocation8 + $0x10] sm:$0xff]
    %v1913 = vld [vmem:[#allocation8 + $0x18] sm:$0xff]
    %v1914 = vld [vmem:[#allocation8 + $0x20] sm:$0xff]
    %v1915 = vld [vmem:[#allocation8 + $0x28] sm:$0xff]
    %v1916 = vld [vmem:[#allocation8 + $0x30] sm:$0xff]
    %v1917 = vld [vmem:[#allocation8 + $0x38] sm:$0xff]
    %v1918 = vld [vmem:[#allocation8 + $0x40] sm:$0xff]
    %v1919 = vld [vmem:[#allocation8 + $0x48] sm:$0xff]
    %v1920 = vld [vmem:[#allocation8 + $0x50] sm:$0xff]
    %v1921 = vld [vmem:[#allocation8 + $0x58] sm:$0xff]
    %v1922 = vld [vmem:[#allocation8 + $0x60] sm:$0xff]
    %v1923 = vld [vmem:[#allocation8 + $0x68] sm:$0xff]
    %v1924 = vld [vmem:[#allocation8 + $0x70] sm:$0xff]
    %v1925 = vld [vmem:[#allocation8 + $0x78] sm:$0xff]
    %v1926 = vld [vmem:[#allocation8 + $0x80] sm:$0xff]
    %v1927 = vld [vmem:[#allocation8 + $0x88] sm:$0xff]
    %v1928 = vld [vmem:[#allocation8 + $0x90] sm:$0xff]
    %v1929 = vld [vmem:[#allocation8 + $0x98] sm:$0xff]
    %v1930 = vld [vmem:[#allocation8 + $0xa0] sm:$0xff]
    %v1931 = vld [vmem:[#allocation8 + $0xa8] sm:$0xff]
    %v1932 = vld [vmem:[#allocation8 + $0xb0] sm:$0xff]
    %v1933 = vld [vmem:[#allocation8 + $0xb8] sm:$0xff]
    %v1934 = vld [vmem:[#allocation8 + $0xc0] sm:$0xff]
    %v1935 = vld [vmem:[#allocation8 + $0xc8] sm:$0xff]
    %v1936 = vld [vmem:[#allocation8 + $0xd0] sm:$0xff]
    %v1937 = vld [vmem:[#allocation8 + $0xd8] sm:$0xff]
    %v1938 = vld [vmem:[#allocation8 + $0xe0] sm:$0xff]
    %v1939 = vld [vmem:[#allocation8 + $0xe8] sm:$0xff]
    %v1940 = vld [vmem:[#allocation8 + $0xf0] sm:$0xff]
    %v1941 = vld [vmem:[#allocation8 + $0xf8] sm:$0xff]
    %1942 = vmatprep.subr.mxu0 0.0
    %1943 = vmatpush1.msra.mxu0 %v1926
    %1944 = vmatprep.subr.mxu0 0.0
    %1945 = vmatpush1.msra.mxu0 %v1927
    %1946 = vmatprep.subr.mxu0 0.0
    %1947 = vmatpush1.msra.mxu0 %v1928
    %1948 = vmatprep.subr.mxu0 0.0
    %1949 = vmatpush1.msra.mxu0 %v1929
    %1950 = vmatprep.subr.mxu0 0.0
    %1951 = vmatpush1.msra.mxu0 %v1930
    %1952 = vmatprep.subr.mxu0 0.0
    %1953 = vmatpush1.msra.mxu0 %v1931
    %1954 = vmatprep.subr.mxu0 0.0
    %1955 = vmatpush1.msra.mxu0 %v1932
    %1956 = vmatprep.subr.mxu0 0.0
    %1957 = vmatpush1.msra.mxu0 %v1933
    %1958 = vmatprep.subr.mxu0 0.0
    %1959 = vmatpush1.msra.mxu0 %v1934
    %1960 = vmatprep.subr.mxu0 0.0
    %1961 = vmatpush1.msra.mxu0 %v1935
    %1962 = vmatprep.subr.mxu0 0.0
    %1963 = vmatpush1.msra.mxu0 %v1936
    %1964 = vmatprep.subr.mxu0 0.0
    %1965 = vmatpush1.msra.mxu0 %v1937
    %1966 = vmatprep.subr.mxu0 0.0
    %1967 = vmatpush1.msra.mxu0 %v1938
    %1968 = vmatprep.subr.mxu0 0.0
    %1969 = vmatpush1.msra.mxu0 %v1939
    %1970 = vmatprep.subr.mxu0 0.0
    %1971 = vmatpush1.msra.mxu0 %v1940
    %1972 = vmatprep.subr.mxu0 0.0
    %1973 = vmatpush1.msra.mxu0 %v1941
    %1974 = vmatprep.subr.mxu0 0.0
    %1975 = vmatpush1.msra.mxu0 0.0
    %1976 = vmatprep.subr.mxu0 0.0
    %1977 = vmatpush1.msra.mxu0 0.0
    %1978 = vmatprep.subr.mxu0 0.0
    %1979 = vmatpush1.msra.mxu0 0.0
    %1980 = vmatprep.subr.mxu0 0.0
    %1981 = vmatpush1.msra.mxu0 0.0
    %1982 = vmatprep.subr.mxu0 0.0
    %1983 = vmatpush1.msra.mxu0 0.0
    %1984 = vmatprep.subr.mxu0 0.0
    %1985 = vmatpush1.msra.mxu0 0.0
    %1986 = vmatprep.subr.mxu0 0.0
    %1987 = vmatpush1.msra.mxu0 0.0
    %1988 = vmatprep.subr.mxu0 0.0
    %1989 = vmatpush1.msra.mxu0 0.0
    %1990 = vmatprep.subr.mxu0 0.0
    %1991 = vmatpush1.msra.mxu0 0.0
    %1992 = vmatprep.subr.mxu0 0.0
    %1993 = vmatpush1.msra.mxu0 0.0
    %1994 = vmatprep.subr.mxu0 0.0
    %1995 = vmatpush1.msra.mxu0 0.0
    %1996 = vmatprep.subr.mxu0 0.0
    %1997 = vmatpush1.msra.mxu0 0.0
    %1998 = vmatprep.subr.mxu0 0.0
    %1999 = vmatpush1.msra.mxu0 0.0
    %2000 = vmatprep.subr.mxu0 0.0
    %2001 = vmatpush1.msra.mxu0 0.0
    %2002 = vmatprep.subr.mxu0 0.0
    %2003 = vmatpush1.msra.mxu0 0.0
    %2004 = vmatprep.subr.mxu0 0.0
    %2005 = vmatpush1.msra.mxu0 0.0
    %2006 = vmatprep.mubr.f32.mxu0 0.0
    %2007 = vmatmul.mubr.f32.gmra.mrb[0].mxu0 %v1872
    %v2008 = vpop.f32.mrb[0].mxu0
    %v2009 = vadd.f32 0.0, %v2008
    %v2010 = vpop.f32.mrb[0].mxu0
    %2011 = vdwg.mxu0
    %2012 = vmatprep.subr.mxu0 0.0
    %2013 = vmatpush1.msra.mxu0 %v1910
    %2014 = vmatprep.subr.mxu0 0.0
    %2015 = vmatpush1.msra.mxu0 %v1911
    %2016 = vmatprep.subr.mxu0 0.0
    %2017 = vmatpush1.msra.mxu0 %v1912
    %2018 = vmatprep.subr.mxu0 0.0
    %2019 = vmatpush1.msra.mxu0 %v1913
    %2020 = vmatprep.subr.mxu0 0.0
    %2021 = vmatpush1.msra.mxu0 %v1914
    %2022 = vmatprep.subr.mxu0 0.0
    %2023 = vmatpush1.msra.mxu0 %v1915
    %2024 = vmatprep.subr.mxu0 0.0
    %2025 = vmatpush1.msra.mxu0 %v1916
    %2026 = vmatprep.subr.mxu0 0.0
    %2027 = vmatpush1.msra.mxu0 %v1917
    %2028 = vmatprep.subr.mxu0 0.0
    %2029 = vmatpush1.msra.mxu0 %v1918
    %2030 = vmatprep.subr.mxu0 0.0
    %2031 = vmatpush1.msra.mxu0 %v1919
    %2032 = vmatprep.subr.mxu0 0.0
    %2033 = vmatpush1.msra.mxu0 %v1920
    %2034 = vmatprep.subr.mxu0 0.0
    %2035 = vmatpush1.msra.mxu0 %v1921
    %2036 = vmatprep.subr.mxu0 0.0
    %2037 = vmatpush1.msra.mxu0 %v1922
    %2038 = vmatprep.subr.mxu0 0.0
    %2039 = vmatpush1.msra.mxu0 %v1923
    %2040 = vmatprep.subr.mxu0 0.0
    %2041 = vmatpush1.msra.mxu0 %v1924
    %2042 = vmatprep.subr.mxu0 0.0
    %2043 = vmatpush1.msra.mxu0 %v1925
    %2044 = vmatprep.subr.mxu0 0.0
    %2045 = vmatpush1.msra.mxu0 0.0
    %2046 = vmatprep.subr.mxu0 0.0
    %2047 = vmatpush1.msra.mxu0 0.0
    %2048 = vmatprep.subr.mxu0 0.0
    %2049 = vmatpush1.msra.mxu0 0.0
    %2050 = vmatprep.subr.mxu0 0.0
    %2051 = vmatpush1.msra.mxu0 0.0
    %2052 = vmatprep.subr.mxu0 0.0
    %2053 = vmatpush1.msra.mxu0 0.0
    %2054 = vmatprep.subr.mxu0 0.0
    %2055 = vmatpush1.msra.mxu0 0.0
    %2056 = vmatprep.subr.mxu0 0.0
    %2057 = vmatpush1.msra.mxu0 0.0
    %2058 = vmatprep.subr.mxu0 0.0
    %2059 = vmatpush1.msra.mxu0 0.0
    %2060 = vmatprep.subr.mxu0 0.0
    %2061 = vmatpush1.msra.mxu0 0.0
    %2062 = vmatprep.subr.mxu0 0.0
    %2063 = vmatpush1.msra.mxu0 0.0
    %2064 = vmatprep.subr.mxu0 0.0
    %2065 = vmatpush1.msra.mxu0 0.0
    %2066 = vmatprep.subr.mxu0 0.0
    %2067 = vmatpush1.msra.mxu0 0.0
    %2068 = vmatprep.subr.mxu0 0.0
    %2069 = vmatpush1.msra.mxu0 0.0
    %2070 = vmatprep.subr.mxu0 0.0
    %2071 = vmatpush1.msra.mxu0 0.0
    %2072 = vmatprep.subr.mxu0 0.0
    %2073 = vmatpush1.msra.mxu0 0.0
    %2074 = vmatprep.subr.mxu0 0.0
    %2075 = vmatpush1.msra.mxu0 0.0
    %2076 = vmatprep.mubr.f32.mxu0 0.0
    %2077 = vmatmul.mubr.f32.gmra.mrb[0].mxu0 %v1867
    %v2078 = vpop.f32.mrb[0].mxu0
    %v2079 = vadd.f32 %v2009, %v2078
    %v2080 = vpop.f32.mrb[0].mxu0
    %2081 = vdwg.mxu0
    %v2082 = vld [vmem:[#allocation8 + $0x100] sm:$0xff]
    %v2083 = vld [vmem:[#allocation8 + $0x108] sm:$0xff]
    %v2084 = vld [vmem:[#allocation8 + $0x110] sm:$0xff]
    %v2085 = vld [vmem:[#allocation8 + $0x118] sm:$0xff]
    %v2086 = vld [vmem:[#allocation8 + $0x120] sm:$0xff]
    %v2087 = vld [vmem:[#allocation8 + $0x128] sm:$0xff]
    %v2088 = vld [vmem:[#allocation8 + $0x130] sm:$0xff]
    %v2089 = vld [vmem:[#allocation8 + $0x138] sm:$0xff]
    %v2090 = vld [vmem:[#allocation8 + $0x140] sm:$0xff]
    %v2091 = vld [vmem:[#allocation8 + $0x148] sm:$0xff]
    %v2092 = vld [vmem:[#allocation8 + $0x150] sm:$0xff]
    %v2093 = vld [vmem:[#allocation8 + $0x158] sm:$0xff]
    %v2094 = vld [vmem:[#allocation8 + $0x160] sm:$0xff]
    %v2095 = vld [vmem:[#allocation8 + $0x168] sm:$0xff]
    %v2096 = vld [vmem:[#allocation8 + $0x170] sm:$0xff]
    %v2097 = vld [vmem:[#allocation8 + $0x178] sm:$0xff]
    %2098 = vmatprep.subr.mxu0 0.0
    %2099 = vmatpush1.msra.mxu0 %v2082
    %2100 = vmatprep.subr.mxu0 0.0
    %2101 = vmatpush1.msra.mxu0 %v2083
    %2102 = vmatprep.subr.mxu0 0.0
    %2103 = vmatpush1.msra.mxu0 %v2084
    %2104 = vmatprep.subr.mxu0 0.0
    %2105 = vmatpush1.msra.mxu0 %v2085
    %2106 = vmatprep.subr.mxu0 0.0
    %2107 = vmatpush1.msra.mxu0 %v2086
    %2108 = vmatprep.subr.mxu0 0.0
    %2109 = vmatpush1.msra.mxu0 %v2087
    %2110 = vmatprep.subr.mxu0 0.0
    %2111 = vmatpush1.msra.mxu0 %v2088
    %2112 = vmatprep.subr.mxu0 0.0
    %2113 = vmatpush1.msra.mxu0 %v2089
    %2114 = vmatprep.subr.mxu0 0.0
    %2115 = vmatpush1.msra.mxu0 %v2090
    %2116 = vmatprep.subr.mxu0 0.0
    %2117 = vmatpush1.msra.mxu0 %v2091
    %2118 = vmatprep.subr.mxu0 0.0
    %2119 = vmatpush1.msra.mxu0 %v2092
    %2120 = vmatprep.subr.mxu0 0.0
    %2121 = vmatpush1.msra.mxu0 %v2093
    %2122 = vmatprep.subr.mxu0 0.0
    %2123 = vmatpush1.msra.mxu0 %v2094
    %2124 = vmatprep.subr.mxu0 0.0
    %2125 = vmatpush1.msra.mxu0 %v2095
    %2126 = vmatprep.subr.mxu0 0.0
    %2127 = vmatpush1.msra.mxu0 %v2096
    %2128 = vmatprep.subr.mxu0 0.0
    %2129 = vmatpush1.msra.mxu0 %v2097
    %2130 = vmatprep.subr.mxu0 0.0
    %2131 = vmatpush1.msra.mxu0 0.0
    %2132 = vmatprep.subr.mxu0 0.0
    %2133 = vmatpush1.msra.mxu0 0.0
    %2134 = vmatprep.subr.mxu0 0.0
    %2135 = vmatpush1.msra.mxu0 0.0
    %2136 = vmatprep.subr.mxu0 0.0
    %2137 = vmatpush1.msra.mxu0 0.0
    %2138 = vmatprep.subr.mxu0 0.0
    %2139 = vmatpush1.msra.mxu0 0.0
    %2140 = vmatprep.subr.mxu0 0.0
    %2141 = vmatpush1.msra.mxu0 0.0
    %2142 = vmatprep.subr.mxu0 0.0
    %2143 = vmatpush1.msra.mxu0 0.0
    %2144 = vmatprep.subr.mxu0 0.0
    %2145 = vmatpush1.msra.mxu0 0.0
    %2146 = vmatprep.subr.mxu0 0.0
    %2147 = vmatpush1.msra.mxu0 0.0
    %2148 = vmatprep.subr.mxu0 0.0
    %2149 = vmatpush1.msra.mxu0 0.0
    %2150 = vmatprep.subr.mxu0 0.0
    %2151 = vmatpush1.msra.mxu0 0.0
    %2152 = vmatprep.subr.mxu0 0.0
    %2153 = vmatpush1.msra.mxu0 0.0
    %2154 = vmatprep.subr.mxu0 0.0
    %2155 = vmatpush1.msra.mxu0 0.0
    %2156 = vmatprep.subr.mxu0 0.0
    %2157 = vmatpush1.msra.mxu0 0.0
    %2158 = vmatprep.subr.mxu0 0.0
    %2159 = vmatpush1.msra.mxu0 0.0
    %2160 = vmatprep.subr.mxu0 0.0
    %2161 = vmatpush1.msra.mxu0 0.0
    %2162 = vmatprep.mubr.f32.mxu0 0.0
    %2163 = vmatmul.mubr.f32.gmra.mrb[0].mxu0 %v1877
    %v2164 = vpop.f32.mrb[0].mxu0
    %v2165 = vadd.f32 0.0, %v2164
    %v2166 = vpop.f32.mrb[0].mxu0
    %2167 = vdwg.mxu0
    %v2168 = vadd.f32 %v2079, %v2165
    %v2169 = vld [vmem:[#allocation8 + $0x180] sm:$0xff]
    %v2170 = vld [vmem:[#allocation8 + $0x188] sm:$0xff]
    %v2171 = vld [vmem:[#allocation8 + $0x190] sm:$0xff]
    %v2172 = vld [vmem:[#allocation8 + $0x198] sm:$0xff]
    %v2173 = vld [vmem:[#allocation8 + $0x1a0] sm:$0xff]
    %v2174 = vld [vmem:[#allocation8 + $0x1a8] sm:$0xff]
    %v2175 = vld [vmem:[#allocation8 + $0x1b0] sm:$0xff]
    %v2176 = vld [vmem:[#allocation8 + $0x1b8] sm:$0xff]
    %v2177 = vld [vmem:[#allocation8 + $0x1c0] sm:$0xff]
    %v2178 = vld [vmem:[#allocation8 + $0x1c8] sm:$0xff]
    %v2179 = vld [vmem:[#allocation8 + $0x1d0] sm:$0xff]
    %v2180 = vld [vmem:[#allocation8 + $0x1d8] sm:$0xff]
    %v2181 = vld [vmem:[#allocation8 + $0x1e0] sm:$0xff]
    %v2182 = vld [vmem:[#allocation8 + $0x1e8] sm:$0xff]
    %v2183 = vld [vmem:[#allocation8 + $0x1f0] sm:$0xff]
    %v2184 = vld [vmem:[#allocation8 + $0x1f8] sm:$0xff]
    %2185 = vmatprep.subr.mxu0 0.0
    %2186 = vmatpush1.msra.mxu0 %v2169
    %2187 = vmatprep.subr.mxu0 0.0
    %2188 = vmatpush1.msra.mxu0 %v2170
    %2189 = vmatprep.subr.mxu0 0.0
    %2190 = vmatpush1.msra.mxu0 %v2171
    %2191 = vmatprep.subr.mxu0 0.0
    %2192 = vmatpush1.msra.mxu0 %v2172
    %2193 = vmatprep.subr.mxu0 0.0
    %2194 = vmatpush1.msra.mxu0 %v2173
    %2195 = vmatprep.subr.mxu0 0.0
    %2196 = vmatpush1.msra.mxu0 %v2174
    %2197 = vmatprep.subr.mxu0 0.0
    %2198 = vmatpush1.msra.mxu0 %v2175
    %2199 = vmatprep.subr.mxu0 0.0
    %2200 = vmatpush1.msra.mxu0 %v2176
    %2201 = vmatprep.subr.mxu0 0.0
    %2202 = vmatpush1.msra.mxu0 %v2177
    %2203 = vmatprep.subr.mxu0 0.0
    %2204 = vmatpush1.msra.mxu0 %v2178
    %2205 = vmatprep.subr.mxu0 0.0
    %2206 = vmatpush1.msra.mxu0 %v2179
    %2207 = vmatprep.subr.mxu0 0.0
    %2208 = vmatpush1.msra.mxu0 %v2180
    %2209 = vmatprep.subr.mxu0 0.0
    %2210 = vmatpush1.msra.mxu0 %v2181
    %2211 = vmatprep.subr.mxu0 0.0
    %2212 = vmatpush1.msra.mxu0 %v2182
    %2213 = vmatprep.subr.mxu0 0.0
    %2214 = vmatpush1.msra.mxu0 %v2183
    %2215 = vmatprep.subr.mxu0 0.0
    %2216 = vmatpush1.msra.mxu0 %v2184
    %2217 = vmatprep.subr.mxu0 0.0
    %2218 = vmatpush1.msra.mxu0 0.0
    %2219 = vmatprep.subr.mxu0 0.0
    %2220 = vmatpush1.msra.mxu0 0.0
    %2221 = vmatprep.subr.mxu0 0.0
    %2222 = vmatpush1.msra.mxu0 0.0
    %2223 = vmatprep.subr.mxu0 0.0
    %2224 = vmatpush1.msra.mxu0 0.0
    %2225 = vmatprep.subr.mxu0 0.0
    %2226 = vmatpush1.msra.mxu0 0.0
    %2227 = vmatprep.subr.mxu0 0.0
    %2228 = vmatpush1.msra.mxu0 0.0
    %2229 = vmatprep.subr.mxu0 0.0
    %2230 = vmatpush1.msra.mxu0 0.0
    %2231 = vmatprep.subr.mxu0 0.0
    %2232 = vmatpush1.msra.mxu0 0.0
    %2233 = vmatprep.subr.mxu0 0.0
    %2234 = vmatpush1.msra.mxu0 0.0
    %2235 = vmatprep.subr.mxu0 0.0
    %2236 = vmatpush1.msra.mxu0 0.0
    %2237 = vmatprep.subr.mxu0 0.0
    %2238 = vmatpush1.msra.mxu0 0.0
    %2239 = vmatprep.subr.mxu0 0.0
    %2240 = vmatpush1.msra.mxu0 0.0
    %2241 = vmatprep.subr.mxu0 0.0
    %2242 = vmatpush1.msra.mxu0 0.0
    %2243 = vmatprep.subr.mxu0 0.0
    %2244 = vmatpush1.msra.mxu0 0.0
    %2245 = vmatprep.subr.mxu0 0.0
    %2246 = vmatpush1.msra.mxu0 0.0
    %2247 = vmatprep.subr.mxu0 0.0
    %2248 = vmatpush1.msra.mxu0 0.0
    %2249 = vmatprep.mubr.f32.mxu0 0.0
    %2250 = vmatmul.mubr.f32.gmra.mrb[0].mxu0 %v1882
    %v2251 = vpop.f32.mrb[0].mxu0
    %v2252 = vadd.f32 0.0, %v2251
    %v2253 = vpop.f32.mrb[0].mxu0
    %2254 = vdwg.mxu0
    %v2255 = vadd.f32 %v2168, %v2252
    %v2256 = vld [vmem:[#allocation8 + $0x200] sm:$0xff]
    %v2257 = vld [vmem:[#allocation8 + $0x208] sm:$0xff]
    %v2258 = vld [vmem:[#allocation8 + $0x210] sm:$0xff]
    %v2259 = vld [vmem:[#allocation8 + $0x218] sm:$0xff]
    %v2260 = vld [vmem:[#allocation8 + $0x220] sm:$0xff]
    %v2261 = vld [vmem:[#allocation8 + $0x228] sm:$0xff]
    %v2262 = vld [vmem:[#allocation8 + $0x230] sm:$0xff]
    %v2263 = vld [vmem:[#allocation8 + $0x238] sm:$0xff]
    %v2264 = vld [vmem:[#allocation8 + $0x240] sm:$0xff]
    %v2265 = vld [vmem:[#allocation8 + $0x248] sm:$0xff]
    %v2266 = vld [vmem:[#allocation8 + $0x250] sm:$0xff]
    %v2267 = vld [vmem:[#allocation8 + $0x258] sm:$0xff]
    %v2268 = vld [vmem:[#allocation8 + $0x260] sm:$0xff]
    %v2269 = vld [vmem:[#allocation8 + $0x268] sm:$0xff]
    %v2270 = vld [vmem:[#allocation8 + $0x270] sm:$0xff]
    %v2271 = vld [vmem:[#allocation8 + $0x278] sm:$0xff]
    %2272 = vmatprep.subr.mxu0 0.0
    %2273 = vmatpush1.msra.mxu0 %v2256
    %2274 = vmatprep.subr.mxu0 0.0
    %2275 = vmatpush1.msra.mxu0 %v2257
    %2276 = vmatprep.subr.mxu0 0.0
    %2277 = vmatpush1.msra.mxu0 %v2258
    %2278 = vmatprep.subr.mxu0 0.0
    %2279 = vmatpush1.msra.mxu0 %v2259
    %2280 = vmatprep.subr.mxu0 0.0
    %2281 = vmatpush1.msra.mxu0 %v2260
    %2282 = vmatprep.subr.mxu0 0.0
    %2283 = vmatpush1.msra.mxu0 %v2261
    %2284 = vmatprep.subr.mxu0 0.0
    %2285 = vmatpush1.msra.mxu0 %v2262
    %2286 = vmatprep.subr.mxu0 0.0
    %2287 = vmatpush1.msra.mxu0 %v2263
    %2288 = vmatprep.subr.mxu0 0.0
    %2289 = vmatpush1.msra.mxu0 %v2264
    %2290 = vmatprep.subr.mxu0 0.0
    %2291 = vmatpush1.msra.mxu0 %v2265
    %2292 = vmatprep.subr.mxu0 0.0
    %2293 = vmatpush1.msra.mxu0 %v2266
    %2294 = vmatprep.subr.mxu0 0.0
    %2295 = vmatpush1.msra.mxu0 %v2267
    %2296 = vmatprep.subr.mxu0 0.0
    %2297 = vmatpush1.msra.mxu0 %v2268
    %2298 = vmatprep.subr.mxu0 0.0
    %2299 = vmatpush1.msra.mxu0 %v2269
    %2300 = vmatprep.subr.mxu0 0.0
    %2301 = vmatpush1.msra.mxu0 %v2270
    %2302 = vmatprep.subr.mxu0 0.0
    %2303 = vmatpush1.msra.mxu0 %v2271
    %2304 = vmatprep.subr.mxu0 0.0
    %2305 = vmatpush1.msra.mxu0 0.0
    %2306 = vmatprep.subr.mxu0 0.0
    %2307 = vmatpush1.msra.mxu0 0.0
    %2308 = vmatprep.subr.mxu0 0.0
    %2309 = vmatpush1.msra.mxu0 0.0
    %2310 = vmatprep.subr.mxu0 0.0
    %2311 = vmatpush1.msra.mxu0 0.0
    %2312 = vmatprep.subr.mxu0 0.0
    %2313 = vmatpush1.msra.mxu0 0.0
    %2314 = vmatprep.subr.mxu0 0.0
    %2315 = vmatpush1.msra.mxu0 0.0
    %2316 = vmatprep.subr.mxu0 0.0
    %2317 = vmatpush1.msra.mxu0 0.0
    %2318 = vmatprep.subr.mxu0 0.0
    %2319 = vmatpush1.msra.mxu0 0.0
    %2320 = vmatprep.subr.mxu0 0.0
    %2321 = vmatpush1.msra.mxu0 0.0
    %2322 = vmatprep.subr.mxu0 0.0
    %2323 = vmatpush1.msra.mxu0 0.0
    %2324 = vmatprep.subr.mxu0 0.0
    %2325 = vmatpush1.msra.mxu0 0.0
    %2326 = vmatprep.subr.mxu0 0.0
    %2327 = vmatpush1.msra.mxu0 0.0
    %2328 = vmatprep.subr.mxu0 0.0
    %2329 = vmatpush1.msra.mxu0 0.0
    %2330 = vmatprep.subr.mxu0 0.0
    %2331 = vmatpush1.msra.mxu0 0.0
    %2332 = vmatprep.subr.mxu0 0.0
    %2333 = vmatpush1.msra.mxu0 0.0
    %2334 = vmatprep.subr.mxu0 0.0
    %2335 = vmatpush1.msra.mxu0 0.0
    %2336 = vmatprep.mubr.f32.mxu0 0.0
    %2337 = vmatmul.mubr.f32.gmra.mrb[0].mxu0 %v1887
    %v2338 = vpop.f32.mrb[0].mxu0
    %v2339 = vadd.f32 0.0, %v2338
    %v2340 = vpop.f32.mrb[0].mxu0
    %2341 = vdwg.mxu0
    %v2342 = vadd.f32 %v2255, %v2339
    %v2343 = vld [vmem:[#allocation8 + $0x280] sm:$0xff]
    %v2344 = vld [vmem:[#allocation8 + $0x288] sm:$0xff]
    %v2345 = vld [vmem:[#allocation8 + $0x290] sm:$0xff]
    %v2346 = vld [vmem:[#allocation8 + $0x298] sm:$0xff]
    %v2347 = vld [vmem:[#allocation8 + $0x2a0] sm:$0xff]
    %v2348 = vld [vmem:[#allocation8 + $0x2a8] sm:$0xff]
    %v2349 = vld [vmem:[#allocation8 + $0x2b0] sm:$0xff]
    %v2350 = vld [vmem:[#allocation8 + $0x2b8] sm:$0xff]
    %v2351 = vld [vmem:[#allocation8 + $0x2c0] sm:$0xff]
    %v2352 = vld [vmem:[#allocation8 + $0x2c8] sm:$0xff]
    %v2353 = vld [vmem:[#allocation8 + $0x2d0] sm:$0xff]
    %v2354 = vld [vmem:[#allocation8 + $0x2d8] sm:$0xff]
    %v2355 = vld [vmem:[#allocation8 + $0x2e0] sm:$0xff]
    %v2356 = vld [vmem:[#allocation8 + $0x2e8] sm:$0xff]
    %v2357 = vld [vmem:[#allocation8 + $0x2f0] sm:$0xff]
    %v2358 = vld [vmem:[#allocation8 + $0x2f8] sm:$0xff]
    %2359 = vmatprep.subr.mxu0 0.0
    %2360 = vmatpush1.msra.mxu0 %v2343
    %2361 = vmatprep.subr.mxu0 0.0
    %2362 = vmatpush1.msra.mxu0 %v2344
    %2363 = vmatprep.subr.mxu0 0.0
    %2364 = vmatpush1.msra.mxu0 %v2345
    %2365 = vmatprep.subr.mxu0 0.0
    %2366 = vmatpush1.msra.mxu0 %v2346
    %2367 = vmatprep.subr.mxu0 0.0
    %2368 = vmatpush1.msra.mxu0 %v2347
    %2369 = vmatprep.subr.mxu0 0.0
    %2370 = vmatpush1.msra.mxu0 %v2348
    %2371 = vmatprep.subr.mxu0 0.0
    %2372 = vmatpush1.msra.mxu0 %v2349
    %2373 = vmatprep.subr.mxu0 0.0
    %2374 = vmatpush1.msra.mxu0 %v2350
    %2375 = vmatprep.subr.mxu0 0.0
    %2376 = vmatpush1.msra.mxu0 %v2351
    %2377 = vmatprep.subr.mxu0 0.0
    %2378 = vmatpush1.msra.mxu0 %v2352
    %2379 = vmatprep.subr.mxu0 0.0
    %2380 = vmatpush1.msra.mxu0 %v2353
    %2381 = vmatprep.subr.mxu0 0.0
    %2382 = vmatpush1.msra.mxu0 %v2354
    %2383 = vmatprep.subr.mxu0 0.0
    %2384 = vmatpush1.msra.mxu0 %v2355
    %2385 = vmatprep.subr.mxu0 0.0
    %2386 = vmatpush1.msra.mxu0 %v2356
    %2387 = vmatprep.subr.mxu0 0.0
    %2388 = vmatpush1.msra.mxu0 %v2357
    %2389 = vmatprep.subr.mxu0 0.0
    %2390 = vmatpush1.msra.mxu0 %v2358
    %2391 = vmatprep.subr.mxu0 0.0
    %2392 = vmatpush1.msra.mxu0 0.0
    %2393 = vmatprep.subr.mxu0 0.0
    %2394 = vmatpush1.msra.mxu0 0.0
    %2395 = vmatprep.subr.mxu0 0.0
    %2396 = vmatpush1.msra.mxu0 0.0
    %2397 = vmatprep.subr.mxu0 0.0
    %2398 = vmatpush1.msra.mxu0 0.0
    %2399 = vmatprep.subr.mxu0 0.0
    %2400 = vmatpush1.msra.mxu0 0.0
    %2401 = vmatprep.subr.mxu0 0.0
    %2402 = vmatpush1.msra.mxu0 0.0
    %2403 = vmatprep.subr.mxu0 0.0
    %2404 = vmatpush1.msra.mxu0 0.0
    %2405 = vmatprep.subr.mxu0 0.0
    %2406 = vmatpush1.msra.mxu0 0.0
    %2407 = vmatprep.subr.mxu0 0.0
    %2408 = vmatpush1.msra.mxu0 0.0
    %2409 = vmatprep.subr.mxu0 0.0
    %2410 = vmatpush1.msra.mxu0 0.0
    %2411 = vmatprep.subr.mxu0 0.0
    %2412 = vmatpush1.msra.mxu0 0.0
    %2413 = vmatprep.subr.mxu0 0.0
    %2414 = vmatpush1.msra.mxu0 0.0
    %2415 = vmatprep.subr.mxu0 0.0
    %2416 = vmatpush1.msra.mxu0 0.0
    %2417 = vmatprep.subr.mxu0 0.0
    %2418 = vmatpush1.msra.mxu0 0.0
    %2419 = vmatprep.subr.mxu0 0.0
    %2420 = vmatpush1.msra.mxu0 0.0
    %2421 = vmatprep.subr.mxu0 0.0
    %2422 = vmatpush1.msra.mxu0 0.0
    %2423 = vmatprep.mubr.f32.mxu0 0.0
    %2424 = vmatmul.mubr.f32.gmra.mrb[0].mxu0 %v1892
    %v2425 = vpop.f32.mrb[0].mxu0
    %v2426 = vadd.f32 0.0, %v2425
    %v2427 = vpop.f32.mrb[0].mxu0
    %2428 = vdwg.mxu0
    %v2429 = vadd.f32 %v2342, %v2426
    %v2430 = vld [vmem:[#allocation8 + $0x300] sm:$0xff]
    %v2431 = vld [vmem:[#allocation8 + $0x308] sm:$0xff]
    %v2432 = vld [vmem:[#allocation8 + $0x310] sm:$0xff]
    %v2433 = vld [vmem:[#allocation8 + $0x318] sm:$0xff]
    %v2434 = vld [vmem:[#allocation8 + $0x320] sm:$0xff]
    %v2435 = vld [vmem:[#allocation8 + $0x328] sm:$0xff]
    %v2436 = vld [vmem:[#allocation8 + $0x330] sm:$0xff]
    %v2437 = vld [vmem:[#allocation8 + $0x338] sm:$0xff]
    %v2438 = vld [vmem:[#allocation8 + $0x340] sm:$0xff]
    %v2439 = vld [vmem:[#allocation8 + $0x348] sm:$0xff]
    %v2440 = vld [vmem:[#allocation8 + $0x350] sm:$0xff]
    %v2441 = vld [vmem:[#allocation8 + $0x358] sm:$0xff]
    %v2442 = vld [vmem:[#allocation8 + $0x360] sm:$0xff]
    %v2443 = vld [vmem:[#allocation8 + $0x368] sm:$0xff]
    %v2444 = vld [vmem:[#allocation8 + $0x370] sm:$0xff]
    %v2445 = vld [vmem:[#allocation8 + $0x378] sm:$0xff]
    %2446 = vmatprep.subr.mxu0 0.0
    %2447 = vmatpush1.msra.mxu0 %v2430
    %2448 = vmatprep.subr.mxu0 0.0
    %2449 = vmatpush1.msra.mxu0 %v2431
    %2450 = vmatprep.subr.mxu0 0.0
    %2451 = vmatpush1.msra.mxu0 %v2432
    %2452 = vmatprep.subr.mxu0 0.0
    %2453 = vmatpush1.msra.mxu0 %v2433
    %2454 = vmatprep.subr.mxu0 0.0
    %2455 = vmatpush1.msra.mxu0 %v2434
    %2456 = vmatprep.subr.mxu0 0.0
    %2457 = vmatpush1.msra.mxu0 %v2435
    %2458 = vmatprep.subr.mxu0 0.0
    %2459 = vmatpush1.msra.mxu0 %v2436
    %2460 = vmatprep.subr.mxu0 0.0
    %2461 = vmatpush1.msra.mxu0 %v2437
    %2462 = vmatprep.subr.mxu0 0.0
    %2463 = vmatpush1.msra.mxu0 %v2438
    %2464 = vmatprep.subr.mxu0 0.0
    %2465 = vmatpush1.msra.mxu0 %v2439
    %2466 = vmatprep.subr.mxu0 0.0
    %2467 = vmatpush1.msra.mxu0 %v2440
    %2468 = vmatprep.subr.mxu0 0.0
    %2469 = vmatpush1.msra.mxu0 %v2441
    %2470 = vmatprep.subr.mxu0 0.0
    %2471 = vmatpush1.msra.mxu0 %v2442
    %2472 = vmatprep.subr.mxu0 0.0
    %2473 = vmatpush1.msra.mxu0 %v2443
    %2474 = vmatprep.subr.mxu0 0.0
    %2475 = vmatpush1.msra.mxu0 %v2444
    %2476 = vmatprep.subr.mxu0 0.0
    %2477 = vmatpush1.msra.mxu0 %v2445
    %2478 = vmatprep.subr.mxu0 0.0
    %2479 = vmatpush1.msra.mxu0 0.0
    %2480 = vmatprep.subr.mxu0 0.0
    %2481 = vmatpush1.msra.mxu0 0.0
    %2482 = vmatprep.subr.mxu0 0.0
    %2483 = vmatpush1.msra.mxu0 0.0
    %2484 = vmatprep.subr.mxu0 0.0
    %2485 = vmatpush1.msra.mxu0 0.0
    %2486 = vmatprep.subr.mxu0 0.0
    %2487 = vmatpush1.msra.mxu0 0.0
    %2488 = vmatprep.subr.mxu0 0.0
    %2489 = vmatpush1.msra.mxu0 0.0
    %2490 = vmatprep.subr.mxu0 0.0
    %2491 = vmatpush1.msra.mxu0 0.0
    %2492 = vmatprep.subr.mxu0 0.0
    %2493 = vmatpush1.msra.mxu0 0.0
    %2494 = vmatprep.subr.mxu0 0.0
    %2495 = vmatpush1.msra.mxu0 0.0
    %2496 = vmatprep.subr.mxu0 0.0
    %2497 = vmatpush1.msra.mxu0 0.0
    %2498 = vmatprep.subr.mxu0 0.0
    %2499 = vmatpush1.msra.mxu0 0.0
    %2500 = vmatprep.subr.mxu0 0.0
    %2501 = vmatpush1.msra.mxu0 0.0
    %2502 = vmatprep.subr.mxu0 0.0
    %2503 = vmatpush1.msra.mxu0 0.0
    %2504 = vmatprep.subr.mxu0 0.0
    %2505 = vmatpush1.msra.mxu0 0.0
    %2506 = vmatprep.subr.mxu0 0.0
    %2507 = vmatpush1.msra.mxu0 0.0
    %2508 = vmatprep.subr.mxu0 0.0
    %2509 = vmatpush1.msra.mxu0 0.0
    %2510 = vmatprep.mubr.f32.mxu0 0.0
    %2511 = vmatmul.mubr.f32.gmra.mrb[0].mxu0 %v1897
    %v2512 = vpop.f32.mrb[0].mxu0
    %v2513 = vadd.f32 0.0, %v2512
    %v2514 = vpop.f32.mrb[0].mxu0
    %2515 = vdwg.mxu0
    %v2516 = vadd.f32 %v2429, %v2513
    %v2517 = vld [vmem:[#allocation8 + $0x380] sm:$0xff]
    %v2518 = vld [vmem:[#allocation8 + $0x388] sm:$0xff]
    %v2519 = vld [vmem:[#allocation8 + $0x390] sm:$0xff]
    %v2520 = vld [vmem:[#allocation8 + $0x398] sm:$0xff]
    %v2521 = vld [vmem:[#allocation8 + $0x3a0] sm:$0xff]
    %v2522 = vld [vmem:[#allocation8 + $0x3a8] sm:$0xff]
    %v2523 = vld [vmem:[#allocation8 + $0x3b0] sm:$0xff]
    %v2524 = vld [vmem:[#allocation8 + $0x3b8] sm:$0xff]
    %v2525 = vld [vmem:[#allocation8 + $0x3c0] sm:$0xff]
    %v2526 = vld [vmem:[#allocation8 + $0x3c8] sm:$0xff]
    %v2527 = vld [vmem:[#allocation8 + $0x3d0] sm:$0xff]
    %v2528 = vld [vmem:[#allocation8 + $0x3d8] sm:$0xff]
    %v2529 = vld [vmem:[#allocation8 + $0x3e0] sm:$0xff]
    %v2530 = vld [vmem:[#allocation8 + $0x3e8] sm:$0xff]
    %v2531 = vld [vmem:[#allocation8 + $0x3f0] sm:$0xff]
    %v2532 = vld [vmem:[#allocation8 + $0x3f8] sm:$0xff]
    %2533 = vmatprep.subr.mxu0 0.0
    %2534 = vmatpush1.msra.mxu0 %v2517
    %2535 = vmatprep.subr.mxu0 0.0
    %2536 = vmatpush1.msra.mxu0 %v2518
    %2537 = vmatprep.subr.mxu0 0.0
    %2538 = vmatpush1.msra.mxu0 %v2519
    %2539 = vmatprep.subr.mxu0 0.0
    %2540 = vmatpush1.msra.mxu0 %v2520
    %2541 = vmatprep.subr.mxu0 0.0
    %2542 = vmatpush1.msra.mxu0 %v2521
    %2543 = vmatprep.subr.mxu0 0.0
    %2544 = vmatpush1.msra.mxu0 %v2522
    %2545 = vmatprep.subr.mxu0 0.0
    %2546 = vmatpush1.msra.mxu0 %v2523
    %2547 = vmatprep.subr.mxu0 0.0
    %2548 = vmatpush1.msra.mxu0 %v2524
    %2549 = vmatprep.subr.mxu0 0.0
    %2550 = vmatpush1.msra.mxu0 %v2525
    %2551 = vmatprep.subr.mxu0 0.0
    %2552 = vmatpush1.msra.mxu0 %v2526
    %2553 = vmatprep.subr.mxu0 0.0
    %2554 = vmatpush1.msra.mxu0 %v2527
    %2555 = vmatprep.subr.mxu0 0.0
    %2556 = vmatpush1.msra.mxu0 %v2528
    %2557 = vmatprep.subr.mxu0 0.0
    %2558 = vmatpush1.msra.mxu0 %v2529
    %2559 = vmatprep.subr.mxu0 0.0
    %2560 = vmatpush1.msra.mxu0 %v2530
    %2561 = vmatprep.subr.mxu0 0.0
    %2562 = vmatpush1.msra.mxu0 %v2531
    %2563 = vmatprep.subr.mxu0 0.0
    %2564 = vmatpush1.msra.mxu0 %v2532
    %2565 = vmatprep.subr.mxu0 0.0
    %2566 = vmatpush1.msra.mxu0 0.0
    %2567 = vmatprep.subr.mxu0 0.0
    %2568 = vmatpush1.msra.mxu0 0.0
    %2569 = vmatprep.subr.mxu0 0.0
    %2570 = vmatpush1.msra.mxu0 0.0
    %2571 = vmatprep.subr.mxu0 0.0
    %2572 = vmatpush1.msra.mxu0 0.0
    %2573 = vmatprep.subr.mxu0 0.0
    %2574 = vmatpush1.msra.mxu0 0.0
    %2575 = vmatprep.subr.mxu0 0.0
    %2576 = vmatpush1.msra.mxu0 0.0
    %2577 = vmatprep.subr.mxu0 0.0
    %2578 = vmatpush1.msra.mxu0 0.0
    %2579 = vmatprep.subr.mxu0 0.0
    %2580 = vmatpush1.msra.mxu0 0.0
    %2581 = vmatprep.subr.mxu0 0.0
    %2582 = vmatpush1.msra.mxu0 0.0
    %2583 = vmatprep.subr.mxu0 0.0
    %2584 = vmatpush1.msra.mxu0 0.0
    %2585 = vmatprep.subr.mxu0 0.0
    %2586 = vmatpush1.msra.mxu0 0.0
    %2587 = vmatprep.subr.mxu0 0.0
    %2588 = vmatpush1.msra.mxu0 0.0
    %2589 = vmatprep.subr.mxu0 0.0
    %2590 = vmatpush1.msra.mxu0 0.0
    %2591 = vmatprep.subr.mxu0 0.0
    %2592 = vmatpush1.msra.mxu0 0.0
    %2593 = vmatprep.subr.mxu0 0.0
    %2594 = vmatpush1.msra.mxu0 0.0
    %2595 = vmatprep.subr.mxu0 0.0
    %2596 = vmatpush1.msra.mxu0 0.0
    %2597 = vmatprep.mubr.f32.mxu0 0.0
    %2598 = vmatmul.mubr.f32.gmra.mrb[0].mxu0 %v1902
    %v2599 = vpop.f32.mrb[0].mxu0
    %v2600 = vadd.f32 0.0, %v2599
    %v2601 = vpop.f32.mrb[0].mxu0
    %2602 = vdwg.mxu0
    %v2603 = vadd.f32 %v2516, %v2600
    %v2604 = vld [vmem:[#allocation8 + $0x400] sm:$0xff]
    %v2605 = vld [vmem:[#allocation8 + $0x408] sm:$0xff]
    %v2606 = vld [vmem:[#allocation8 + $0x410] sm:$0xff]
    %v2607 = vld [vmem:[#allocation8 + $0x418] sm:$0xff]
    %v2608 = vld [vmem:[#allocation8 + $0x420] sm:$0xff]
    %v2609 = vld [vmem:[#allocation8 + $0x428] sm:$0xff]
    %v2610 = vld [vmem:[#allocation8 + $0x430] sm:$0xff]
    %v2611 = vld [vmem:[#allocation8 + $0x438] sm:$0xff]
    %v2612 = vld [vmem:[#allocation8 + $0x440] sm:$0xff]
    %v2613 = vld [vmem:[#allocation8 + $0x448] sm:$0xff]
    %v2614 = vld [vmem:[#allocation8 + $0x450] sm:$0xff]
    %v2615 = vld [vmem:[#allocation8 + $0x458] sm:$0xff]
    %v2616 = vld [vmem:[#allocation8 + $0x460] sm:$0xff]
    %v2617 = vld [vmem:[#allocation8 + $0x468] sm:$0xff]
    %v2618 = vld [vmem:[#allocation8 + $0x470] sm:$0xff]
    %v2619 = vld [vmem:[#allocation8 + $0x478] sm:$0xff]
    %2620 = vmatprep.subr.mxu0 0.0
    %2621 = vmatpush1.msra.mxu0 %v2604
    %2622 = vmatprep.subr.mxu0 0.0
    %2623 = vmatpush1.msra.mxu0 %v2605
    %2624 = vmatprep.subr.mxu0 0.0
    %2625 = vmatpush1.msra.mxu0 %v2606
    %2626 = vmatprep.subr.mxu0 0.0
    %2627 = vmatpush1.msra.mxu0 %v2607
    %2628 = vmatprep.subr.mxu0 0.0
    %2629 = vmatpush1.msra.mxu0 %v2608
    %2630 = vmatprep.subr.mxu0 0.0
    %2631 = vmatpush1.msra.mxu0 %v2609
    %2632 = vmatprep.subr.mxu0 0.0
    %2633 = vmatpush1.msra.mxu0 %v2610
    %2634 = vmatprep.subr.mxu0 0.0
    %2635 = vmatpush1.msra.mxu0 %v2611
    %2636 = vmatprep.subr.mxu0 0.0
    %2637 = vmatpush1.msra.mxu0 %v2612
    %2638 = vmatprep.subr.mxu0 0.0
    %2639 = vmatpush1.msra.mxu0 %v2613
    %2640 = vmatprep.subr.mxu0 0.0
    %2641 = vmatpush1.msra.mxu0 %v2614
    %2642 = vmatprep.subr.mxu0 0.0
    %2643 = vmatpush1.msra.mxu0 %v2615
    %2644 = vmatprep.subr.mxu0 0.0
    %2645 = vmatpush1.msra.mxu0 %v2616
    %2646 = vmatprep.subr.mxu0 0.0
    %2647 = vmatpush1.msra.mxu0 %v2617
    %2648 = vmatprep.subr.mxu0 0.0
    %2649 = vmatpush1.msra.mxu0 %v2618
    %2650 = vmatprep.subr.mxu0 0.0
    %2651 = vmatpush1.msra.mxu0 %v2619
    %2652 = vmatprep.subr.mxu0 0.0
    %2653 = vmatpush1.msra.mxu0 0.0
    %2654 = vmatprep.subr.mxu0 0.0
    %2655 = vmatpush1.msra.mxu0 0.0
    %2656 = vmatprep.subr.mxu0 0.0
    %2657 = vmatpush1.msra.mxu0 0.0
    %2658 = vmatprep.subr.mxu0 0.0
    %2659 = vmatpush1.msra.mxu0 0.0
    %2660 = vmatprep.subr.mxu0 0.0
    %2661 = vmatpush1.msra.mxu0 0.0
    %2662 = vmatprep.subr.mxu0 0.0
    %2663 = vmatpush1.msra.mxu0 0.0
    %2664 = vmatprep.subr.mxu0 0.0
    %2665 = vmatpush1.msra.mxu0 0.0
    %2666 = vmatprep.subr.mxu0 0.0
    %2667 = vmatpush1.msra.mxu0 0.0
    %2668 = vmatprep.subr.mxu0 0.0
    %2669 = vmatpush1.msra.mxu0 0.0
    %2670 = vmatprep.subr.mxu0 0.0
    %2671 = vmatpush1.msra.mxu0 0.0
    %2672 = vmatprep.subr.mxu0 0.0
    %2673 = vmatpush1.msra.mxu0 0.0
    %2674 = vmatprep.subr.mxu0 0.0
    %2675 = vmatpush1.msra.mxu0 0.0
    %2676 = vmatprep.subr.mxu0 0.0
    %2677 = vmatpush1.msra.mxu0 0.0
    %2678 = vmatprep.subr.mxu0 0.0
    %2679 = vmatpush1.msra.mxu0 0.0
    %2680 = vmatprep.subr.mxu0 0.0
    %2681 = vmatpush1.msra.mxu0 0.0
    %2682 = vmatprep.subr.mxu0 0.0
    %2683 = vmatpush1.msra.mxu0 0.0
    %2684 = vmatprep.mubr.f32.mxu0 0.0
    %2685 = vmatmul.mubr.f32.gmra.mrb[0].mxu0 %v1907
    %v2686 = vpop.f32.mrb[0].mxu0
    %v2687 = vadd.f32 0.0, %v2686
    %v2688 = vpop.f32.mrb[0].mxu0
    %2689 = vdwg.mxu0
    %v2690 = vadd.f32 %v2603, %v2687
    %v2691 = vld [vmem:[%s9] sm:$0x1]
    %v2693 = vlaneseq
    %v2694 = vshrl.u32 %v2693, 7
    %v2695 = vsub.s32 0, %v2694
    %v2696 = vrot.slane %v2691, %v2695
    %v2698 = vadd.f32 %v2690, %v2696
    %v2699 = vmax.f32 %v2698, 0.0
    %vm2700 = vcmp.gt.f32.partialorder %v2698, 0.0
    %v2701 = vmin.f32 %v2698, 0.0
    %v2702 = vmul.f32 %v2701, 1.442695
    %v2703 = vpow.pop %v2702
    %v2704 = vsub.f32 %v2703, 1.0
    %v2705 = vsel %vm2700, %v2698, %v2704
    %v2706 = vsel %vm1758, %v2699, %v2705
    %v2707 = vld [vmem:[%s3] sm:$0xff]
    %v2708 = vld [vmem:[%s3 + $0x8] sm:$0xff]
    %v2709 = vld [vmem:[%s3 + $0x10] sm:$0xff]
    %v2710 = vld [vmem:[%s3 + $0x18] sm:$0xff]
    %v2711 = vld [vmem:[%s3 + $0x20] sm:$0xff]
    %v2712 = vld [vmem:[%s3 + $0x28] sm:$0xff]
    %v2713 = vld [vmem:[%s3 + $0x30] sm:$0xff]
    %v2714 = vld [vmem:[%s3 + $0x38] sm:$0xff]
    %v2715 = vld [vmem:[%s3 + $0x40] sm:$0xff]
    %vm2716 = vcmask 64512
    %v2718 = vsel %vm2716, %v2707, 0
    %v2721 = vsel %vm2716, %v2708, 0
    %v2724 = vsel %vm2716, %v2709, 0
    %v2727 = vsel %vm2716, %v2710, 0
    %v2730 = vsel %vm2716, %v2711, 0
    %v2733 = vsel %vm2716, %v2712, 0
    %v2736 = vsel %vm2716, %v2713, 0
    %v2739 = vsel %vm2716, %v2714, 0
    %v2742 = vsel %vm2716, %v2715, 0
    %2744 = vmatprep.subr.mxu0 0.0
    %2745 = vmatpush1.msra.mxu0 %v2706
    %2746 = vmatprep.subr.mxu0 0.0
    %2747 = vmatpush1.msra.mxu0 0.0
    %2748 = vmatprep.subr.mxu0 0.0
    %2749 = vmatpush1.msra.mxu0 0.0
    %2750 = vmatprep.subr.mxu0 0.0
    %2751 = vmatpush1.msra.mxu0 0.0
    %2752 = vmatprep.subr.mxu0 0.0
    %2753 = vmatpush1.msra.mxu0 0.0
    %2754 = vmatprep.subr.mxu0 0.0
    %2755 = vmatpush1.msra.mxu0 0.0
    %2756 = vmatprep.subr.mxu0 0.0
    %2757 = vmatpush1.msra.mxu0 0.0
    %2758 = vmatprep.subr.mxu0 0.0
    %2759 = vmatpush1.msra.mxu0 0.0
    %2760 = vmatprep.subr.mxu0 0.0
    %2761 = vmatpush1.msra.mxu0 0.0
    %2762 = vmatprep.subr.mxu0 0.0
    %2763 = vmatpush1.msra.mxu0 0.0
    %2764 = vmatprep.subr.mxu0 0.0
    %2765 = vmatpush1.msra.mxu0 0.0
    %2766 = vmatprep.subr.mxu0 0.0
    %2767 = vmatpush1.msra.mxu0 0.0
    %2768 = vmatprep.subr.mxu0 0.0
    %2769 = vmatpush1.msra.mxu0 0.0
    %2770 = vmatprep.subr.mxu0 0.0
    %2771 = vmatpush1.msra.mxu0 0.0
    %2772 = vmatprep.subr.mxu0 0.0
    %2773 = vmatpush1.msra.mxu0 0.0
    %2774 = vmatprep.subr.mxu0 0.0
    %2775 = vmatpush1.msra.mxu0 0.0
    %2776 = vmatprep.subr.mxu0 0.0
    %2777 = vmatpush1.msra.mxu0 0.0
    %2778 = vmatprep.subr.mxu0 0.0
    %2779 = vmatpush1.msra.mxu0 0.0
    %2780 = vmatprep.subr.mxu0 0.0
    %2781 = vmatpush1.msra.mxu0 0.0
    %2782 = vmatprep.subr.mxu0 0.0
    %2783 = vmatpush1.msra.mxu0 0.0
    %2784 = vmatprep.subr.mxu0 0.0
    %2785 = vmatpush1.msra.mxu0 0.0
    %2786 = vmatprep.subr.mxu0 0.0
    %2787 = vmatpush1.msra.mxu0 0.0
    %2788 = vmatprep.subr.mxu0 0.0
    %2789 = vmatpush1.msra.mxu0 0.0
    %2790 = vmatprep.subr.mxu0 0.0
    %2791 = vmatpush1.msra.mxu0 0.0
    %2792 = vmatprep.subr.mxu0 0.0
    %2793 = vmatpush1.msra.mxu0 0.0
    %2794 = vmatprep.subr.mxu0 0.0
    %2795 = vmatpush1.msra.mxu0 0.0
    %2796 = vmatprep.subr.mxu0 0.0
    %2797 = vmatpush1.msra.mxu0 0.0
    %2798 = vmatprep.subr.mxu0 0.0
    %2799 = vmatpush1.msra.mxu0 0.0
    %2800 = vmatprep.subr.mxu0 0.0
    %2801 = vmatpush1.msra.mxu0 0.0
    %2802 = vmatprep.subr.mxu0 0.0
    %2803 = vmatpush1.msra.mxu0 0.0
    %2804 = vmatprep.subr.mxu0 0.0
    %2805 = vmatpush1.msra.mxu0 0.0
    %2806 = vmatprep.subr.mxu0 0.0
    %2807 = vmatpush1.msra.mxu0 0.0
    %2808 = vmatprep.mubr.f32.mxu0 0.0
    %2809 = vmatmul.mubr.f32.gmra.mrb[0].mxu0 %v2718
    %v2810 = vpop.f32.mrb[0].mxu0
    %v2811 = vadd.f32 0.0, %v2810
    %v2812 = vpop.f32.mrb[0].mxu0
    %2813 = vmatprep.mubr.f32.mxu0 0.0
    %2814 = vmatmul.mubr.f32.gmra.mrb[0].mxu0 %v2721
    %v2815 = vpop.f32.mrb[0].mxu0
    %v2816 = vadd.f32 0.0, %v2815
    %v2817 = vpop.f32.mrb[0].mxu0
    %2818 = vmatprep.mubr.f32.mxu0 0.0
    %2819 = vmatmul.mubr.f32.gmra.mrb[0].mxu0 %v2724
    %v2820 = vpop.f32.mrb[0].mxu0
    %v2821 = vadd.f32 0.0, %v2820
    %v2822 = vpop.f32.mrb[0].mxu0
    %2823 = vmatprep.mubr.f32.mxu0 0.0
    %2824 = vmatmul.mubr.f32.gmra.mrb[0].mxu0 %v2727
    %v2825 = vpop.f32.mrb[0].mxu0
    %v2826 = vadd.f32 0.0, %v2825
    %v2827 = vpop.f32.mrb[0].mxu0
    %2828 = vmatprep.mubr.f32.mxu0 0.0
    %2829 = vmatmul.mubr.f32.gmra.mrb[0].mxu0 %v2730
    %v2830 = vpop.f32.mrb[0].mxu0
    %v2831 = vadd.f32 0.0, %v2830
    %v2832 = vpop.f32.mrb[0].mxu0
    %2833 = vmatprep.mubr.f32.mxu0 0.0
    %2834 = vmatmul.mubr.f32.gmra.mrb[0].mxu0 %v2733
    %v2835 = vpop.f32.mrb[0].mxu0
    %v2836 = vadd.f32 0.0, %v2835
    %v2837 = vpop.f32.mrb[0].mxu0
    %2838 = vmatprep.mubr.f32.mxu0 0.0
    %2839 = vmatmul.mubr.f32.gmra.mrb[0].mxu0 %v2736
    %v2840 = vpop.f32.mrb[0].mxu0
    %v2841 = vadd.f32 0.0, %v2840
    %v2842 = vpop.f32.mrb[0].mxu0
    %2843 = vmatprep.mubr.f32.mxu0 0.0
    %2844 = vmatmul.mubr.f32.gmra.mrb[0].mxu0 %v2739
    %v2845 = vpop.f32.mrb[0].mxu0
    %v2846 = vadd.f32 0.0, %v2845
    %v2847 = vpop.f32.mrb[0].mxu0
    %2848 = vmatprep.mubr.f32.mxu0 0.0
    %2849 = vmatmul.mubr.f32.gmra.mrb[0].mxu0 %v2742
    %v2850 = vpop.f32.mrb[0].mxu0
    %v2851 = vadd.f32 0.0, %v2850
    %v2852 = vpop.f32.mrb[0].mxu0
    %2853 = vdwg.mxu0
    %v2854 = vld [vmem:[%s10] sm:$0xff]
    %v2855 = vld [vmem:[%s10 + $0x8] sm:$0xff]
    %v2856 = vld [vmem:[%s10 + $0x10] sm:$0xff]
    %v2857 = vld [vmem:[%s10 + $0x18] sm:$0xff]
    %v2858 = vld [vmem:[%s10 + $0x20] sm:$0xff]
    %v2859 = vld [vmem:[%s10 + $0x28] sm:$0xff]
    %v2860 = vld [vmem:[%s10 + $0x30] sm:$0xff]
    %v2861 = vld [vmem:[%s10 + $0x38] sm:$0xff]
    %v2862 = vld [vmem:[%s10 + $0x40] sm:$0xff]
    %v2863 = vld [vmem:[%s10 + $0x48] sm:$0xff]
    %v2864 = vld [vmem:[%s10 + $0x50] sm:$0xff]
    %v2865 = vld [vmem:[%s10 + $0x58] sm:$0xff]
    %v2866 = vld [vmem:[%s10 + $0x60] sm:$0xff]
    %v2867 = vld [vmem:[%s10 + $0x68] sm:$0xff]
    %v2868 = vld [vmem:[%s10 + $0x70] sm:$0xff]
    %v2869 = vld [vmem:[%s10 + $0x78] sm:$0xff]
    %v2870 = vld [vmem:[%s10 + $0x80] sm:$0xff]
    %v2871 = vld [vmem:[%s10 + $0x88] sm:$0xff]
    %v2872 = vld [vmem:[%s10 + $0x90] sm:$0xff]
    %v2873 = vld [vmem:[%s10 + $0x98] sm:$0xff]
    %v2874 = vld [vmem:[%s10 + $0xa0] sm:$0xff]
    %v2875 = vld [vmem:[%s10 + $0xa8] sm:$0xff]
    %v2876 = vld [vmem:[%s10 + $0xb0] sm:$0xff]
    %v2877 = vld [vmem:[%s10 + $0xb8] sm:$0xff]
    %v2878 = vld [vmem:[%s10 + $0xc0] sm:$0xff]
    %v2879 = vld [vmem:[%s10 + $0xc8] sm:$0xff]
    %v2880 = vld [vmem:[%s10 + $0xd0] sm:$0xff]
    %v2881 = vld [vmem:[%s10 + $0xd8] sm:$0xff]
    %v2882 = vld [vmem:[%s10 + $0xe0] sm:$0xff]
    %v2883 = vld [vmem:[%s10 + $0xe8] sm:$0xff]
    %v2884 = vld [vmem:[%s10 + $0xf0] sm:$0xff]
    %v2885 = vld [vmem:[%s10 + $0xf8] sm:$0xff]
    %v2886 = vld [vmem:[%s10 + $0x100] sm:$0xff]
    %v2887 = vld [vmem:[%s10 + $0x108] sm:$0xff]
    %v2888 = vld [vmem:[%s10 + $0x110] sm:$0xff]
    %v2889 = vld [vmem:[%s10 + $0x118] sm:$0xff]
    %v2890 = vld [vmem:[%s10 + $0x120] sm:$0xff]
    %v2891 = vld [vmem:[%s10 + $0x128] sm:$0xff]
    %v2892 = vld [vmem:[%s10 + $0x130] sm:$0xff]
    %v2893 = vld [vmem:[%s10 + $0x138] sm:$0xff]
    %v2894 = vld [vmem:[%s10 + $0x140] sm:$0xff]
    %v2895 = vld [vmem:[%s10 + $0x148] sm:$0xff]
    %v2896 = vld [vmem:[%s10 + $0x150] sm:$0xff]
    %v2897 = vld [vmem:[%s10 + $0x158] sm:$0xff]
    %v2898 = vld [vmem:[%s10 + $0x160] sm:$0xff]
    %v2899 = vld [vmem:[%s10 + $0x168] sm:$0xff]
    %v2900 = vld [vmem:[%s10 + $0x170] sm:$0xff]
    %v2901 = vld [vmem:[%s10 + $0x178] sm:$0xff]
    %v2902 = vld [vmem:[%s10 + $0x180] sm:$0xff]
    %v2903 = vld [vmem:[%s10 + $0x188] sm:$0xff]
    %v2904 = vld [vmem:[%s10 + $0x190] sm:$0xff]
    %v2905 = vld [vmem:[%s10 + $0x198] sm:$0xff]
    %v2906 = vld [vmem:[%s10 + $0x1a0] sm:$0xff]
    %v2907 = vld [vmem:[%s10 + $0x1a8] sm:$0xff]
    %v2908 = vld [vmem:[%s10 + $0x1b0] sm:$0xff]
    %v2909 = vld [vmem:[%s10 + $0x1b8] sm:$0xff]
    %v2910 = vld [vmem:[%s10 + $0x1c0] sm:$0xff]
    %v2911 = vld [vmem:[%s10 + $0x1c8] sm:$0xff]
    %v2912 = vld [vmem:[%s10 + $0x1d0] sm:$0xff]
    %v2913 = vld [vmem:[%s10 + $0x1d8] sm:$0xff]
    %v2914 = vld [vmem:[%s10 + $0x1e0] sm:$0xff]
    %v2915 = vld [vmem:[%s10 + $0x1e8] sm:$0xff]
    %v2916 = vld [vmem:[%s10 + $0x1f0] sm:$0xff]
    %v2917 = vld [vmem:[%s10 + $0x1f8] sm:$0xff]
    %2918 = vmatprep.subr.mxu0 %v2887
    %2919 = vmatpush1.msra.mxu0 %v2886
    %2920 = vmatprep.subr.mxu0 %v2889
    %2921 = vmatpush1.msra.mxu0 %v2888
    %2922 = vmatprep.subr.mxu0 %v2891
    %2923 = vmatpush1.msra.mxu0 %v2890
    %2924 = vmatprep.subr.mxu0 %v2893
    %2925 = vmatpush1.msra.mxu0 %v2892
    %2926 = vmatprep.subr.mxu0 %v2895
    %2927 = vmatpush1.msra.mxu0 %v2894
    %2928 = vmatprep.subr.mxu0 %v2897
    %2929 = vmatpush1.msra.mxu0 %v2896
    %2930 = vmatprep.subr.mxu0 %v2899
    %2931 = vmatpush1.msra.mxu0 %v2898
    %2932 = vmatprep.subr.mxu0 %v2901
    %2933 = vmatpush1.msra.mxu0 %v2900
    %2934 = vmatprep.subr.mxu0 %v2903
    %2935 = vmatpush1.msra.mxu0 %v2902
    %2936 = vmatprep.subr.mxu0 %v2905
    %2937 = vmatpush1.msra.mxu0 %v2904
    %2938 = vmatprep.subr.mxu0 %v2907
    %2939 = vmatpush1.msra.mxu0 %v2906
    %2940 = vmatprep.subr.mxu0 %v2909
    %2941 = vmatpush1.msra.mxu0 %v2908
    %2942 = vmatprep.subr.mxu0 %v2911
    %2943 = vmatpush1.msra.mxu0 %v2910
    %2944 = vmatprep.subr.mxu0 %v2913
    %2945 = vmatpush1.msra.mxu0 %v2912
    %2946 = vmatprep.subr.mxu0 %v2915
    %2947 = vmatpush1.msra.mxu0 %v2914
    %2948 = vmatprep.subr.mxu0 %v2917
    %2949 = vmatpush1.msra.mxu0 %v2916
    %2950 = vmatprep.subr.mxu0 0.0
    %2951 = vmatpush1.msra.mxu0 0.0
    %2952 = vmatprep.subr.mxu0 0.0
    %2953 = vmatpush1.msra.mxu0 0.0
    %2954 = vmatprep.subr.mxu0 0.0
    %2955 = vmatpush1.msra.mxu0 0.0
    %2956 = vmatprep.subr.mxu0 0.0
    %2957 = vmatpush1.msra.mxu0 0.0
    %2958 = vmatprep.subr.mxu0 0.0
    %2959 = vmatpush1.msra.mxu0 0.0
    %2960 = vmatprep.subr.mxu0 0.0
    %2961 = vmatpush1.msra.mxu0 0.0
    %2962 = vmatprep.subr.mxu0 0.0
    %2963 = vmatpush1.msra.mxu0 0.0
    %2964 = vmatprep.subr.mxu0 0.0
    %2965 = vmatpush1.msra.mxu0 0.0
    %2966 = vmatprep.subr.mxu0 0.0
    %2967 = vmatpush1.msra.mxu0 0.0
    %2968 = vmatprep.subr.mxu0 0.0
    %2969 = vmatpush1.msra.mxu0 0.0
    %2970 = vmatprep.subr.mxu0 0.0
    %2971 = vmatpush1.msra.mxu0 0.0
    %2972 = vmatprep.subr.mxu0 0.0
    %2973 = vmatpush1.msra.mxu0 0.0
    %2974 = vmatprep.subr.mxu0 0.0
    %2975 = vmatpush1.msra.mxu0 0.0
    %2976 = vmatprep.subr.mxu0 0.0
    %2977 = vmatpush1.msra.mxu0 0.0
    %2978 = vmatprep.subr.mxu0 0.0
    %2979 = vmatpush1.msra.mxu0 0.0
    %2980 = vmatprep.subr.mxu0 0.0
    %2981 = vmatpush1.msra.mxu0 0.0
    %2982 = vmatprep.mubr.f32.mxu0 0.0
    %2983 = vmatmul.mubr.f32.gmra.mrb[0].mxu0 %v2816
    %v2984 = vpop.f32.mrb[0].mxu0
    %v2985 = vadd.f32 0.0, %v2984
    %v2986 = vpop.f32.mrb[0].mxu0
    %v2987 = vadd.f32 0.0, %v2986
    %2988 = vdwg.mxu0
    %2989 = vmatprep.subr.mxu0 %v2855
    %2990 = vmatpush1.msra.mxu0 %v2854
    %2991 = vmatprep.subr.mxu0 %v2857
    %2992 = vmatpush1.msra.mxu0 %v2856
    %2993 = vmatprep.subr.mxu0 %v2859
    %2994 = vmatpush1.msra.mxu0 %v2858
    %2995 = vmatprep.subr.mxu0 %v2861
    %2996 = vmatpush1.msra.mxu0 %v2860
    %2997 = vmatprep.subr.mxu0 %v2863
    %2998 = vmatpush1.msra.mxu0 %v2862
    %2999 = vmatprep.subr.mxu0 %v2865
    %3000 = vmatpush1.msra.mxu0 %v2864
    %3001 = vmatprep.subr.mxu0 %v2867
    %3002 = vmatpush1.msra.mxu0 %v2866
    %3003 = vmatprep.subr.mxu0 %v2869
    %3004 = vmatpush1.msra.mxu0 %v2868
    %3005 = vmatprep.subr.mxu0 %v2871
    %3006 = vmatpush1.msra.mxu0 %v2870
    %3007 = vmatprep.subr.mxu0 %v2873
    %3008 = vmatpush1.msra.mxu0 %v2872
    %3009 = vmatprep.subr.mxu0 %v2875
    %3010 = vmatpush1.msra.mxu0 %v2874
    %3011 = vmatprep.subr.mxu0 %v2877
    %3012 = vmatpush1.msra.mxu0 %v2876
    %3013 = vmatprep.subr.mxu0 %v2879
    %3014 = vmatpush1.msra.mxu0 %v2878
    %3015 = vmatprep.subr.mxu0 %v2881
    %3016 = vmatpush1.msra.mxu0 %v2880
    %3017 = vmatprep.subr.mxu0 %v2883
    %3018 = vmatpush1.msra.mxu0 %v2882
    %3019 = vmatprep.subr.mxu0 %v2885
    %3020 = vmatpush1.msra.mxu0 %v2884
    %3021 = vmatprep.subr.mxu0 0.0
    %3022 = vmatpush1.msra.mxu0 0.0
    %3023 = vmatprep.subr.mxu0 0.0
    %3024 = vmatpush1.msra.mxu0 0.0
    %3025 = vmatprep.subr.mxu0 0.0
    %3026 = vmatpush1.msra.mxu0 0.0
    %3027 = vmatprep.subr.mxu0 0.0
    %3028 = vmatpush1.msra.mxu0 0.0
    %3029 = vmatprep.subr.mxu0 0.0
    %3030 = vmatpush1.msra.mxu0 0.0
    %3031 = vmatprep.subr.mxu0 0.0
    %3032 = vmatpush1.msra.mxu0 0.0
    %3033 = vmatprep.subr.mxu0 0.0
    %3034 = vmatpush1.msra.mxu0 0.0
    %3035 = vmatprep.subr.mxu0 0.0
    %3036 = vmatpush1.msra.mxu0 0.0
    %3037 = vmatprep.subr.mxu0 0.0
    %3038 = vmatpush1.msra.mxu0 0.0
    %3039 = vmatprep.subr.mxu0 0.0
    %3040 = vmatpush1.msra.mxu0 0.0
    %3041 = vmatprep.subr.mxu0 0.0
    %3042 = vmatpush1.msra.mxu0 0.0
    %3043 = vmatprep.subr.mxu0 0.0
    %3044 = vmatpush1.msra.mxu0 0.0
    %3045 = vmatprep.subr.mxu0 0.0
    %3046 = vmatpush1.msra.mxu0 0.0
    %3047 = vmatprep.subr.mxu0 0.0
    %3048 = vmatpush1.msra.mxu0 0.0
    %3049 = vmatprep.subr.mxu0 0.0
    %3050 = vmatpush1.msra.mxu0 0.0
    %3051 = vmatprep.subr.mxu0 0.0
    %3052 = vmatpush1.msra.mxu0 0.0
    %3053 = vmatprep.mubr.f32.mxu0 0.0
    %3054 = vmatmul.mubr.f32.gmra.mrb[0].mxu0 %v2811
    %v3055 = vpop.f32.mrb[0].mxu0
    %v3056 = vadd.f32 %v2985, %v3055
    %v3057 = vpop.f32.mrb[0].mxu0
    %v3058 = vadd.f32 %v2987, %v3057
    %3059 = vdwg.mxu0
    %v3060 = vld [vmem:[%s10 + $0x200] sm:$0xff]
    %v3061 = vld [vmem:[%s10 + $0x208] sm:$0xff]
    %v3062 = vld [vmem:[%s10 + $0x210] sm:$0xff]
    %v3063 = vld [vmem:[%s10 + $0x218] sm:$0xff]
    %v3064 = vld [vmem:[%s10 + $0x220] sm:$0xff]
    %v3065 = vld [vmem:[%s10 + $0x228] sm:$0xff]
    %v3066 = vld [vmem:[%s10 + $0x230] sm:$0xff]
    %v3067 = vld [vmem:[%s10 + $0x238] sm:$0xff]
    %v3068 = vld [vmem:[%s10 + $0x240] sm:$0xff]
    %v3069 = vld [vmem:[%s10 + $0x248] sm:$0xff]
    %v3070 = vld [vmem:[%s10 + $0x250] sm:$0xff]
    %v3071 = vld [vmem:[%s10 + $0x258] sm:$0xff]
    %v3072 = vld [vmem:[%s10 + $0x260] sm:$0xff]
    %v3073 = vld [vmem:[%s10 + $0x268] sm:$0xff]
    %v3074 = vld [vmem:[%s10 + $0x270] sm:$0xff]
    %v3075 = vld [vmem:[%s10 + $0x278] sm:$0xff]
    %v3076 = vld [vmem:[%s10 + $0x280] sm:$0xff]
    %v3077 = vld [vmem:[%s10 + $0x288] sm:$0xff]
    %v3078 = vld [vmem:[%s10 + $0x290] sm:$0xff]
    %v3079 = vld [vmem:[%s10 + $0x298] sm:$0xff]
    %v3080 = vld [vmem:[%s10 + $0x2a0] sm:$0xff]
    %v3081 = vld [vmem:[%s10 + $0x2a8] sm:$0xff]
    %v3082 = vld [vmem:[%s10 + $0x2b0] sm:$0xff]
    %v3083 = vld [vmem:[%s10 + $0x2b8] sm:$0xff]
    %v3084 = vld [vmem:[%s10 + $0x2c0] sm:$0xff]
    %v3085 = vld [vmem:[%s10 + $0x2c8] sm:$0xff]
    %v3086 = vld [vmem:[%s10 + $0x2d0] sm:$0xff]
    %v3087 = vld [vmem:[%s10 + $0x2d8] sm:$0xff]
    %v3088 = vld [vmem:[%s10 + $0x2e0] sm:$0xff]
    %v3089 = vld [vmem:[%s10 + $0x2e8] sm:$0xff]
    %v3090 = vld [vmem:[%s10 + $0x2f0] sm:$0xff]
    %v3091 = vld [vmem:[%s10 + $0x2f8] sm:$0xff]
    %3092 = vmatprep.subr.mxu0 %v3061
    %3093 = vmatpush1.msra.mxu0 %v3060
    %3094 = vmatprep.subr.mxu0 %v3063
    %3095 = vmatpush1.msra.mxu0 %v3062
    %3096 = vmatprep.subr.mxu0 %v3065
    %3097 = vmatpush1.msra.mxu0 %v3064
    %3098 = vmatprep.subr.mxu0 %v3067
    %3099 = vmatpush1.msra.mxu0 %v3066
    %3100 = vmatprep.subr.mxu0 %v3069
    %3101 = vmatpush1.msra.mxu0 %v3068
    %3102 = vmatprep.subr.mxu0 %v3071
    %3103 = vmatpush1.msra.mxu0 %v3070
    %3104 = vmatprep.subr.mxu0 %v3073
    %3105 = vmatpush1.msra.mxu0 %v3072
    %3106 = vmatprep.subr.mxu0 %v3075
    %3107 = vmatpush1.msra.mxu0 %v3074
    %3108 = vmatprep.subr.mxu0 %v3077
    %3109 = vmatpush1.msra.mxu0 %v3076
    %3110 = vmatprep.subr.mxu0 %v3079
    %3111 = vmatpush1.msra.mxu0 %v3078
    %3112 = vmatprep.subr.mxu0 %v3081
    %3113 = vmatpush1.msra.mxu0 %v3080
    %3114 = vmatprep.subr.mxu0 %v3083
    %3115 = vmatpush1.msra.mxu0 %v3082
    %3116 = vmatprep.subr.mxu0 %v3085
    %3117 = vmatpush1.msra.mxu0 %v3084
    %3118 = vmatprep.subr.mxu0 %v3087
    %3119 = vmatpush1.msra.mxu0 %v3086
    %3120 = vmatprep.subr.mxu0 %v3089
    %3121 = vmatpush1.msra.mxu0 %v3088
    %3122 = vmatprep.subr.mxu0 %v3091
    %3123 = vmatpush1.msra.mxu0 %v3090
    %3124 = vmatprep.subr.mxu0 0.0
    %3125 = vmatpush1.msra.mxu0 0.0
    %3126 = vmatprep.subr.mxu0 0.0
    %3127 = vmatpush1.msra.mxu0 0.0
    %3128 = vmatprep.subr.mxu0 0.0
    %3129 = vmatpush1.msra.mxu0 0.0
    %3130 = vmatprep.subr.mxu0 0.0
    %3131 = vmatpush1.msra.mxu0 0.0
    %3132 = vmatprep.subr.mxu0 0.0
    %3133 = vmatpush1.msra.mxu0 0.0
    %3134 = vmatprep.subr.mxu0 0.0
    %3135 = vmatpush1.msra.mxu0 0.0
    %3136 = vmatprep.subr.mxu0 0.0
    %3137 = vmatpush1.msra.mxu0 0.0
    %3138 = vmatprep.subr.mxu0 0.0
    %3139 = vmatpush1.msra.mxu0 0.0
    %3140 = vmatprep.subr.mxu0 0.0
    %3141 = vmatpush1.msra.mxu0 0.0
    %3142 = vmatprep.subr.mxu0 0.0
    %3143 = vmatpush1.msra.mxu0 0.0
    %3144 = vmatprep.subr.mxu0 0.0
    %3145 = vmatpush1.msra.mxu0 0.0
    %3146 = vmatprep.subr.mxu0 0.0
    %3147 = vmatpush1.msra.mxu0 0.0
    %3148 = vmatprep.subr.mxu0 0.0
    %3149 = vmatpush1.msra.mxu0 0.0
    %3150 = vmatprep.subr.mxu0 0.0
    %3151 = vmatpush1.msra.mxu0 0.0
    %3152 = vmatprep.subr.mxu0 0.0
    %3153 = vmatpush1.msra.mxu0 0.0
    %3154 = vmatprep.subr.mxu0 0.0
    %3155 = vmatpush1.msra.mxu0 0.0
    %3156 = vmatprep.mubr.f32.mxu0 0.0
    %3157 = vmatmul.mubr.f32.gmra.mrb[0].mxu0 %v2821
    %v3158 = vpop.f32.mrb[0].mxu0
    %v3159 = vadd.f32 0.0, %v3158
    %v3160 = vpop.f32.mrb[0].mxu0
    %v3161 = vadd.f32 0.0, %v3160
    %3162 = vdwg.mxu0
    %v3163 = vadd.f32 %v3056, %v3159
    %v3164 = vadd.f32 %v3058, %v3161
    %v3165 = vld [vmem:[%s10 + $0x300] sm:$0xff]
    %v3166 = vld [vmem:[%s10 + $0x308] sm:$0xff]
    %v3167 = vld [vmem:[%s10 + $0x310] sm:$0xff]
    %v3168 = vld [vmem:[%s10 + $0x318] sm:$0xff]
    %v3169 = vld [vmem:[%s10 + $0x320] sm:$0xff]
    %v3170 = vld [vmem:[%s10 + $0x328] sm:$0xff]
    %v3171 = vld [vmem:[%s10 + $0x330] sm:$0xff]
    %v3172 = vld [vmem:[%s10 + $0x338] sm:$0xff]
    %v3173 = vld [vmem:[%s10 + $0x340] sm:$0xff]
    %v3174 = vld [vmem:[%s10 + $0x348] sm:$0xff]
    %v3175 = vld [vmem:[%s10 + $0x350] sm:$0xff]
    %v3176 = vld [vmem:[%s10 + $0x358] sm:$0xff]
    %v3177 = vld [vmem:[%s10 + $0x360] sm:$0xff]
    %v3178 = vld [vmem:[%s10 + $0x368] sm:$0xff]
    %v3179 = vld [vmem:[%s10 + $0x370] sm:$0xff]
    %v3180 = vld [vmem:[%s10 + $0x378] sm:$0xff]
    %v3181 = vld [vmem:[%s10 + $0x380] sm:$0xff]
    %v3182 = vld [vmem:[%s10 + $0x388] sm:$0xff]
    %v3183 = vld [vmem:[%s10 + $0x390] sm:$0xff]
    %v3184 = vld [vmem:[%s10 + $0x398] sm:$0xff]
    %v3185 = vld [vmem:[%s10 + $0x3a0] sm:$0xff]
    %v3186 = vld [vmem:[%s10 + $0x3a8] sm:$0xff]
    %v3187 = vld [vmem:[%s10 + $0x3b0] sm:$0xff]
    %v3188 = vld [vmem:[%s10 + $0x3b8] sm:$0xff]
    %v3189 = vld [vmem:[%s10 + $0x3c0] sm:$0xff]
    %v3190 = vld [vmem:[%s10 + $0x3c8] sm:$0xff]
    %v3191 = vld [vmem:[%s10 + $0x3d0] sm:$0xff]
    %v3192 = vld [vmem:[%s10 + $0x3d8] sm:$0xff]
    %v3193 = vld [vmem:[%s10 + $0x3e0] sm:$0xff]
    %v3194 = vld [vmem:[%s10 + $0x3e8] sm:$0xff]
    %v3195 = vld [vmem:[%s10 + $0x3f0] sm:$0xff]
    %v3196 = vld [vmem:[%s10 + $0x3f8] sm:$0xff]
    %3197 = vmatprep.subr.mxu0 %v3166
    %3198 = vmatpush1.msra.mxu0 %v3165
    %3199 = vmatprep.subr.mxu0 %v3168
    %3200 = vmatpush1.msra.mxu0 %v3167
    %3201 = vmatprep.subr.mxu0 %v3170
    %3202 = vmatpush1.msra.mxu0 %v3169
    %3203 = vmatprep.subr.mxu0 %v3172
    %3204 = vmatpush1.msra.mxu0 %v3171
    %3205 = vmatprep.subr.mxu0 %v3174
    %3206 = vmatpush1.msra.mxu0 %v3173
    %3207 = vmatprep.subr.mxu0 %v3176
    %3208 = vmatpush1.msra.mxu0 %v3175
    %3209 = vmatprep.subr.mxu0 %v3178
    %3210 = vmatpush1.msra.mxu0 %v3177
    %3211 = vmatprep.subr.mxu0 %v3180
    %3212 = vmatpush1.msra.mxu0 %v3179
    %3213 = vmatprep.subr.mxu0 %v3182
    %3214 = vmatpush1.msra.mxu0 %v3181
    %3215 = vmatprep.subr.mxu0 %v3184
    %3216 = vmatpush1.msra.mxu0 %v3183
    %3217 = vmatprep.subr.mxu0 %v3186
    %3218 = vmatpush1.msra.mxu0 %v3185
    %3219 = vmatprep.subr.mxu0 %v3188
    %3220 = vmatpush1.msra.mxu0 %v3187
    %3221 = vmatprep.subr.mxu0 %v3190
    %3222 = vmatpush1.msra.mxu0 %v3189
    %3223 = vmatprep.subr.mxu0 %v3192
    %3224 = vmatpush1.msra.mxu0 %v3191
    %3225 = vmatprep.subr.mxu0 %v3194
    %3226 = vmatpush1.msra.mxu0 %v3193
    %3227 = vmatprep.subr.mxu0 %v3196
    %3228 = vmatpush1.msra.mxu0 %v3195
    %3229 = vmatprep.subr.mxu0 0.0
    %3230 = vmatpush1.msra.mxu0 0.0
    %3231 = vmatprep.subr.mxu0 0.0
    %3232 = vmatpush1.msra.mxu0 0.0
    %3233 = vmatprep.subr.mxu0 0.0
    %3234 = vmatpush1.msra.mxu0 0.0
    %3235 = vmatprep.subr.mxu0 0.0
    %3236 = vmatpush1.msra.mxu0 0.0
    %3237 = vmatprep.subr.mxu0 0.0
    %3238 = vmatpush1.msra.mxu0 0.0
    %3239 = vmatprep.subr.mxu0 0.0
    %3240 = vmatpush1.msra.mxu0 0.0
    %3241 = vmatprep.subr.mxu0 0.0
    %3242 = vmatpush1.msra.mxu0 0.0
    %3243 = vmatprep.subr.mxu0 0.0
    %3244 = vmatpush1.msra.mxu0 0.0
    %3245 = vmatprep.subr.mxu0 0.0
    %3246 = vmatpush1.msra.mxu0 0.0
    %3247 = vmatprep.subr.mxu0 0.0
    %3248 = vmatpush1.msra.mxu0 0.0
    %3249 = vmatprep.subr.mxu0 0.0
    %3250 = vmatpush1.msra.mxu0 0.0
    %3251 = vmatprep.subr.mxu0 0.0
    %3252 = vmatpush1.msra.mxu0 0.0
    %3253 = vmatprep.subr.mxu0 0.0
    %3254 = vmatpush1.msra.mxu0 0.0
    %3255 = vmatprep.subr.mxu0 0.0
    %3256 = vmatpush1.msra.mxu0 0.0
    %3257 = vmatprep.subr.mxu0 0.0
    %3258 = vmatpush1.msra.mxu0 0.0
    %3259 = vmatprep.subr.mxu0 0.0
    %3260 = vmatpush1.msra.mxu0 0.0
    %3261 = vmatprep.mubr.f32.mxu0 0.0
    %3262 = vmatmul.mubr.f32.gmra.mrb[0].mxu0 %v2826
    %v3263 = vpop.f32.mrb[0].mxu0
    %v3264 = vadd.f32 0.0, %v3263
    %v3265 = vpop.f32.mrb[0].mxu0
    %v3266 = vadd.f32 0.0, %v3265
    %3267 = vdwg.mxu0
    %v3268 = vadd.f32 %v3163, %v3264
    %v3269 = vadd.f32 %v3164, %v3266
    %v3270 = vld [vmem:[%s10 + $0x400] sm:$0xff]
    %v3271 = vld [vmem:[%s10 + $0x408] sm:$0xff]
    %v3272 = vld [vmem:[%s10 + $0x410] sm:$0xff]
    %v3273 = vld [vmem:[%s10 + $0x418] sm:$0xff]
    %v3274 = vld [vmem:[%s10 + $0x420] sm:$0xff]
    %v3275 = vld [vmem:[%s10 + $0x428] sm:$0xff]
    %v3276 = vld [vmem:[%s10 + $0x430] sm:$0xff]
    %v3277 = vld [vmem:[%s10 + $0x438] sm:$0xff]
    %v3278 = vld [vmem:[%s10 + $0x440] sm:$0xff]
    %v3279 = vld [vmem:[%s10 + $0x448] sm:$0xff]
    %v3280 = vld [vmem:[%s10 + $0x450] sm:$0xff]
    %v3281 = vld [vmem:[%s10 + $0x458] sm:$0xff]
    %v3282 = vld [vmem:[%s10 + $0x460] sm:$0xff]
    %v3283 = vld [vmem:[%s10 + $0x468] sm:$0xff]
    %v3284 = vld [vmem:[%s10 + $0x470] sm:$0xff]
    %v3285 = vld [vmem:[%s10 + $0x478] sm:$0xff]
    %v3286 = vld [vmem:[%s10 + $0x480] sm:$0xff]
    %v3287 = vld [vmem:[%s10 + $0x488] sm:$0xff]
    %v3288 = vld [vmem:[%s10 + $0x490] sm:$0xff]
    %v3289 = vld [vmem:[%s10 + $0x498] sm:$0xff]
    %v3290 = vld [vmem:[%s10 + $0x4a0] sm:$0xff]
    %v3291 = vld [vmem:[%s10 + $0x4a8] sm:$0xff]
    %v3292 = vld [vmem:[%s10 + $0x4b0] sm:$0xff]
    %v3293 = vld [vmem:[%s10 + $0x4b8] sm:$0xff]
    %v3294 = vld [vmem:[%s10 + $0x4c0] sm:$0xff]
    %v3295 = vld [vmem:[%s10 + $0x4c8] sm:$0xff]
    %v3296 = vld [vmem:[%s10 + $0x4d0] sm:$0xff]
    %v3297 = vld [vmem:[%s10 + $0x4d8] sm:$0xff]
    %v3298 = vld [vmem:[%s10 + $0x4e0] sm:$0xff]
    %v3299 = vld [vmem:[%s10 + $0x4e8] sm:$0xff]
    %v3300 = vld [vmem:[%s10 + $0x4f0] sm:$0xff]
    %v3301 = vld [vmem:[%s10 + $0x4f8] sm:$0xff]
    %3302 = vmatprep.subr.mxu0 %v3271
    %3303 = vmatpush1.msra.mxu0 %v3270
    %3304 = vmatprep.subr.mxu0 %v3273
    %3305 = vmatpush1.msra.mxu0 %v3272
    %3306 = vmatprep.subr.mxu0 %v3275
    %3307 = vmatpush1.msra.mxu0 %v3274
    %3308 = vmatprep.subr.mxu0 %v3277
    %3309 = vmatpush1.msra.mxu0 %v3276
    %3310 = vmatprep.subr.mxu0 %v3279
    %3311 = vmatpush1.msra.mxu0 %v3278
    %3312 = vmatprep.subr.mxu0 %v3281
    %3313 = vmatpush1.msra.mxu0 %v3280
    %3314 = vmatprep.subr.mxu0 %v3283
    %3315 = vmatpush1.msra.mxu0 %v3282
    %3316 = vmatprep.subr.mxu0 %v3285
    %3317 = vmatpush1.msra.mxu0 %v3284
    %3318 = vmatprep.subr.mxu0 %v3287
    %3319 = vmatpush1.msra.mxu0 %v3286
    %3320 = vmatprep.subr.mxu0 %v3289
    %3321 = vmatpush1.msra.mxu0 %v3288
    %3322 = vmatprep.subr.mxu0 %v3291
    %3323 = vmatpush1.msra.mxu0 %v3290
    %3324 = vmatprep.subr.mxu0 %v3293
    %3325 = vmatpush1.msra.mxu0 %v3292
    %3326 = vmatprep.subr.mxu0 %v3295
    %3327 = vmatpush1.msra.mxu0 %v3294
    %3328 = vmatprep.subr.mxu0 %v3297
    %3329 = vmatpush1.msra.mxu0 %v3296
    %3330 = vmatprep.subr.mxu0 %v3299
    %3331 = vmatpush1.msra.mxu0 %v3298
    %3332 = vmatprep.subr.mxu0 %v3301
    %3333 = vmatpush1.msra.mxu0 %v3300
    %3334 = vmatprep.subr.mxu0 0.0
    %3335 = vmatpush1.msra.mxu0 0.0
    %3336 = vmatprep.subr.mxu0 0.0
    %3337 = vmatpush1.msra.mxu0 0.0
    %3338 = vmatprep.subr.mxu0 0.0
    %3339 = vmatpush1.msra.mxu0 0.0
    %3340 = vmatprep.subr.mxu0 0.0
    %3341 = vmatpush1.msra.mxu0 0.0
    %3342 = vmatprep.subr.mxu0 0.0
    %3343 = vmatpush1.msra.mxu0 0.0
    %3344 = vmatprep.subr.mxu0 0.0
    %3345 = vmatpush1.msra.mxu0 0.0
    %3346 = vmatprep.subr.mxu0 0.0
    %3347 = vmatpush1.msra.mxu0 0.0
    %3348 = vmatprep.subr.mxu0 0.0
    %3349 = vmatpush1.msra.mxu0 0.0
    %3350 = vmatprep.subr.mxu0 0.0
    %3351 = vmatpush1.msra.mxu0 0.0
    %3352 = vmatprep.subr.mxu0 0.0
    %3353 = vmatpush1.msra.mxu0 0.0
    %3354 = vmatprep.subr.mxu0 0.0
    %3355 = vmatpush1.msra.mxu0 0.0
    %3356 = vmatprep.subr.mxu0 0.0
    %3357 = vmatpush1.msra.mxu0 0.0
    %3358 = vmatprep.subr.mxu0 0.0
    %3359 = vmatpush1.msra.mxu0 0.0
    %3360 = vmatprep.subr.mxu0 0.0
    %3361 = vmatpush1.msra.mxu0 0.0
    %3362 = vmatprep.subr.mxu0 0.0
    %3363 = vmatpush1.msra.mxu0 0.0
    %3364 = vmatprep.subr.mxu0 0.0
    %3365 = vmatpush1.msra.mxu0 0.0
    %3366 = vmatprep.mubr.f32.mxu0 0.0
    %3367 = vmatmul.mubr.f32.gmra.mrb[0].mxu0 %v2831
    %v3368 = vpop.f32.mrb[0].mxu0
    %v3369 = vadd.f32 0.0, %v3368
    %v3370 = vpop.f32.mrb[0].mxu0
    %v3371 = vadd.f32 0.0, %v3370
    %3372 = vdwg.mxu0
    %v3373 = vadd.f32 %v3268, %v3369
    %v3374 = vadd.f32 %v3269, %v3371
    %v3375 = vld [vmem:[%s10 + $0x500] sm:$0xff]
    %v3376 = vld [vmem:[%s10 + $0x508] sm:$0xff]
    %v3377 = vld [vmem:[%s10 + $0x510] sm:$0xff]
    %v3378 = vld [vmem:[%s10 + $0x518] sm:$0xff]
    %v3379 = vld [vmem:[%s10 + $0x520] sm:$0xff]
    %v3380 = vld [vmem:[%s10 + $0x528] sm:$0xff]
    %v3381 = vld [vmem:[%s10 + $0x530] sm:$0xff]
    %v3382 = vld [vmem:[%s10 + $0x538] sm:$0xff]
    %v3383 = vld [vmem:[%s10 + $0x540] sm:$0xff]
    %v3384 = vld [vmem:[%s10 + $0x548] sm:$0xff]
    %v3385 = vld [vmem:[%s10 + $0x550] sm:$0xff]
    %v3386 = vld [vmem:[%s10 + $0x558] sm:$0xff]
    %v3387 = vld [vmem:[%s10 + $0x560] sm:$0xff]
    %v3388 = vld [vmem:[%s10 + $0x568] sm:$0xff]
    %v3389 = vld [vmem:[%s10 + $0x570] sm:$0xff]
    %v3390 = vld [vmem:[%s10 + $0x578] sm:$0xff]
    %v3391 = vld [vmem:[%s10 + $0x580] sm:$0xff]
    %v3392 = vld [vmem:[%s10 + $0x588] sm:$0xff]
    %v3393 = vld [vmem:[%s10 + $0x590] sm:$0xff]
    %v3394 = vld [vmem:[%s10 + $0x598] sm:$0xff]
    %v3395 = vld [vmem:[%s10 + $0x5a0] sm:$0xff]
    %v3396 = vld [vmem:[%s10 + $0x5a8] sm:$0xff]
    %v3397 = vld [vmem:[%s10 + $0x5b0] sm:$0xff]
    %v3398 = vld [vmem:[%s10 + $0x5b8] sm:$0xff]
    %v3399 = vld [vmem:[%s10 + $0x5c0] sm:$0xff]
    %v3400 = vld [vmem:[%s10 + $0x5c8] sm:$0xff]
    %v3401 = vld [vmem:[%s10 + $0x5d0] sm:$0xff]
    %v3402 = vld [vmem:[%s10 + $0x5d8] sm:$0xff]
    %v3403 = vld [vmem:[%s10 + $0x5e0] sm:$0xff]
    %v3404 = vld [vmem:[%s10 + $0x5e8] sm:$0xff]
    %v3405 = vld [vmem:[%s10 + $0x5f0] sm:$0xff]
    %v3406 = vld [vmem:[%s10 + $0x5f8] sm:$0xff]
    %3407 = vmatprep.subr.mxu0 %v3376
    %3408 = vmatpush1.msra.mxu0 %v3375
    %3409 = vmatprep.subr.mxu0 %v3378
    %3410 = vmatpush1.msra.mxu0 %v3377
    %3411 = vmatprep.subr.mxu0 %v3380
    %3412 = vmatpush1.msra.mxu0 %v3379
    %3413 = vmatprep.subr.mxu0 %v3382
    %3414 = vmatpush1.msra.mxu0 %v3381
    %3415 = vmatprep.subr.mxu0 %v3384
    %3416 = vmatpush1.msra.mxu0 %v3383
    %3417 = vmatprep.subr.mxu0 %v3386
    %3418 = vmatpush1.msra.mxu0 %v3385
    %3419 = vmatprep.subr.mxu0 %v3388
    %3420 = vmatpush1.msra.mxu0 %v3387
    %3421 = vmatprep.subr.mxu0 %v3390
    %3422 = vmatpush1.msra.mxu0 %v3389
    %3423 = vmatprep.subr.mxu0 %v3392
    %3424 = vmatpush1.msra.mxu0 %v3391
    %3425 = vmatprep.subr.mxu0 %v3394
    %3426 = vmatpush1.msra.mxu0 %v3393
    %3427 = vmatprep.subr.mxu0 %v3396
    %3428 = vmatpush1.msra.mxu0 %v3395
    %3429 = vmatprep.subr.mxu0 %v3398
    %3430 = vmatpush1.msra.mxu0 %v3397
    %3431 = vmatprep.subr.mxu0 %v3400
    %3432 = vmatpush1.msra.mxu0 %v3399
    %3433 = vmatprep.subr.mxu0 %v3402
    %3434 = vmatpush1.msra.mxu0 %v3401
    %3435 = vmatprep.subr.mxu0 %v3404
    %3436 = vmatpush1.msra.mxu0 %v3403
    %3437 = vmatprep.subr.mxu0 %v3406
    %3438 = vmatpush1.msra.mxu0 %v3405
    %3439 = vmatprep.subr.mxu0 0.0
    %3440 = vmatpush1.msra.mxu0 0.0
    %3441 = vmatprep.subr.mxu0 0.0
    %3442 = vmatpush1.msra.mxu0 0.0
    %3443 = vmatprep.subr.mxu0 0.0
    %3444 = vmatpush1.msra.mxu0 0.0
    %3445 = vmatprep.subr.mxu0 0.0
    %3446 = vmatpush1.msra.mxu0 0.0
    %3447 = vmatprep.subr.mxu0 0.0
    %3448 = vmatpush1.msra.mxu0 0.0
    %3449 = vmatprep.subr.mxu0 0.0
    %3450 = vmatpush1.msra.mxu0 0.0
    %3451 = vmatprep.subr.mxu0 0.0
    %3452 = vmatpush1.msra.mxu0 0.0
    %3453 = vmatprep.subr.mxu0 0.0
    %3454 = vmatpush1.msra.mxu0 0.0
    %3455 = vmatprep.subr.mxu0 0.0
    %3456 = vmatpush1.msra.mxu0 0.0
    %3457 = vmatprep.subr.mxu0 0.0
    %3458 = vmatpush1.msra.mxu0 0.0
    %3459 = vmatprep.subr.mxu0 0.0
    %3460 = vmatpush1.msra.mxu0 0.0
    %3461 = vmatprep.subr.mxu0 0.0
    %3462 = vmatpush1.msra.mxu0 0.0
    %3463 = vmatprep.subr.mxu0 0.0
    %3464 = vmatpush1.msra.mxu0 0.0
    %3465 = vmatprep.subr.mxu0 0.0
    %3466 = vmatpush1.msra.mxu0 0.0
    %3467 = vmatprep.subr.mxu0 0.0
    %3468 = vmatpush1.msra.mxu0 0.0
    %3469 = vmatprep.subr.mxu0 0.0
    %3470 = vmatpush1.msra.mxu0 0.0
    %3471 = vmatprep.mubr.f32.mxu0 0.0
    %3472 = vmatmul.mubr.f32.gmra.mrb[0].mxu0 %v2836
    %v3473 = vpop.f32.mrb[0].mxu0
    %v3474 = vadd.f32 0.0, %v3473
    %v3475 = vpop.f32.mrb[0].mxu0
    %v3476 = vadd.f32 0.0, %v3475
    %3477 = vdwg.mxu0
    %v3478 = vadd.f32 %v3373, %v3474
    %v3479 = vadd.f32 %v3374, %v3476
    %v3480 = vld [vmem:[%s10 + $0x600] sm:$0xff]
    %v3481 = vld [vmem:[%s10 + $0x608] sm:$0xff]
    %v3482 = vld [vmem:[%s10 + $0x610] sm:$0xff]
    %v3483 = vld [vmem:[%s10 + $0x618] sm:$0xff]
    %v3484 = vld [vmem:[%s10 + $0x620] sm:$0xff]
    %v3485 = vld [vmem:[%s10 + $0x628] sm:$0xff]
    %v3486 = vld [vmem:[%s10 + $0x630] sm:$0xff]
    %v3487 = vld [vmem:[%s10 + $0x638] sm:$0xff]
    %v3488 = vld [vmem:[%s10 + $0x640] sm:$0xff]
    %v3489 = vld [vmem:[%s10 + $0x648] sm:$0xff]
    %v3490 = vld [vmem:[%s10 + $0x650] sm:$0xff]
    %v3491 = vld [vmem:[%s10 + $0x658] sm:$0xff]
    %v3492 = vld [vmem:[%s10 + $0x660] sm:$0xff]
    %v3493 = vld [vmem:[%s10 + $0x668] sm:$0xff]
    %v3494 = vld [vmem:[%s10 + $0x670] sm:$0xff]
    %v3495 = vld [vmem:[%s10 + $0x678] sm:$0xff]
    %v3496 = vld [vmem:[%s10 + $0x680] sm:$0xff]
    %v3497 = vld [vmem:[%s10 + $0x688] sm:$0xff]
    %v3498 = vld [vmem:[%s10 + $0x690] sm:$0xff]
    %v3499 = vld [vmem:[%s10 + $0x698] sm:$0xff]
    %v3500 = vld [vmem:[%s10 + $0x6a0] sm:$0xff]
    %v3501 = vld [vmem:[%s10 + $0x6a8] sm:$0xff]
    %v3502 = vld [vmem:[%s10 + $0x6b0] sm:$0xff]
    %v3503 = vld [vmem:[%s10 + $0x6b8] sm:$0xff]
    %v3504 = vld [vmem:[%s10 + $0x6c0] sm:$0xff]
    %v3505 = vld [vmem:[%s10 + $0x6c8] sm:$0xff]
    %v3506 = vld [vmem:[%s10 + $0x6d0] sm:$0xff]
    %v3507 = vld [vmem:[%s10 + $0x6d8] sm:$0xff]
    %v3508 = vld [vmem:[%s10 + $0x6e0] sm:$0xff]
    %v3509 = vld [vmem:[%s10 + $0x6e8] sm:$0xff]
    %v3510 = vld [vmem:[%s10 + $0x6f0] sm:$0xff]
    %v3511 = vld [vmem:[%s10 + $0x6f8] sm:$0xff]
    %3512 = vmatprep.subr.mxu0 %v3481
    %3513 = vmatpush1.msra.mxu0 %v3480
    %3514 = vmatprep.subr.mxu0 %v3483
    %3515 = vmatpush1.msra.mxu0 %v3482
    %3516 = vmatprep.subr.mxu0 %v3485
    %3517 = vmatpush1.msra.mxu0 %v3484
    %3518 = vmatprep.subr.mxu0 %v3487
    %3519 = vmatpush1.msra.mxu0 %v3486
    %3520 = vmatprep.subr.mxu0 %v3489
    %3521 = vmatpush1.msra.mxu0 %v3488
    %3522 = vmatprep.subr.mxu0 %v3491
    %3523 = vmatpush1.msra.mxu0 %v3490
    %3524 = vmatprep.subr.mxu0 %v3493
    %3525 = vmatpush1.msra.mxu0 %v3492
    %3526 = vmatprep.subr.mxu0 %v3495
    %3527 = vmatpush1.msra.mxu0 %v3494
    %3528 = vmatprep.subr.mxu0 %v3497
    %3529 = vmatpush1.msra.mxu0 %v3496
    %3530 = vmatprep.subr.mxu0 %v3499
    %3531 = vmatpush1.msra.mxu0 %v3498
    %3532 = vmatprep.subr.mxu0 %v3501
    %3533 = vmatpush1.msra.mxu0 %v3500
    %3534 = vmatprep.subr.mxu0 %v3503
    %3535 = vmatpush1.msra.mxu0 %v3502
    %3536 = vmatprep.subr.mxu0 %v3505
    %3537 = vmatpush1.msra.mxu0 %v3504
    %3538 = vmatprep.subr.mxu0 %v3507
    %3539 = vmatpush1.msra.mxu0 %v3506
    %3540 = vmatprep.subr.mxu0 %v3509
    %3541 = vmatpush1.msra.mxu0 %v3508
    %3542 = vmatprep.subr.mxu0 %v3511
    %3543 = vmatpush1.msra.mxu0 %v3510
    %3544 = vmatprep.subr.mxu0 0.0
    %3545 = vmatpush1.msra.mxu0 0.0
    %3546 = vmatprep.subr.mxu0 0.0
    %3547 = vmatpush1.msra.mxu0 0.0
    %3548 = vmatprep.subr.mxu0 0.0
    %3549 = vmatpush1.msra.mxu0 0.0
    %3550 = vmatprep.subr.mxu0 0.0
    %3551 = vmatpush1.msra.mxu0 0.0
    %3552 = vmatprep.subr.mxu0 0.0
    %3553 = vmatpush1.msra.mxu0 0.0
    %3554 = vmatprep.subr.mxu0 0.0
    %3555 = vmatpush1.msra.mxu0 0.0
    %3556 = vmatprep.subr.mxu0 0.0
    %3557 = vmatpush1.msra.mxu0 0.0
    %3558 = vmatprep.subr.mxu0 0.0
    %3559 = vmatpush1.msra.mxu0 0.0
    %3560 = vmatprep.subr.mxu0 0.0
    %3561 = vmatpush1.msra.mxu0 0.0
    %3562 = vmatprep.subr.mxu0 0.0
    %3563 = vmatpush1.msra.mxu0 0.0
    %3564 = vmatprep.subr.mxu0 0.0
    %3565 = vmatpush1.msra.mxu0 0.0
    %3566 = vmatprep.subr.mxu0 0.0
    %3567 = vmatpush1.msra.mxu0 0.0
    %3568 = vmatprep.subr.mxu0 0.0
    %3569 = vmatpush1.msra.mxu0 0.0
    %3570 = vmatprep.subr.mxu0 0.0
    %3571 = vmatpush1.msra.mxu0 0.0
    %3572 = vmatprep.subr.mxu0 0.0
    %3573 = vmatpush1.msra.mxu0 0.0
    %3574 = vmatprep.subr.mxu0 0.0
    %3575 = vmatpush1.msra.mxu0 0.0
    %3576 = vmatprep.mubr.f32.mxu0 0.0
    %3577 = vmatmul.mubr.f32.gmra.mrb[0].mxu0 %v2841
    %v3578 = vpop.f32.mrb[0].mxu0
    %v3579 = vadd.f32 0.0, %v3578
    %v3580 = vpop.f32.mrb[0].mxu0
    %v3581 = vadd.f32 0.0, %v3580
    %3582 = vdwg.mxu0
    %v3583 = vadd.f32 %v3478, %v3579
    %v3584 = vadd.f32 %v3479, %v3581
    %v3585 = vld [vmem:[%s10 + $0x700] sm:$0xff]
    %v3586 = vld [vmem:[%s10 + $0x708] sm:$0xff]
    %v3587 = vld [vmem:[%s10 + $0x710] sm:$0xff]
    %v3588 = vld [vmem:[%s10 + $0x718] sm:$0xff]
    %v3589 = vld [vmem:[%s10 + $0x720] sm:$0xff]
    %v3590 = vld [vmem:[%s10 + $0x728] sm:$0xff]
    %v3591 = vld [vmem:[%s10 + $0x730] sm:$0xff]
    %v3592 = vld [vmem:[%s10 + $0x738] sm:$0xff]
    %v3593 = vld [vmem:[%s10 + $0x740] sm:$0xff]
    %v3594 = vld [vmem:[%s10 + $0x748] sm:$0xff]
    %v3595 = vld [vmem:[%s10 + $0x750] sm:$0xff]
    %v3596 = vld [vmem:[%s10 + $0x758] sm:$0xff]
    %v3597 = vld [vmem:[%s10 + $0x760] sm:$0xff]
    %v3598 = vld [vmem:[%s10 + $0x768] sm:$0xff]
    %v3599 = vld [vmem:[%s10 + $0x770] sm:$0xff]
    %v3600 = vld [vmem:[%s10 + $0x778] sm:$0xff]
    %v3601 = vld [vmem:[%s10 + $0x780] sm:$0xff]
    %v3602 = vld [vmem:[%s10 + $0x788] sm:$0xff]
    %v3603 = vld [vmem:[%s10 + $0x790] sm:$0xff]
    %v3604 = vld [vmem:[%s10 + $0x798] sm:$0xff]
    %v3605 = vld [vmem:[%s10 + $0x7a0] sm:$0xff]
    %v3606 = vld [vmem:[%s10 + $0x7a8] sm:$0xff]
    %v3607 = vld [vmem:[%s10 + $0x7b0] sm:$0xff]
    %v3608 = vld [vmem:[%s10 + $0x7b8] sm:$0xff]
    %v3609 = vld [vmem:[%s10 + $0x7c0] sm:$0xff]
    %v3610 = vld [vmem:[%s10 + $0x7c8] sm:$0xff]
    %v3611 = vld [vmem:[%s10 + $0x7d0] sm:$0xff]
    %v3612 = vld [vmem:[%s10 + $0x7d8] sm:$0xff]
    %v3613 = vld [vmem:[%s10 + $0x7e0] sm:$0xff]
    %v3614 = vld [vmem:[%s10 + $0x7e8] sm:$0xff]
    %v3615 = vld [vmem:[%s10 + $0x7f0] sm:$0xff]
    %v3616 = vld [vmem:[%s10 + $0x7f8] sm:$0xff]
    %3617 = vmatprep.subr.mxu0 %v3586
    %3618 = vmatpush1.msra.mxu0 %v3585
    %3619 = vmatprep.subr.mxu0 %v3588
    %3620 = vmatpush1.msra.mxu0 %v3587
    %3621 = vmatprep.subr.mxu0 %v3590
    %3622 = vmatpush1.msra.mxu0 %v3589
    %3623 = vmatprep.subr.mxu0 %v3592
    %3624 = vmatpush1.msra.mxu0 %v3591
    %3625 = vmatprep.subr.mxu0 %v3594
    %3626 = vmatpush1.msra.mxu0 %v3593
    %3627 = vmatprep.subr.mxu0 %v3596
    %3628 = vmatpush1.msra.mxu0 %v3595
    %3629 = vmatprep.subr.mxu0 %v3598
    %3630 = vmatpush1.msra.mxu0 %v3597
    %3631 = vmatprep.subr.mxu0 %v3600
    %3632 = vmatpush1.msra.mxu0 %v3599
    %3633 = vmatprep.subr.mxu0 %v3602
    %3634 = vmatpush1.msra.mxu0 %v3601
    %3635 = vmatprep.subr.mxu0 %v3604
    %3636 = vmatpush1.msra.mxu0 %v3603
    %3637 = vmatprep.subr.mxu0 %v3606
    %3638 = vmatpush1.msra.mxu0 %v3605
    %3639 = vmatprep.subr.mxu0 %v3608
    %3640 = vmatpush1.msra.mxu0 %v3607
    %3641 = vmatprep.subr.mxu0 %v3610
    %3642 = vmatpush1.msra.mxu0 %v3609
    %3643 = vmatprep.subr.mxu0 %v3612
    %3644 = vmatpush1.msra.mxu0 %v3611
    %3645 = vmatprep.subr.mxu0 %v3614
    %3646 = vmatpush1.msra.mxu0 %v3613
    %3647 = vmatprep.subr.mxu0 %v3616
    %3648 = vmatpush1.msra.mxu0 %v3615
    %3649 = vmatprep.subr.mxu0 0.0
    %3650 = vmatpush1.msra.mxu0 0.0
    %3651 = vmatprep.subr.mxu0 0.0
    %3652 = vmatpush1.msra.mxu0 0.0
    %3653 = vmatprep.subr.mxu0 0.0
    %3654 = vmatpush1.msra.mxu0 0.0
    %3655 = vmatprep.subr.mxu0 0.0
    %3656 = vmatpush1.msra.mxu0 0.0
    %3657 = vmatprep.subr.mxu0 0.0
    %3658 = vmatpush1.msra.mxu0 0.0
    %3659 = vmatprep.subr.mxu0 0.0
    %3660 = vmatpush1.msra.mxu0 0.0
    %3661 = vmatprep.subr.mxu0 0.0
    %3662 = vmatpush1.msra.mxu0 0.0
    %3663 = vmatprep.subr.mxu0 0.0
    %3664 = vmatpush1.msra.mxu0 0.0
    %3665 = vmatprep.subr.mxu0 0.0
    %3666 = vmatpush1.msra.mxu0 0.0
    %3667 = vmatprep.subr.mxu0 0.0
    %3668 = vmatpush1.msra.mxu0 0.0
    %3669 = vmatprep.subr.mxu0 0.0
    %3670 = vmatpush1.msra.mxu0 0.0
    %3671 = vmatprep.subr.mxu0 0.0
    %3672 = vmatpush1.msra.mxu0 0.0
    %3673 = vmatprep.subr.mxu0 0.0
    %3674 = vmatpush1.msra.mxu0 0.0
    %3675 = vmatprep.subr.mxu0 0.0
    %3676 = vmatpush1.msra.mxu0 0.0
    %3677 = vmatprep.subr.mxu0 0.0
    %3678 = vmatpush1.msra.mxu0 0.0
    %3679 = vmatprep.subr.mxu0 0.0
    %3680 = vmatpush1.msra.mxu0 0.0
    %3681 = vmatprep.mubr.f32.mxu0 0.0
    %3682 = vmatmul.mubr.f32.gmra.mrb[0].mxu0 %v2846
    %v3683 = vpop.f32.mrb[0].mxu0
    %v3684 = vadd.f32 0.0, %v3683
    %v3685 = vpop.f32.mrb[0].mxu0
    %v3686 = vadd.f32 0.0, %v3685
    %3687 = vdwg.mxu0
    %v3688 = vadd.f32 %v3583, %v3684
    %v3689 = vadd.f32 %v3584, %v3686
    %v3690 = vld [vmem:[%s10 + $0x800] sm:$0xff]
    %v3691 = vld [vmem:[%s10 + $0x808] sm:$0xff]
    %v3692 = vld [vmem:[%s10 + $0x810] sm:$0xff]
    %v3693 = vld [vmem:[%s10 + $0x818] sm:$0xff]
    %v3694 = vld [vmem:[%s10 + $0x820] sm:$0xff]
    %v3695 = vld [vmem:[%s10 + $0x828] sm:$0xff]
    %v3696 = vld [vmem:[%s10 + $0x830] sm:$0xff]
    %v3697 = vld [vmem:[%s10 + $0x838] sm:$0xff]
    %v3698 = vld [vmem:[%s10 + $0x840] sm:$0xff]
    %v3699 = vld [vmem:[%s10 + $0x848] sm:$0xff]
    %v3700 = vld [vmem:[%s10 + $0x850] sm:$0xff]
    %v3701 = vld [vmem:[%s10 + $0x858] sm:$0xff]
    %v3702 = vld [vmem:[%s10 + $0x860] sm:$0xff]
    %v3703 = vld [vmem:[%s10 + $0x868] sm:$0xff]
    %v3704 = vld [vmem:[%s10 + $0x870] sm:$0xff]
    %v3705 = vld [vmem:[%s10 + $0x878] sm:$0xff]
    %v3706 = vld [vmem:[%s10 + $0x880] sm:$0xff]
    %v3707 = vld [vmem:[%s10 + $0x888] sm:$0xff]
    %v3708 = vld [vmem:[%s10 + $0x890] sm:$0xff]
    %v3709 = vld [vmem:[%s10 + $0x898] sm:$0xff]
    %v3710 = vld [vmem:[%s10 + $0x8a0] sm:$0xff]
    %v3711 = vld [vmem:[%s10 + $0x8a8] sm:$0xff]
    %v3712 = vld [vmem:[%s10 + $0x8b0] sm:$0xff]
    %v3713 = vld [vmem:[%s10 + $0x8b8] sm:$0xff]
    %v3714 = vld [vmem:[%s10 + $0x8c0] sm:$0xff]
    %v3715 = vld [vmem:[%s10 + $0x8c8] sm:$0xff]
    %v3716 = vld [vmem:[%s10 + $0x8d0] sm:$0xff]
    %v3717 = vld [vmem:[%s10 + $0x8d8] sm:$0xff]
    %v3718 = vld [vmem:[%s10 + $0x8e0] sm:$0xff]
    %v3719 = vld [vmem:[%s10 + $0x8e8] sm:$0xff]
    %v3720 = vld [vmem:[%s10 + $0x8f0] sm:$0xff]
    %v3721 = vld [vmem:[%s10 + $0x8f8] sm:$0xff]
    %3722 = vmatprep.subr.mxu0 %v3691
    %3723 = vmatpush1.msra.mxu0 %v3690
    %3724 = vmatprep.subr.mxu0 %v3693
    %3725 = vmatpush1.msra.mxu0 %v3692
    %3726 = vmatprep.subr.mxu0 %v3695
    %3727 = vmatpush1.msra.mxu0 %v3694
    %3728 = vmatprep.subr.mxu0 %v3697
    %3729 = vmatpush1.msra.mxu0 %v3696
    %3730 = vmatprep.subr.mxu0 %v3699
    %3731 = vmatpush1.msra.mxu0 %v3698
    %3732 = vmatprep.subr.mxu0 %v3701
    %3733 = vmatpush1.msra.mxu0 %v3700
    %3734 = vmatprep.subr.mxu0 %v3703
    %3735 = vmatpush1.msra.mxu0 %v3702
    %3736 = vmatprep.subr.mxu0 %v3705
    %3737 = vmatpush1.msra.mxu0 %v3704
    %3738 = vmatprep.subr.mxu0 %v3707
    %3739 = vmatpush1.msra.mxu0 %v3706
    %3740 = vmatprep.subr.mxu0 %v3709
    %3741 = vmatpush1.msra.mxu0 %v3708
    %3742 = vmatprep.subr.mxu0 %v3711
    %3743 = vmatpush1.msra.mxu0 %v3710
    %3744 = vmatprep.subr.mxu0 %v3713
    %3745 = vmatpush1.msra.mxu0 %v3712
    %3746 = vmatprep.subr.mxu0 %v3715
    %3747 = vmatpush1.msra.mxu0 %v3714
    %3748 = vmatprep.subr.mxu0 %v3717
    %3749 = vmatpush1.msra.mxu0 %v3716
    %3750 = vmatprep.subr.mxu0 %v3719
    %3751 = vmatpush1.msra.mxu0 %v3718
    %3752 = vmatprep.subr.mxu0 %v3721
    %3753 = vmatpush1.msra.mxu0 %v3720
    %3754 = vmatprep.subr.mxu0 0.0
    %3755 = vmatpush1.msra.mxu0 0.0
    %3756 = vmatprep.subr.mxu0 0.0
    %3757 = vmatpush1.msra.mxu0 0.0
    %3758 = vmatprep.subr.mxu0 0.0
    %3759 = vmatpush1.msra.mxu0 0.0
    %3760 = vmatprep.subr.mxu0 0.0
    %3761 = vmatpush1.msra.mxu0 0.0
    %3762 = vmatprep.subr.mxu0 0.0
    %3763 = vmatpush1.msra.mxu0 0.0
    %3764 = vmatprep.subr.mxu0 0.0
    %3765 = vmatpush1.msra.mxu0 0.0
    %3766 = vmatprep.subr.mxu0 0.0
    %3767 = vmatpush1.msra.mxu0 0.0
    %3768 = vmatprep.subr.mxu0 0.0
    %3769 = vmatpush1.msra.mxu0 0.0
    %3770 = vmatprep.subr.mxu0 0.0
    %3771 = vmatpush1.msra.mxu0 0.0
    %3772 = vmatprep.subr.mxu0 0.0
    %3773 = vmatpush1.msra.mxu0 0.0
    %3774 = vmatprep.subr.mxu0 0.0
    %3775 = vmatpush1.msra.mxu0 0.0
    %3776 = vmatprep.subr.mxu0 0.0
    %3777 = vmatpush1.msra.mxu0 0.0
    %3778 = vmatprep.subr.mxu0 0.0
    %3779 = vmatpush1.msra.mxu0 0.0
    %3780 = vmatprep.subr.mxu0 0.0
    %3781 = vmatpush1.msra.mxu0 0.0
    %3782 = vmatprep.subr.mxu0 0.0
    %3783 = vmatpush1.msra.mxu0 0.0
    %3784 = vmatprep.subr.mxu0 0.0
    %3785 = vmatpush1.msra.mxu0 0.0
    %3786 = vmatprep.mubr.f32.mxu0 0.0
    %3787 = vmatmul.mubr.f32.gmra.mrb[0].mxu0 %v2851
    %v3788 = vpop.f32.mrb[0].mxu0
    %v3789 = vadd.f32 0.0, %v3788
    %v3790 = vpop.f32.mrb[0].mxu0
    %v3791 = vadd.f32 0.0, %v3790
    %3792 = vdwg.mxu0
    %v3793 = vadd.f32 %v3688, %v3789
    %v3794 = vadd.f32 %v3689, %v3791
    %v3795 = vld [vmem:[%s11] sm:$0x3]
    %v3797 = vlaneseq
    %v3798 = vshrl.u32 %v3797, 7
    %v3799 = vsub.s32 0, %v3798
    %v3800 = vrot.slane %v3795, %v3799
    %v3801 = vlaneseq
    %v3802 = vshrl.u32 %v3801, 7
    %v3803 = vsub.s32 1, %v3802
    %v3804 = vrot.slane %v3795, %v3803
    %v3807 = vadd.f32 %v3793, %v3800
    %v3808 = vadd.f32 %v3794, %v3804
    %v3809 = vmax.f32 %v3807, 0.0
    %v3810 = vmax.f32 %v3808, 0.0
    %vm3811 = vcmp.gt.f32.partialorder %v3807, 0.0
    %vm3812 = vcmp.gt.f32.partialorder %v3808, 0.0
    %v3813 = vmin.f32 %v3807, 0.0
    %v3814 = vmin.f32 %v3808, 0.0
    %v3815 = vmul.f32 %v3813, 1.442695
    %v3816 = vpow.pop %v3815
    %v3817 = vmul.f32 %v3814, 1.442695
    %v3818 = vpow.pop %v3817
    %v3819 = vsub.f32 %v3816, 1.0
    %v3820 = vsub.f32 %v3818, 1.0
    %v3821 = vsel %vm3811, %v3807, %v3819
    %v3822 = vsel %vm3812, %v3808, %v3820
    %v3823 = vadd.s32 %v446, 128
    %vm3824 = vcmp.lt.s32.totalorder %v446, 128
    %vm3825 = vcmp.lt.s32.totalorder %v3823, 128
    %v3826 = vsel %vm3824, %v3809, %v3821
    %v3827 = vsel %vm3825, %v3810, %v3822
    %3828 = vst [vmem:[#allocation2] sm:$0xff] %v3826
    %3829 = vst [vmem:[#allocation2 + $0x8] sm:$0xff] %v3827
    %v3830 = vld [vmem:[#allocation2] sm:$0x3]
    %v3831 = vld [vmem:[%s12] sm:$0xff]
    %v3832 = vld [vmem:[%s12 + $0x8] sm:$0xff]
    %v3833 = vld [vmem:[%s12 + $0x10] sm:$0xff]
    %v3834 = vld [vmem:[%s12 + $0x18] sm:$0xff]
    %v3835 = vld [vmem:[%s12 + $0x20] sm:$0xff]
    %v3836 = vld [vmem:[%s12 + $0x28] sm:$0xff]
    %v3837 = vld [vmem:[%s12 + $0x30] sm:$0xff]
    %v3838 = vld [vmem:[%s12 + $0x38] sm:$0xff]
    %v3839 = vld [vmem:[%s12 + $0x40] sm:$0xff]
    %v3840 = vld [vmem:[%s12 + $0x48] sm:$0xff]
    %v3841 = vld [vmem:[%s12 + $0x50] sm:$0xff]
    %v3842 = vld [vmem:[%s12 + $0x58] sm:$0xff]
    %v3843 = vld [vmem:[%s12 + $0x60] sm:$0xff]
    %v3844 = vld [vmem:[%s12 + $0x68] sm:$0xff]
    %v3845 = vld [vmem:[%s12 + $0x70] sm:$0xff]
    %v3846 = vld [vmem:[%s12 + $0x78] sm:$0xff]
    %v3847 = vld [vmem:[#allocation2 + $0x8] sm:$0x3]
    %v3848 = vld [vmem:[%s14] sm:$0xff]
    %v3849 = vld [vmem:[%s14 + $0x8] sm:$0xff]
    %v3850 = vld [vmem:[%s14 + $0x10] sm:$0xff]
    %v3851 = vld [vmem:[%s14 + $0x18] sm:$0xff]
    %v3852 = vld [vmem:[%s14 + $0x20] sm:$0xff]
    %v3853 = vld [vmem:[%s14 + $0x28] sm:$0xff]
    %v3854 = vld [vmem:[%s14 + $0x30] sm:$0xff]
    %v3855 = vld [vmem:[%s14 + $0x38] sm:$0xff]
    %v3856 = vld [vmem:[%s14 + $0x40] sm:$0xff]
    %v3857 = vld [vmem:[%s14 + $0x48] sm:$0xff]
    %v3858 = vld [vmem:[%s14 + $0x50] sm:$0xff]
    %v3859 = vld [vmem:[%s14 + $0x58] sm:$0xff]
    %v3860 = vld [vmem:[%s14 + $0x60] sm:$0xff]
    %v3861 = vld [vmem:[%s14 + $0x68] sm:$0xff]
    %v3862 = vld [vmem:[%s14 + $0x70] sm:$0xff]
    %v3863 = vld [vmem:[%s14 + $0x78] sm:$0xff]
    %v3864 = vld [vmem:[#allocation2] sm:$0xc]
    %v3865 = vld [vmem:[%s12 + $0x80] sm:$0xff]
    %v3866 = vld [vmem:[%s12 + $0x88] sm:$0xff]
    %v3867 = vld [vmem:[%s12 + $0x90] sm:$0xff]
    %v3868 = vld [vmem:[%s12 + $0x98] sm:$0xff]
    %v3869 = vld [vmem:[%s12 + $0xa0] sm:$0xff]
    %v3870 = vld [vmem:[%s12 + $0xa8] sm:$0xff]
    %v3871 = vld [vmem:[%s12 + $0xb0] sm:$0xff]
    %v3872 = vld [vmem:[%s12 + $0xb8] sm:$0xff]
    %v3873 = vld [vmem:[%s12 + $0xc0] sm:$0xff]
    %v3874 = vld [vmem:[%s12 + $0xc8] sm:$0xff]
    %v3875 = vld [vmem:[%s12 + $0xd0] sm:$0xff]
    %v3876 = vld [vmem:[%s12 + $0xd8] sm:$0xff]
    %v3877 = vld [vmem:[%s12 + $0xe0] sm:$0xff]
    %v3878 = vld [vmem:[%s12 + $0xe8] sm:$0xff]
    %v3879 = vld [vmem:[%s12 + $0xf0] sm:$0xff]
    %v3880 = vld [vmem:[%s12 + $0xf8] sm:$0xff]
    %v3882 = vrot.slane %v3864, 2
    %3884 = vmatprep.subr.mxu0 0.0
    %3885 = vmatpush1.msra.mxu0 %v3865
    %3886 = vmatprep.subr.mxu0 0.0
    %3887 = vmatpush1.msra.mxu0 %v3866
    %3888 = vmatprep.subr.mxu0 0.0
    %3889 = vmatpush1.msra.mxu0 %v3867
    %3890 = vmatprep.subr.mxu0 0.0
    %3891 = vmatpush1.msra.mxu0 %v3868
    %3892 = vmatprep.subr.mxu0 0.0
    %3893 = vmatpush1.msra.mxu0 %v3869
    %3894 = vmatprep.subr.mxu0 0.0
    %3895 = vmatpush1.msra.mxu0 %v3870
    %3896 = vmatprep.subr.mxu0 0.0
    %3897 = vmatpush1.msra.mxu0 %v3871
    %3898 = vmatprep.subr.mxu0 0.0
    %3899 = vmatpush1.msra.mxu0 %v3872
    %3900 = vmatprep.subr.mxu0 0.0
    %3901 = vmatpush1.msra.mxu0 %v3873
    %3902 = vmatprep.subr.mxu0 0.0
    %3903 = vmatpush1.msra.mxu0 %v3874
    %3904 = vmatprep.subr.mxu0 0.0
    %3905 = vmatpush1.msra.mxu0 %v3875
    %3906 = vmatprep.subr.mxu0 0.0
    %3907 = vmatpush1.msra.mxu0 %v3876
    %3908 = vmatprep.subr.mxu0 0.0
    %3909 = vmatpush1.msra.mxu0 %v3877
    %3910 = vmatprep.subr.mxu0 0.0
    %3911 = vmatpush1.msra.mxu0 %v3878
    %3912 = vmatprep.subr.mxu0 0.0
    %3913 = vmatpush1.msra.mxu0 %v3879
    %3914 = vmatprep.subr.mxu0 0.0
    %3915 = vmatpush1.msra.mxu0 %v3880
    %3916 = vmatprep.subr.mxu0 0.0
    %3917 = vmatpush1.msra.mxu0 0.0
    %3918 = vmatprep.subr.mxu0 0.0
    %3919 = vmatpush1.msra.mxu0 0.0
    %3920 = vmatprep.subr.mxu0 0.0
    %3921 = vmatpush1.msra.mxu0 0.0
    %3922 = vmatprep.subr.mxu0 0.0
    %3923 = vmatpush1.msra.mxu0 0.0
    %3924 = vmatprep.subr.mxu0 0.0
    %3925 = vmatpush1.msra.mxu0 0.0
    %3926 = vmatprep.subr.mxu0 0.0
    %3927 = vmatpush1.msra.mxu0 0.0
    %3928 = vmatprep.subr.mxu0 0.0
    %3929 = vmatpush1.msra.mxu0 0.0
    %3930 = vmatprep.subr.mxu0 0.0
    %3931 = vmatpush1.msra.mxu0 0.0
    %3932 = vmatprep.subr.mxu0 0.0
    %3933 = vmatpush1.msra.mxu0 0.0
    %3934 = vmatprep.subr.mxu0 0.0
    %3935 = vmatpush1.msra.mxu0 0.0
    %3936 = vmatprep.subr.mxu0 0.0
    %3937 = vmatpush1.msra.mxu0 0.0
    %3938 = vmatprep.subr.mxu0 0.0
    %3939 = vmatpush1.msra.mxu0 0.0
    %3940 = vmatprep.subr.mxu0 0.0
    %3941 = vmatpush1.msra.mxu0 0.0
    %3942 = vmatprep.subr.mxu0 0.0
    %3943 = vmatpush1.msra.mxu0 0.0
    %3944 = vmatprep.subr.mxu0 0.0
    %3945 = vmatpush1.msra.mxu0 0.0
    %3946 = vmatprep.subr.mxu0 0.0
    %3947 = vmatpush1.msra.mxu0 0.0
    %3948 = vmatprep.mubr.f32.mxu0 0.0
    %3949 = vmatmul.mubr.f32.gmra.mrb[0].mxu0 %v3882
    %v3950 = vpop.f32.mrb[0].mxu0
    %v3951 = vadd.f32 0.0, %v3950
    %v3952 = vpop.f32.mrb[0].mxu0
    %3953 = vdwg.mxu0
    %3954 = vmatprep.subr.mxu0 0.0
    %3955 = vmatpush1.msra.mxu0 %v3831
    %3956 = vmatprep.subr.mxu0 0.0
    %3957 = vmatpush1.msra.mxu0 %v3832
    %3958 = vmatprep.subr.mxu0 0.0
    %3959 = vmatpush1.msra.mxu0 %v3833
    %3960 = vmatprep.subr.mxu0 0.0
    %3961 = vmatpush1.msra.mxu0 %v3834
    %3962 = vmatprep.subr.mxu0 0.0
    %3963 = vmatpush1.msra.mxu0 %v3835
    %3964 = vmatprep.subr.mxu0 0.0
    %3965 = vmatpush1.msra.mxu0 %v3836
    %3966 = vmatprep.subr.mxu0 0.0
    %3967 = vmatpush1.msra.mxu0 %v3837
    %3968 = vmatprep.subr.mxu0 0.0
    %3969 = vmatpush1.msra.mxu0 %v3838
    %3970 = vmatprep.subr.mxu0 0.0
    %3971 = vmatpush1.msra.mxu0 %v3839
    %3972 = vmatprep.subr.mxu0 0.0
    %3973 = vmatpush1.msra.mxu0 %v3840
    %3974 = vmatprep.subr.mxu0 0.0
    %3975 = vmatpush1.msra.mxu0 %v3841
    %3976 = vmatprep.subr.mxu0 0.0
    %3977 = vmatpush1.msra.mxu0 %v3842
    %3978 = vmatprep.subr.mxu0 0.0
    %3979 = vmatpush1.msra.mxu0 %v3843
    %3980 = vmatprep.subr.mxu0 0.0
    %3981 = vmatpush1.msra.mxu0 %v3844
    %3982 = vmatprep.subr.mxu0 0.0
    %3983 = vmatpush1.msra.mxu0 %v3845
    %3984 = vmatprep.subr.mxu0 0.0
    %3985 = vmatpush1.msra.mxu0 %v3846
    %3986 = vmatprep.subr.mxu0 0.0
    %3987 = vmatpush1.msra.mxu0 0.0
    %3988 = vmatprep.subr.mxu0 0.0
    %3989 = vmatpush1.msra.mxu0 0.0
    %3990 = vmatprep.subr.mxu0 0.0
    %3991 = vmatpush1.msra.mxu0 0.0
    %3992 = vmatprep.subr.mxu0 0.0
    %3993 = vmatpush1.msra.mxu0 0.0
    %3994 = vmatprep.subr.mxu0 0.0
    %3995 = vmatpush1.msra.mxu0 0.0
    %3996 = vmatprep.subr.mxu0 0.0
    %3997 = vmatpush1.msra.mxu0 0.0
    %3998 = vmatprep.subr.mxu0 0.0
    %3999 = vmatpush1.msra.mxu0 0.0
    %4000 = vmatprep.subr.mxu0 0.0
    %4001 = vmatpush1.msra.mxu0 0.0
    %4002 = vmatprep.subr.mxu0 0.0
    %4003 = vmatpush1.msra.mxu0 0.0
    %4004 = vmatprep.subr.mxu0 0.0
    %4005 = vmatpush1.msra.mxu0 0.0
    %4006 = vmatprep.subr.mxu0 0.0
    %4007 = vmatpush1.msra.mxu0 0.0
    %4008 = vmatprep.subr.mxu0 0.0
    %4009 = vmatpush1.msra.mxu0 0.0
    %4010 = vmatprep.subr.mxu0 0.0
    %4011 = vmatpush1.msra.mxu0 0.0
    %4012 = vmatprep.subr.mxu0 0.0
    %4013 = vmatpush1.msra.mxu0 0.0
    %4014 = vmatprep.subr.mxu0 0.0
    %4015 = vmatpush1.msra.mxu0 0.0
    %4016 = vmatprep.subr.mxu0 0.0
    %4017 = vmatpush1.msra.mxu0 0.0
    %4018 = vmatprep.mubr.f32.mxu0 0.0
    %4019 = vmatmul.mubr.f32.gmra.mrb[0].mxu0 %v3830
    %v4020 = vpop.f32.mrb[0].mxu0
    %v4021 = vadd.f32 %v3951, %v4020
    %v4022 = vpop.f32.mrb[0].mxu0
    %4023 = vdwg.mxu0
    %v4024 = vld [vmem:[#allocation2 + $0x8] sm:$0xc]
    %v4025 = vld [vmem:[%s14 + $0x80] sm:$0xff]
    %v4026 = vld [vmem:[%s14 + $0x88] sm:$0xff]
    %v4027 = vld [vmem:[%s14 + $0x90] sm:$0xff]
    %v4028 = vld [vmem:[%s14 + $0x98] sm:$0xff]
    %v4029 = vld [vmem:[%s14 + $0xa0] sm:$0xff]
    %v4030 = vld [vmem:[%s14 + $0xa8] sm:$0xff]
    %v4031 = vld [vmem:[%s14 + $0xb0] sm:$0xff]
    %v4032 = vld [vmem:[%s14 + $0xb8] sm:$0xff]
    %v4033 = vld [vmem:[%s14 + $0xc0] sm:$0xff]
    %v4034 = vld [vmem:[%s14 + $0xc8] sm:$0xff]
    %v4035 = vld [vmem:[%s14 + $0xd0] sm:$0xff]
    %v4036 = vld [vmem:[%s14 + $0xd8] sm:$0xff]
    %v4037 = vld [vmem:[%s14 + $0xe0] sm:$0xff]
    %v4038 = vld [vmem:[%s14 + $0xe8] sm:$0xff]
    %v4039 = vld [vmem:[%s14 + $0xf0] sm:$0xff]
    %v4040 = vld [vmem:[%s14 + $0xf8] sm:$0xff]
    %v4042 = vrot.slane %v4024, 2
    %4044 = vmatprep.subr.mxu0 0.0
    %4045 = vmatpush1.msra.mxu0 %v4025
    %4046 = vmatprep.subr.mxu0 0.0
    %4047 = vmatpush1.msra.mxu0 %v4026
    %4048 = vmatprep.subr.mxu0 0.0
    %4049 = vmatpush1.msra.mxu0 %v4027
    %4050 = vmatprep.subr.mxu0 0.0
    %4051 = vmatpush1.msra.mxu0 %v4028
    %4052 = vmatprep.subr.mxu0 0.0
    %4053 = vmatpush1.msra.mxu0 %v4029
    %4054 = vmatprep.subr.mxu0 0.0
    %4055 = vmatpush1.msra.mxu0 %v4030
    %4056 = vmatprep.subr.mxu0 0.0
    %4057 = vmatpush1.msra.mxu0 %v4031
    %4058 = vmatprep.subr.mxu0 0.0
    %4059 = vmatpush1.msra.mxu0 %v4032
    %4060 = vmatprep.subr.mxu0 0.0
    %4061 = vmatpush1.msra.mxu0 %v4033
    %4062 = vmatprep.subr.mxu0 0.0
    %4063 = vmatpush1.msra.mxu0 %v4034
    %4064 = vmatprep.subr.mxu0 0.0
    %4065 = vmatpush1.msra.mxu0 %v4035
    %4066 = vmatprep.subr.mxu0 0.0
    %4067 = vmatpush1.msra.mxu0 %v4036
    %4068 = vmatprep.subr.mxu0 0.0
    %4069 = vmatpush1.msra.mxu0 %v4037
    %4070 = vmatprep.subr.mxu0 0.0
    %4071 = vmatpush1.msra.mxu0 %v4038
    %4072 = vmatprep.subr.mxu0 0.0
    %4073 = vmatpush1.msra.mxu0 %v4039
    %4074 = vmatprep.subr.mxu0 0.0
    %4075 = vmatpush1.msra.mxu0 %v4040
    %4076 = vmatprep.subr.mxu0 0.0
    %4077 = vmatpush1.msra.mxu0 0.0
    %4078 = vmatprep.subr.mxu0 0.0
    %4079 = vmatpush1.msra.mxu0 0.0
    %4080 = vmatprep.subr.mxu0 0.0
    %4081 = vmatpush1.msra.mxu0 0.0
    %4082 = vmatprep.subr.mxu0 0.0
    %4083 = vmatpush1.msra.mxu0 0.0
    %4084 = vmatprep.subr.mxu0 0.0
    %4085 = vmatpush1.msra.mxu0 0.0
    %4086 = vmatprep.subr.mxu0 0.0
    %4087 = vmatpush1.msra.mxu0 0.0
    %4088 = vmatprep.subr.mxu0 0.0
    %4089 = vmatpush1.msra.mxu0 0.0
    %4090 = vmatprep.subr.mxu0 0.0
    %4091 = vmatpush1.msra.mxu0 0.0
    %4092 = vmatprep.subr.mxu0 0.0
    %4093 = vmatpush1.msra.mxu0 0.0
    %4094 = vmatprep.subr.mxu0 0.0
    %4095 = vmatpush1.msra.mxu0 0.0
    %4096 = vmatprep.subr.mxu0 0.0
    %4097 = vmatpush1.msra.mxu0 0.0
    %4098 = vmatprep.subr.mxu0 0.0
    %4099 = vmatpush1.msra.mxu0 0.0
    %4100 = vmatprep.subr.mxu0 0.0
    %4101 = vmatpush1.msra.mxu0 0.0
    %4102 = vmatprep.subr.mxu0 0.0
    %4103 = vmatpush1.msra.mxu0 0.0
    %4104 = vmatprep.subr.mxu0 0.0
    %4105 = vmatpush1.msra.mxu0 0.0
    %4106 = vmatprep.subr.mxu0 0.0
    %4107 = vmatpush1.msra.mxu0 0.0
    %4108 = vmatprep.mubr.f32.mxu0 0.0
    %4109 = vmatmul.mubr.f32.gmra.mrb[0].mxu0 %v4042
    %v4110 = vpop.f32.mrb[0].mxu0
    %v4111 = vadd.f32 0.0, %v4110
    %v4112 = vpop.f32.mrb[0].mxu0
    %4113 = vdwg.mxu0
    %4114 = vmatprep.subr.mxu0 0.0
    %4115 = vmatpush1.msra.mxu0 %v3848
    %4116 = vmatprep.subr.mxu0 0.0
    %4117 = vmatpush1.msra.mxu0 %v3849
    %4118 = vmatprep.subr.mxu0 0.0
    %4119 = vmatpush1.msra.mxu0 %v3850
    %4120 = vmatprep.subr.mxu0 0.0
    %4121 = vmatpush1.msra.mxu0 %v3851
    %4122 = vmatprep.subr.mxu0 0.0
    %4123 = vmatpush1.msra.mxu0 %v3852
    %4124 = vmatprep.subr.mxu0 0.0
    %4125 = vmatpush1.msra.mxu0 %v3853
    %4126 = vmatprep.subr.mxu0 0.0
    %4127 = vmatpush1.msra.mxu0 %v3854
    %4128 = vmatprep.subr.mxu0 0.0
    %4129 = vmatpush1.msra.mxu0 %v3855
    %4130 = vmatprep.subr.mxu0 0.0
    %4131 = vmatpush1.msra.mxu0 %v3856
    %4132 = vmatprep.subr.mxu0 0.0
    %4133 = vmatpush1.msra.mxu0 %v3857
    %4134 = vmatprep.subr.mxu0 0.0
    %4135 = vmatpush1.msra.mxu0 %v3858
    %4136 = vmatprep.subr.mxu0 0.0
    %4137 = vmatpush1.msra.mxu0 %v3859
    %4138 = vmatprep.subr.mxu0 0.0
    %4139 = vmatpush1.msra.mxu0 %v3860
    %4140 = vmatprep.subr.mxu0 0.0
    %4141 = vmatpush1.msra.mxu0 %v3861
    %4142 = vmatprep.subr.mxu0 0.0
    %4143 = vmatpush1.msra.mxu0 %v3862
    %4144 = vmatprep.subr.mxu0 0.0
    %4145 = vmatpush1.msra.mxu0 %v3863
    %4146 = vmatprep.subr.mxu0 0.0
    %4147 = vmatpush1.msra.mxu0 0.0
    %4148 = vmatprep.subr.mxu0 0.0
    %4149 = vmatpush1.msra.mxu0 0.0
    %4150 = vmatprep.subr.mxu0 0.0
    %4151 = vmatpush1.msra.mxu0 0.0
    %4152 = vmatprep.subr.mxu0 0.0
    %4153 = vmatpush1.msra.mxu0 0.0
    %4154 = vmatprep.subr.mxu0 0.0
    %4155 = vmatpush1.msra.mxu0 0.0
    %4156 = vmatprep.subr.mxu0 0.0
    %4157 = vmatpush1.msra.mxu0 0.0
    %4158 = vmatprep.subr.mxu0 0.0
    %4159 = vmatpush1.msra.mxu0 0.0
    %4160 = vmatprep.subr.mxu0 0.0
    %4161 = vmatpush1.msra.mxu0 0.0
    %4162 = vmatprep.subr.mxu0 0.0
    %4163 = vmatpush1.msra.mxu0 0.0
    %4164 = vmatprep.subr.mxu0 0.0
    %4165 = vmatpush1.msra.mxu0 0.0
    %4166 = vmatprep.subr.mxu0 0.0
    %4167 = vmatpush1.msra.mxu0 0.0
    %4168 = vmatprep.subr.mxu0 0.0
    %4169 = vmatpush1.msra.mxu0 0.0
    %4170 = vmatprep.subr.mxu0 0.0
    %4171 = vmatpush1.msra.mxu0 0.0
    %4172 = vmatprep.subr.mxu0 0.0
    %4173 = vmatpush1.msra.mxu0 0.0
    %4174 = vmatprep.subr.mxu0 0.0
    %4175 = vmatpush1.msra.mxu0 0.0
    %4176 = vmatprep.subr.mxu0 0.0
    %4177 = vmatpush1.msra.mxu0 0.0
    %4178 = vmatprep.mubr.f32.mxu0 0.0
    %4179 = vmatmul.mubr.f32.gmra.mrb[0].mxu0 %v3847
    %v4180 = vpop.f32.mrb[0].mxu0
    %v4181 = vadd.f32 %v4111, %v4180
    %v4182 = vpop.f32.mrb[0].mxu0
    %4183 = vdwg.mxu0
    %v4184 = vld [vmem:[#allocation2] sm:$0x30]
    %v4185 = vld [vmem:[%s12 + $0x100] sm:$0xff]
    %v4186 = vld [vmem:[%s12 + $0x108] sm:$0xff]
    %v4187 = vld [vmem:[%s12 + $0x110] sm:$0xff]
    %v4188 = vld [vmem:[%s12 + $0x118] sm:$0xff]
    %v4189 = vld [vmem:[%s12 + $0x120] sm:$0xff]
    %v4190 = vld [vmem:[%s12 + $0x128] sm:$0xff]
    %v4191 = vld [vmem:[%s12 + $0x130] sm:$0xff]
    %v4192 = vld [vmem:[%s12 + $0x138] sm:$0xff]
    %v4193 = vld [vmem:[%s12 + $0x140] sm:$0xff]
    %v4194 = vld [vmem:[%s12 + $0x148] sm:$0xff]
    %v4195 = vld [vmem:[%s12 + $0x150] sm:$0xff]
    %v4196 = vld [vmem:[%s12 + $0x158] sm:$0xff]
    %v4197 = vld [vmem:[%s12 + $0x160] sm:$0xff]
    %v4198 = vld [vmem:[%s12 + $0x168] sm:$0xff]
    %v4199 = vld [vmem:[%s12 + $0x170] sm:$0xff]
    %v4200 = vld [vmem:[%s12 + $0x178] sm:$0xff]
    %v4202 = vrot.slane %v4184, 4
    %4204 = vmatprep.subr.mxu0 0.0
    %4205 = vmatpush1.msra.mxu0 %v4185
    %4206 = vmatprep.subr.mxu0 0.0
    %4207 = vmatpush1.msra.mxu0 %v4186
    %4208 = vmatprep.subr.mxu0 0.0
    %4209 = vmatpush1.msra.mxu0 %v4187
    %4210 = vmatprep.subr.mxu0 0.0
    %4211 = vmatpush1.msra.mxu0 %v4188
    %4212 = vmatprep.subr.mxu0 0.0
    %4213 = vmatpush1.msra.mxu0 %v4189
    %4214 = vmatprep.subr.mxu0 0.0
    %4215 = vmatpush1.msra.mxu0 %v4190
    %4216 = vmatprep.subr.mxu0 0.0
    %4217 = vmatpush1.msra.mxu0 %v4191
    %4218 = vmatprep.subr.mxu0 0.0
    %4219 = vmatpush1.msra.mxu0 %v4192
    %4220 = vmatprep.subr.mxu0 0.0
    %4221 = vmatpush1.msra.mxu0 %v4193
    %4222 = vmatprep.subr.mxu0 0.0
    %4223 = vmatpush1.msra.mxu0 %v4194
    %4224 = vmatprep.subr.mxu0 0.0
    %4225 = vmatpush1.msra.mxu0 %v4195
    %4226 = vmatprep.subr.mxu0 0.0
    %4227 = vmatpush1.msra.mxu0 %v4196
    %4228 = vmatprep.subr.mxu0 0.0
    %4229 = vmatpush1.msra.mxu0 %v4197
    %4230 = vmatprep.subr.mxu0 0.0
    %4231 = vmatpush1.msra.mxu0 %v4198
    %4232 = vmatprep.subr.mxu0 0.0
    %4233 = vmatpush1.msra.mxu0 %v4199
    %4234 = vmatprep.subr.mxu0 0.0
    %4235 = vmatpush1.msra.mxu0 %v4200
    %4236 = vmatprep.subr.mxu0 0.0
    %4237 = vmatpush1.msra.mxu0 0.0
    %4238 = vmatprep.subr.mxu0 0.0
    %4239 = vmatpush1.msra.mxu0 0.0
    %4240 = vmatprep.subr.mxu0 0.0
    %4241 = vmatpush1.msra.mxu0 0.0
    %4242 = vmatprep.subr.mxu0 0.0
    %4243 = vmatpush1.msra.mxu0 0.0
    %4244 = vmatprep.subr.mxu0 0.0
    %4245 = vmatpush1.msra.mxu0 0.0
    %4246 = vmatprep.subr.mxu0 0.0
    %4247 = vmatpush1.msra.mxu0 0.0
    %4248 = vmatprep.subr.mxu0 0.0
    %4249 = vmatpush1.msra.mxu0 0.0
    %4250 = vmatprep.subr.mxu0 0.0
    %4251 = vmatpush1.msra.mxu0 0.0
    %4252 = vmatprep.subr.mxu0 0.0
    %4253 = vmatpush1.msra.mxu0 0.0
    %4254 = vmatprep.subr.mxu0 0.0
    %4255 = vmatpush1.msra.mxu0 0.0
    %4256 = vmatprep.subr.mxu0 0.0
    %4257 = vmatpush1.msra.mxu0 0.0
    %4258 = vmatprep.subr.mxu0 0.0
    %4259 = vmatpush1.msra.mxu0 0.0
    %4260 = vmatprep.subr.mxu0 0.0
    %4261 = vmatpush1.msra.mxu0 0.0
    %4262 = vmatprep.subr.mxu0 0.0
    %4263 = vmatpush1.msra.mxu0 0.0
    %4264 = vmatprep.subr.mxu0 0.0
    %4265 = vmatpush1.msra.mxu0 0.0
    %4266 = vmatprep.subr.mxu0 0.0
    %4267 = vmatpush1.msra.mxu0 0.0
    %4268 = vmatprep.mubr.f32.mxu0 0.0
    %4269 = vmatmul.mubr.f32.gmra.mrb[0].mxu0 %v4202
    %v4270 = vpop.f32.mrb[0].mxu0
    %v4271 = vadd.f32 0.0, %v4270
    %v4272 = vpop.f32.mrb[0].mxu0
    %4273 = vdwg.mxu0
    %v4274 = vadd.f32 %v4021, %v4271
    %v4275 = vld [vmem:[#allocation2 + $0x8] sm:$0x30]
    %v4276 = vld [vmem:[%s14 + $0x100] sm:$0xff]
    %v4277 = vld [vmem:[%s14 + $0x108] sm:$0xff]
    %v4278 = vld [vmem:[%s14 + $0x110] sm:$0xff]
    %v4279 = vld [vmem:[%s14 + $0x118] sm:$0xff]
    %v4280 = vld [vmem:[%s14 + $0x120] sm:$0xff]
    %v4281 = vld [vmem:[%s14 + $0x128] sm:$0xff]
    %v4282 = vld [vmem:[%s14 + $0x130] sm:$0xff]
    %v4283 = vld [vmem:[%s14 + $0x138] sm:$0xff]
    %v4284 = vld [vmem:[%s14 + $0x140] sm:$0xff]
    %v4285 = vld [vmem:[%s14 + $0x148] sm:$0xff]
    %v4286 = vld [vmem:[%s14 + $0x150] sm:$0xff]
    %v4287 = vld [vmem:[%s14 + $0x158] sm:$0xff]
    %v4288 = vld [vmem:[%s14 + $0x160] sm:$0xff]
    %v4289 = vld [vmem:[%s14 + $0x168] sm:$0xff]
    %v4290 = vld [vmem:[%s14 + $0x170] sm:$0xff]
    %v4291 = vld [vmem:[%s14 + $0x178] sm:$0xff]
    %v4293 = vrot.slane %v4275, 4
    %4295 = vmatprep.subr.mxu0 0.0
    %4296 = vmatpush1.msra.mxu0 %v4276
    %4297 = vmatprep.subr.mxu0 0.0
    %4298 = vmatpush1.msra.mxu0 %v4277
    %4299 = vmatprep.subr.mxu0 0.0
    %4300 = vmatpush1.msra.mxu0 %v4278
    %4301 = vmatprep.subr.mxu0 0.0
    %4302 = vmatpush1.msra.mxu0 %v4279
    %4303 = vmatprep.subr.mxu0 0.0
    %4304 = vmatpush1.msra.mxu0 %v4280
    %4305 = vmatprep.subr.mxu0 0.0
    %4306 = vmatpush1.msra.mxu0 %v4281
    %4307 = vmatprep.subr.mxu0 0.0
    %4308 = vmatpush1.msra.mxu0 %v4282
    %4309 = vmatprep.subr.mxu0 0.0
    %4310 = vmatpush1.msra.mxu0 %v4283
    %4311 = vmatprep.subr.mxu0 0.0
    %4312 = vmatpush1.msra.mxu0 %v4284
    %4313 = vmatprep.subr.mxu0 0.0
    %4314 = vmatpush1.msra.mxu0 %v4285
    %4315 = vmatprep.subr.mxu0 0.0
    %4316 = vmatpush1.msra.mxu0 %v4286
    %4317 = vmatprep.subr.mxu0 0.0
    %4318 = vmatpush1.msra.mxu0 %v4287
    %4319 = vmatprep.subr.mxu0 0.0
    %4320 = vmatpush1.msra.mxu0 %v4288
    %4321 = vmatprep.subr.mxu0 0.0
    %4322 = vmatpush1.msra.mxu0 %v4289
    %4323 = vmatprep.subr.mxu0 0.0
    %4324 = vmatpush1.msra.mxu0 %v4290
    %4325 = vmatprep.subr.mxu0 0.0
    %4326 = vmatpush1.msra.mxu0 %v4291
    %4327 = vmatprep.subr.mxu0 0.0
    %4328 = vmatpush1.msra.mxu0 0.0
    %4329 = vmatprep.subr.mxu0 0.0
    %4330 = vmatpush1.msra.mxu0 0.0
    %4331 = vmatprep.subr.mxu0 0.0
    %4332 = vmatpush1.msra.mxu0 0.0
    %4333 = vmatprep.subr.mxu0 0.0
    %4334 = vmatpush1.msra.mxu0 0.0
    %4335 = vmatprep.subr.mxu0 0.0
    %4336 = vmatpush1.msra.mxu0 0.0
    %4337 = vmatprep.subr.mxu0 0.0
    %4338 = vmatpush1.msra.mxu0 0.0
    %4339 = vmatprep.subr.mxu0 0.0
    %4340 = vmatpush1.msra.mxu0 0.0
    %4341 = vmatprep.subr.mxu0 0.0
    %4342 = vmatpush1.msra.mxu0 0.0
    %4343 = vmatprep.subr.mxu0 0.0
    %4344 = vmatpush1.msra.mxu0 0.0
    %4345 = vmatprep.subr.mxu0 0.0
    %4346 = vmatpush1.msra.mxu0 0.0
    %4347 = vmatprep.subr.mxu0 0.0
    %4348 = vmatpush1.msra.mxu0 0.0
    %4349 = vmatprep.subr.mxu0 0.0
    %4350 = vmatpush1.msra.mxu0 0.0
    %4351 = vmatprep.subr.mxu0 0.0
    %4352 = vmatpush1.msra.mxu0 0.0
    %4353 = vmatprep.subr.mxu0 0.0
    %4354 = vmatpush1.msra.mxu0 0.0
    %4355 = vmatprep.subr.mxu0 0.0
    %4356 = vmatpush1.msra.mxu0 0.0
    %4357 = vmatprep.subr.mxu0 0.0
    %4358 = vmatpush1.msra.mxu0 0.0
    %4359 = vmatprep.mubr.f32.mxu0 0.0
    %4360 = vmatmul.mubr.f32.gmra.mrb[0].mxu0 %v4293
    %v4361 = vpop.f32.mrb[0].mxu0
    %v4362 = vadd.f32 0.0, %v4361
    %v4363 = vpop.f32.mrb[0].mxu0
    %4364 = vdwg.mxu0
    %v4365 = vadd.f32 %v4181, %v4362
    %v4366 = vld [vmem:[#allocation2] sm:$0xc0]
    %v4367 = vld [vmem:[%s12 + $0x180] sm:$0xff]
    %v4368 = vld [vmem:[%s12 + $0x188] sm:$0xff]
    %v4369 = vld [vmem:[%s12 + $0x190] sm:$0xff]
    %v4370 = vld [vmem:[%s12 + $0x198] sm:$0xff]
    %v4371 = vld [vmem:[%s12 + $0x1a0] sm:$0xff]
    %v4372 = vld [vmem:[%s12 + $0x1a8] sm:$0xff]
    %v4373 = vld [vmem:[%s12 + $0x1b0] sm:$0xff]
    %v4374 = vld [vmem:[%s12 + $0x1b8] sm:$0xff]
    %v4375 = vld [vmem:[%s12 + $0x1c0] sm:$0xff]
    %v4376 = vld [vmem:[%s12 + $0x1c8] sm:$0xff]
    %v4377 = vld [vmem:[%s12 + $0x1d0] sm:$0xff]
    %v4378 = vld [vmem:[%s12 + $0x1d8] sm:$0xff]
    %v4379 = vld [vmem:[%s12 + $0x1e0] sm:$0xff]
    %v4380 = vld [vmem:[%s12 + $0x1e8] sm:$0xff]
    %v4381 = vld [vmem:[%s12 + $0x1f0] sm:$0xff]
    %v4382 = vld [vmem:[%s12 + $0x1f8] sm:$0xff]
    %v4384 = vrot.slane %v4366, 6
    %4386 = vmatprep.subr.mxu0 0.0
    %4387 = vmatpush1.msra.mxu0 %v4367
    %4388 = vmatprep.subr.mxu0 0.0
    %4389 = vmatpush1.msra.mxu0 %v4368
    %4390 = vmatprep.subr.mxu0 0.0
    %4391 = vmatpush1.msra.mxu0 %v4369
    %4392 = vmatprep.subr.mxu0 0.0
    %4393 = vmatpush1.msra.mxu0 %v4370
    %4394 = vmatprep.subr.mxu0 0.0
    %4395 = vmatpush1.msra.mxu0 %v4371
    %4396 = vmatprep.subr.mxu0 0.0
    %4397 = vmatpush1.msra.mxu0 %v4372
    %4398 = vmatprep.subr.mxu0 0.0
    %4399 = vmatpush1.msra.mxu0 %v4373
    %4400 = vmatprep.subr.mxu0 0.0
    %4401 = vmatpush1.msra.mxu0 %v4374
    %4402 = vmatprep.subr.mxu0 0.0
    %4403 = vmatpush1.msra.mxu0 %v4375
    %4404 = vmatprep.subr.mxu0 0.0
    %4405 = vmatpush1.msra.mxu0 %v4376
    %4406 = vmatprep.subr.mxu0 0.0
    %4407 = vmatpush1.msra.mxu0 %v4377
    %4408 = vmatprep.subr.mxu0 0.0
    %4409 = vmatpush1.msra.mxu0 %v4378
    %4410 = vmatprep.subr.mxu0 0.0
    %4411 = vmatpush1.msra.mxu0 %v4379
    %4412 = vmatprep.subr.mxu0 0.0
    %4413 = vmatpush1.msra.mxu0 %v4380
    %4414 = vmatprep.subr.mxu0 0.0
    %4415 = vmatpush1.msra.mxu0 %v4381
    %4416 = vmatprep.subr.mxu0 0.0
    %4417 = vmatpush1.msra.mxu0 %v4382
    %4418 = vmatprep.subr.mxu0 0.0
    %4419 = vmatpush1.msra.mxu0 0.0
    %4420 = vmatprep.subr.mxu0 0.0
    %4421 = vmatpush1.msra.mxu0 0.0
    %4422 = vmatprep.subr.mxu0 0.0
    %4423 = vmatpush1.msra.mxu0 0.0
    %4424 = vmatprep.subr.mxu0 0.0
    %4425 = vmatpush1.msra.mxu0 0.0
    %4426 = vmatprep.subr.mxu0 0.0
    %4427 = vmatpush1.msra.mxu0 0.0
    %4428 = vmatprep.subr.mxu0 0.0
    %4429 = vmatpush1.msra.mxu0 0.0
    %4430 = vmatprep.subr.mxu0 0.0
    %4431 = vmatpush1.msra.mxu0 0.0
    %4432 = vmatprep.subr.mxu0 0.0
    %4433 = vmatpush1.msra.mxu0 0.0
    %4434 = vmatprep.subr.mxu0 0.0
    %4435 = vmatpush1.msra.mxu0 0.0
    %4436 = vmatprep.subr.mxu0 0.0
    %4437 = vmatpush1.msra.mxu0 0.0
    %4438 = vmatprep.subr.mxu0 0.0
    %4439 = vmatpush1.msra.mxu0 0.0
    %4440 = vmatprep.subr.mxu0 0.0
    %4441 = vmatpush1.msra.mxu0 0.0
    %4442 = vmatprep.subr.mxu0 0.0
    %4443 = vmatpush1.msra.mxu0 0.0
    %4444 = vmatprep.subr.mxu0 0.0
    %4445 = vmatpush1.msra.mxu0 0.0
    %4446 = vmatprep.subr.mxu0 0.0
    %4447 = vmatpush1.msra.mxu0 0.0
    %4448 = vmatprep.subr.mxu0 0.0
    %4449 = vmatpush1.msra.mxu0 0.0
    %4450 = vmatprep.mubr.f32.mxu0 0.0
    %4451 = vmatmul.mubr.f32.gmra.mrb[0].mxu0 %v4384
    %v4452 = vpop.f32.mrb[0].mxu0
    %v4453 = vadd.f32 0.0, %v4452
    %v4454 = vpop.f32.mrb[0].mxu0
    %4455 = vdwg.mxu0
    %v4456 = vadd.f32 %v4274, %v4453
    %v4457 = vld [vmem:[#allocation2 + $0x8] sm:$0xc0]
    %v4458 = vld [vmem:[%s14 + $0x180] sm:$0xff]
    %v4459 = vld [vmem:[%s14 + $0x188] sm:$0xff]
    %v4460 = vld [vmem:[%s14 + $0x190] sm:$0xff]
    %v4461 = vld [vmem:[%s14 + $0x198] sm:$0xff]
    %v4462 = vld [vmem:[%s14 + $0x1a0] sm:$0xff]
    %v4463 = vld [vmem:[%s14 + $0x1a8] sm:$0xff]
    %v4464 = vld [vmem:[%s14 + $0x1b0] sm:$0xff]
    %v4465 = vld [vmem:[%s14 + $0x1b8] sm:$0xff]
    %v4466 = vld [vmem:[%s14 + $0x1c0] sm:$0xff]
    %v4467 = vld [vmem:[%s14 + $0x1c8] sm:$0xff]
    %v4468 = vld [vmem:[%s14 + $0x1d0] sm:$0xff]
    %v4469 = vld [vmem:[%s14 + $0x1d8] sm:$0xff]
    %v4470 = vld [vmem:[%s14 + $0x1e0] sm:$0xff]
    %v4471 = vld [vmem:[%s14 + $0x1e8] sm:$0xff]
    %v4472 = vld [vmem:[%s14 + $0x1f0] sm:$0xff]
    %v4473 = vld [vmem:[%s14 + $0x1f8] sm:$0xff]
    %v4475 = vrot.slane %v4457, 6
    %4477 = vmatprep.subr.mxu0 0.0
    %4478 = vmatpush1.msra.mxu0 %v4458
    %4479 = vmatprep.subr.mxu0 0.0
    %4480 = vmatpush1.msra.mxu0 %v4459
    %4481 = vmatprep.subr.mxu0 0.0
    %4482 = vmatpush1.msra.mxu0 %v4460
    %4483 = vmatprep.subr.mxu0 0.0
    %4484 = vmatpush1.msra.mxu0 %v4461
    %4485 = vmatprep.subr.mxu0 0.0
    %4486 = vmatpush1.msra.mxu0 %v4462
    %4487 = vmatprep.subr.mxu0 0.0
    %4488 = vmatpush1.msra.mxu0 %v4463
    %4489 = vmatprep.subr.mxu0 0.0
    %4490 = vmatpush1.msra.mxu0 %v4464
    %4491 = vmatprep.subr.mxu0 0.0
    %4492 = vmatpush1.msra.mxu0 %v4465
    %4493 = vmatprep.subr.mxu0 0.0
    %4494 = vmatpush1.msra.mxu0 %v4466
    %4495 = vmatprep.subr.mxu0 0.0
    %4496 = vmatpush1.msra.mxu0 %v4467
    %4497 = vmatprep.subr.mxu0 0.0
    %4498 = vmatpush1.msra.mxu0 %v4468
    %4499 = vmatprep.subr.mxu0 0.0
    %4500 = vmatpush1.msra.mxu0 %v4469
    %4501 = vmatprep.subr.mxu0 0.0
    %4502 = vmatpush1.msra.mxu0 %v4470
    %4503 = vmatprep.subr.mxu0 0.0
    %4504 = vmatpush1.msra.mxu0 %v4471
    %4505 = vmatprep.subr.mxu0 0.0
    %4506 = vmatpush1.msra.mxu0 %v4472
    %4507 = vmatprep.subr.mxu0 0.0
    %4508 = vmatpush1.msra.mxu0 %v4473
    %4509 = vmatprep.subr.mxu0 0.0
    %4510 = vmatpush1.msra.mxu0 0.0
    %4511 = vmatprep.subr.mxu0 0.0
    %4512 = vmatpush1.msra.mxu0 0.0
    %4513 = vmatprep.subr.mxu0 0.0
    %4514 = vmatpush1.msra.mxu0 0.0
    %4515 = vmatprep.subr.mxu0 0.0
    %4516 = vmatpush1.msra.mxu0 0.0
    %4517 = vmatprep.subr.mxu0 0.0
    %4518 = vmatpush1.msra.mxu0 0.0
    %4519 = vmatprep.subr.mxu0 0.0
    %4520 = vmatpush1.msra.mxu0 0.0
    %4521 = vmatprep.subr.mxu0 0.0
    %4522 = vmatpush1.msra.mxu0 0.0
    %4523 = vmatprep.subr.mxu0 0.0
    %4524 = vmatpush1.msra.mxu0 0.0
    %4525 = vmatprep.subr.mxu0 0.0
    %4526 = vmatpush1.msra.mxu0 0.0
    %4527 = vmatprep.subr.mxu0 0.0
    %4528 = vmatpush1.msra.mxu0 0.0
    %4529 = vmatprep.subr.mxu0 0.0
    %4530 = vmatpush1.msra.mxu0 0.0
    %4531 = vmatprep.subr.mxu0 0.0
    %4532 = vmatpush1.msra.mxu0 0.0
    %4533 = vmatprep.subr.mxu0 0.0
    %4534 = vmatpush1.msra.mxu0 0.0
    %4535 = vmatprep.subr.mxu0 0.0
    %4536 = vmatpush1.msra.mxu0 0.0
    %4537 = vmatprep.subr.mxu0 0.0
    %4538 = vmatpush1.msra.mxu0 0.0
    %4539 = vmatprep.subr.mxu0 0.0
    %4540 = vmatpush1.msra.mxu0 0.0
    %4541 = vmatprep.mubr.f32.mxu0 0.0
    %4542 = vmatmul.mubr.f32.gmra.mrb[0].mxu0 %v4475
    %v4543 = vpop.f32.mrb[0].mxu0
    %v4544 = vadd.f32 0.0, %v4543
    %v4545 = vpop.f32.mrb[0].mxu0
    %4546 = vdwg.mxu0
    %v4547 = vadd.f32 %v4365, %v4544
    %v4548 = vld [vmem:[%s13] sm:$0x1]
    %v4550 = vlaneseq
    %v4551 = vshrl.u32 %v4550, 7
    %v4552 = vsub.s32 0, %v4551
    %v4553 = vrot.slane %v4548, %v4552
    %v4555 = vadd.f32 %v4456, %v4553
    %vm4556 = vcmp.gt.f32.partialorder %v4555, 0.0
    %v4557 = vmin.f32 %v4555, 0.0
    %v4558 = vmul.f32 %v4557, 1.442695
    %v4559 = vpow.pop %v4558
    %v4560 = vsub.f32 %v4559, 1.0
    %v4561 = vsel %vm4556, %v4555, %v4560
    %v4562 = vld [vmem:[%s16] sm:$0xff]
    %v4563 = vld [vmem:[%s16 + $0x8] sm:$0xff]
    %v4564 = vld [vmem:[%s16 + $0x10] sm:$0xff]
    %v4565 = vld [vmem:[%s16 + $0x18] sm:$0xff]
    %v4566 = vld [vmem:[%s17] sm:$0x1]
    %v4568 = vlaneseq
    %v4569 = vshrl.u32 %v4568, 7
    %v4570 = vsub.s32 0, %v4569
    %v4571 = vrot.slane %v4566, %v4570
    %v4574 = vsel %vm1772, %v4561, 0
    %4576 = vmatprep.subr.mxu0 0.0
    %4577 = vmatpush1.msra.mxu0 %v4562
    %4578 = vmatprep.subr.mxu0 0.0
    %4579 = vmatpush1.msra.mxu0 %v4563
    %4580 = vmatprep.subr.mxu0 0.0
    %4581 = vmatpush1.msra.mxu0 %v4564
    %4582 = vmatprep.subr.mxu0 0.0
    %4583 = vmatpush1.msra.mxu0 %v4565
    %4584 = vmatprep.subr.mxu0 0.0
    %4585 = vmatpush1.msra.mxu0 0.0
    %4586 = vmatprep.subr.mxu0 0.0
    %4587 = vmatpush1.msra.mxu0 0.0
    %4588 = vmatprep.subr.mxu0 0.0
    %4589 = vmatpush1.msra.mxu0 0.0
    %4590 = vmatprep.subr.mxu0 0.0
    %4591 = vmatpush1.msra.mxu0 0.0
    %4592 = vmatprep.subr.mxu0 0.0
    %4593 = vmatpush1.msra.mxu0 0.0
    %4594 = vmatprep.subr.mxu0 0.0
    %4595 = vmatpush1.msra.mxu0 0.0
    %4596 = vmatprep.subr.mxu0 0.0
    %4597 = vmatpush1.msra.mxu0 0.0
    %4598 = vmatprep.subr.mxu0 0.0
    %4599 = vmatpush1.msra.mxu0 0.0
    %4600 = vmatprep.subr.mxu0 0.0
    %4601 = vmatpush1.msra.mxu0 0.0
    %4602 = vmatprep.subr.mxu0 0.0
    %4603 = vmatpush1.msra.mxu0 0.0
    %4604 = vmatprep.subr.mxu0 0.0
    %4605 = vmatpush1.msra.mxu0 0.0
    %4606 = vmatprep.subr.mxu0 0.0
    %4607 = vmatpush1.msra.mxu0 0.0
    %4608 = vmatprep.subr.mxu0 0.0
    %4609 = vmatpush1.msra.mxu0 0.0
    %4610 = vmatprep.subr.mxu0 0.0
    %4611 = vmatpush1.msra.mxu0 0.0
    %4612 = vmatprep.subr.mxu0 0.0
    %4613 = vmatpush1.msra.mxu0 0.0
    %4614 = vmatprep.subr.mxu0 0.0
    %4615 = vmatpush1.msra.mxu0 0.0
    %4616 = vmatprep.subr.mxu0 0.0
    %4617 = vmatpush1.msra.mxu0 0.0
    %4618 = vmatprep.subr.mxu0 0.0
    %4619 = vmatpush1.msra.mxu0 0.0
    %4620 = vmatprep.subr.mxu0 0.0
    %4621 = vmatpush1.msra.mxu0 0.0
    %4622 = vmatprep.subr.mxu0 0.0
    %4623 = vmatpush1.msra.mxu0 0.0
    %4624 = vmatprep.subr.mxu0 0.0
    %4625 = vmatpush1.msra.mxu0 0.0
    %4626 = vmatprep.subr.mxu0 0.0
    %4627 = vmatpush1.msra.mxu0 0.0
    %4628 = vmatprep.subr.mxu0 0.0
    %4629 = vmatpush1.msra.mxu0 0.0
    %4630 = vmatprep.subr.mxu0 0.0
    %4631 = vmatpush1.msra.mxu0 0.0
    %4632 = vmatprep.subr.mxu0 0.0
    %4633 = vmatpush1.msra.mxu0 0.0
    %4634 = vmatprep.subr.mxu0 0.0
    %4635 = vmatpush1.msra.mxu0 0.0
    %4636 = vmatprep.subr.mxu0 0.0
    %4637 = vmatpush1.msra.mxu0 0.0
    %4638 = vmatprep.subr.mxu0 0.0
    %4639 = vmatpush1.msra.mxu0 0.0
    %4640 = vmatprep.mubr.f32.mxu0 0.0
    %4641 = vmatmul.mubr.f32.gmra.mrb[0].mxu0 %v4574
    %v4642 = vpop.f32.mrb[0].mxu0
    %v4643 = vadd.f32 %v4571, %v4642
    %v4644 = vpop.f32.mrb[0].mxu0
    %4645 = vdwg.mxu0
    %vm4646 = vcmp.gt.f32.partialorder %v4643, 0.0
    %v4647 = vmin.f32 %v4643, 0.0
    %v4648 = vmul.f32 %v4647, 1.442695
    %v4649 = vpow.pop %v4648
    %v4650 = vsub.f32 %v4649, 1.0
    %v4651 = vsel %vm4646, %v4643, %v4650
    %v4652 = vld [vmem:[%s18] sm:$0xff]
    %v4653 = vld [vmem:[%s18 + $0x8] sm:$0xff]
    %v4654 = vld [vmem:[%s18 + $0x10] sm:$0xff]
    %v4655 = vld [vmem:[%s18 + $0x18] sm:$0xff]
    %v4656 = vld [vmem:[%s19] sm:$0x1]
    %v4658 = vlaneseq
    %v4659 = vshrl.u32 %v4658, 7
    %v4660 = vsub.s32 0, %v4659
    %v4661 = vrot.slane %v4656, %v4660
    %v4664 = vsel %vm1772, %v4651, 0
    %4666 = vmatprep.subr.mxu0 0.0
    %4667 = vmatpush1.msra.mxu0 %v4652
    %4668 = vmatprep.subr.mxu0 0.0
    %4669 = vmatpush1.msra.mxu0 %v4653
    %4670 = vmatprep.subr.mxu0 0.0
    %4671 = vmatpush1.msra.mxu0 %v4654
    %4672 = vmatprep.subr.mxu0 0.0
    %4673 = vmatpush1.msra.mxu0 %v4655
    %4674 = vmatprep.subr.mxu0 0.0
    %4675 = vmatpush1.msra.mxu0 0.0
    %4676 = vmatprep.subr.mxu0 0.0
    %4677 = vmatpush1.msra.mxu0 0.0
    %4678 = vmatprep.subr.mxu0 0.0
    %4679 = vmatpush1.msra.mxu0 0.0
    %4680 = vmatprep.subr.mxu0 0.0
    %4681 = vmatpush1.msra.mxu0 0.0
    %4682 = vmatprep.subr.mxu0 0.0
    %4683 = vmatpush1.msra.mxu0 0.0
    %4684 = vmatprep.subr.mxu0 0.0
    %4685 = vmatpush1.msra.mxu0 0.0
    %4686 = vmatprep.subr.mxu0 0.0
    %4687 = vmatpush1.msra.mxu0 0.0
    %4688 = vmatprep.subr.mxu0 0.0
    %4689 = vmatpush1.msra.mxu0 0.0
    %4690 = vmatprep.subr.mxu0 0.0
    %4691 = vmatpush1.msra.mxu0 0.0
    %4692 = vmatprep.subr.mxu0 0.0
    %4693 = vmatpush1.msra.mxu0 0.0
    %4694 = vmatprep.subr.mxu0 0.0
    %4695 = vmatpush1.msra.mxu0 0.0
    %4696 = vmatprep.subr.mxu0 0.0
    %4697 = vmatpush1.msra.mxu0 0.0
    %4698 = vmatprep.subr.mxu0 0.0
    %4699 = vmatpush1.msra.mxu0 0.0
    %4700 = vmatprep.subr.mxu0 0.0
    %4701 = vmatpush1.msra.mxu0 0.0
    %4702 = vmatprep.subr.mxu0 0.0
    %4703 = vmatpush1.msra.mxu0 0.0
    %4704 = vmatprep.subr.mxu0 0.0
    %4705 = vmatpush1.msra.mxu0 0.0
    %4706 = vmatprep.subr.mxu0 0.0
    %4707 = vmatpush1.msra.mxu0 0.0
    %4708 = vmatprep.subr.mxu0 0.0
    %4709 = vmatpush1.msra.mxu0 0.0
    %4710 = vmatprep.subr.mxu0 0.0
    %4711 = vmatpush1.msra.mxu0 0.0
    %4712 = vmatprep.subr.mxu0 0.0
    %4713 = vmatpush1.msra.mxu0 0.0
    %4714 = vmatprep.subr.mxu0 0.0
    %4715 = vmatpush1.msra.mxu0 0.0
    %4716 = vmatprep.subr.mxu0 0.0
    %4717 = vmatpush1.msra.mxu0 0.0
    %4718 = vmatprep.subr.mxu0 0.0
    %4719 = vmatpush1.msra.mxu0 0.0
    %4720 = vmatprep.subr.mxu0 0.0
    %4721 = vmatpush1.msra.mxu0 0.0
    %4722 = vmatprep.subr.mxu0 0.0
    %4723 = vmatpush1.msra.mxu0 0.0
    %4724 = vmatprep.subr.mxu0 0.0
    %4725 = vmatpush1.msra.mxu0 0.0
    %4726 = vmatprep.subr.mxu0 0.0
    %4727 = vmatpush1.msra.mxu0 0.0
    %4728 = vmatprep.subr.mxu0 0.0
    %4729 = vmatpush1.msra.mxu0 0.0
    %4730 = vmatprep.mubr.f32.mxu0 0.0
    %4731 = vmatmul.mubr.f32.gmra.mrb[0].mxu0 %v4664
    %v4732 = vpop.f32.mrb[0].mxu0
    %v4733 = vadd.f32 %v4661, %v4732
    %v4734 = vpop.f32.mrb[0].mxu0
    %4735 = vdwg.mxu0
    %vm4736 = vcmask 254976
    %4737 = vst.msk [vmem:[#allocation9] sm:$0x3] %vm4736, %v4733
    %v4738 = vld [vmem:[%s15] sm:$0x1]
    %v4740 = vlaneseq
    %v4741 = vshrl.u32 %v4740, 7
    %v4742 = vsub.s32 0, %v4741
    %v4743 = vrot.slane %v4738, %v4742
    %v4745 = vadd.f32 %v4547, %v4743
    %4746 = vst.msk [vmem:[#allocation10] sm:$0x3] %vm4736, %v4745
    // Predicated region
    $region94: #{barlow_twins_forward.1} parent=1 // pred_check
      _
    $region95: #{barlow_twins_forward.1} parent=1 // pred_check_branch
      %4748 = sbr.rel (0) target = $region97
    $region96: #{barlow_twins_forward.1} parent=1 // pred_region
      %s4750 = ssub.s32 32, 32
      %4751 = vsyncadd [#allocation5], %s4750
      %s4753 = sshll.u32 [#allocation9], 4
      %s4754 = int_to_ptr.vmem [resolvable:$true] %s4753
      %4756 = dma.vmem_to_hbm [thread:$0]  %s4754, 32, %s20, [#allocation5]
    $region97: #{barlow_twins_forward.1} parent=1 // pred_fallthru
      _
    // Predicated region
    $region98: #{barlow_twins_forward.1} parent=1 // pred_check
      _
    $region99: #{barlow_twins_forward.1} parent=1 // pred_check_branch
      %4758 = sbr.rel (0) target = $region101
    $region100: #{barlow_twins_forward.1} parent=1 // pred_region
      %s4760 = ssub.s32 32, 32
      %4761 = vsyncadd [#allocation11], %s4760
      %s4763 = sshll.u32 [#allocation10], 4
      %s4764 = int_to_ptr.vmem [resolvable:$true] %s4763
      %4766 = dma.vmem_to_hbm [thread:$0]  %s4764, 32, %s21, [#allocation11]
    $region101: #{barlow_twins_forward.1} parent=1 // pred_fallthru
      _
    // Predicated region
    $region102: #{barlow_twins_forward.1} parent=1 // pred_check
      _
    $region103: #{barlow_twins_forward.1} parent=1 // pred_check_branch
      %4768 = sbr.rel (0) target = $region105
    $region104: #{barlow_twins_forward.1} parent=1 // pred_region
      %4769 = dma.done [#allocation5], 32
    $region105: #{barlow_twins_forward.1} parent=1 // pred_fallthru
      _
    // Predicated region
    $region106: #{barlow_twins_forward.1} parent=1 // pred_check
      _
    $region107: #{barlow_twins_forward.1} parent=1 // pred_check_branch
      %4771 = sbr.rel (0) target = $region109
    $region108: #{barlow_twins_forward.1} parent=1 // pred_region
      %4772 = dma.done [#allocation11], 32
    $region109: #{barlow_twins_forward.1} parent=1 // pred_fallthru
      _
    %4773 = vsyncpa [#allocation4], 1
    %4774 = vsyncpa [#allocation7], 1
    %4775 = vsyncpa [#allocation5], 1
    %4776 = vsyncpa [#allocation11], 1

</llo_original>
